<compile_context>
chip_gen: v5e
topology: v5e:2x2
jax: 0.10.0
libtpu: 0.0.40
codegen_flags: <defaults>
</compile_context>

<pallas_src>
import functools
import math

import jax
import jax.numpy as jnp
from jax.experimental import pallas as pl
from jax.experimental.pallas import tpu as pltpu


# ----------------------------------------------------------------------------
# Generation-aware VMEM budget (v5e/v6e: 128 MiB physical, v7x: 64 MiB per core)
# ----------------------------------------------------------------------------
@functools.lru_cache(maxsize=1)
def _vmem_limit_bytes():
    try:
        cap = int(pltpu.get_tpu_info().vmem_capacity_bytes)
    except Exception:
        cap = 64 * 1024 * 1024  # conservative (v7x per-core) fallback
    # Leave ~25% headroom for compiler-internal scratch / double buffering.
    return max(16 * 1024 * 1024, (cap * 3) // 4)


def _compiler_params():
    return pltpu.CompilerParams(
        dimension_semantics=("parallel",),
        vmem_limit_bytes=_vmem_limit_bytes(),
    )


# ----------------------------------------------------------------------------
# Shared in-kernel LayerNorm (PyTorch semantics: unbiased std, eps added to std)
# ----------------------------------------------------------------------------
def _layer_norm_f32(xf, g_ref, b_ref, eps):
    feat = xf.shape[-1]
    mean = jnp.mean(xf, axis=-1, keepdims=True)
    diff = xf - mean
    var = jnp.sum(diff * diff, axis=-1, keepdims=True) / jnp.float32(feat - 1)
    inv = 1.0 / (jnp.sqrt(var) + jnp.float32(eps))  # exact: closer torch parity
    return g_ref[...].astype(jnp.float32) * diff * inv + b_ref[...].astype(jnp.float32)


# ----------------------------------------------------------------------------
# Fused attention sublayer kernel:  out = x + Wo @ MHA(LN(x), src, src) + bo
#   self-attn : src = LN(x)
#   cross-attn: src = memory (NOT re-normalised, matching the original module)
# ----------------------------------------------------------------------------
def _attn_sublayer_kernel(*refs, n_heads, eps, cross):
    if cross:
        (x_ref, kv_ref, g_ref, b_ref, wqkv_ref, bqkv_ref, wo_ref, bo_ref, o_ref) = refs
    else:
        (x_ref, g_ref, b_ref, wqkv_ref, bqkv_ref, wo_ref, bo_ref, o_ref) = refs

    dt = x_ref.dtype
    x = x_ref[...]                               # (Sq, D), native dtype
    xf = x.astype(jnp.float32)
    D = x.shape[-1]
    dk = D // n_heads
    scale = 1.0 / math.sqrt(dk)

    nx = _layer_norm_f32(xf, g_ref, b_ref, eps).astype(dt)   # (Sq, D)

    wqkv = wqkv_ref[...]                                     # (D, 3D), native dtype
    bqkv = bqkv_ref[...].astype(jnp.float32)                 # (1, 3D)

    if cross:
        kv = kv_ref[...]                                     # (Sk, D) encoder memory
        q = jnp.dot(nx, wqkv[:, :D], preferred_element_type=jnp.float32) + bqkv[:, :D]
        kvp = jnp.dot(kv, wqkv[:, D:], preferred_element_type=jnp.float32) + bqkv[:, D:]
        k = kvp[:, :D]
        v = kvp[:, D:]
    else:
        qkv = jnp.dot(nx, wqkv, preferred_element_type=jnp.float32) + bqkv
        q = qkv[:, :D]
        k = qkv[:, D:2 * D]
        v = qkv[:, 2 * D:]

    q = q.astype(dt)
    k = k.astype(dt)
    v = v.astype(dt)
    wo = wo_ref[...]                                         # (D, D)

    # Per-head attention, statically unrolled; the out-projection is accumulated
    # per head so the head-concat never materialises.
    acc = None
    for h in range(n_heads):
        lo, hi = h * dk, (h + 1) * dk
        qh, kh, vh = q[:, lo:hi], k[:, lo:hi], v[:, lo:hi]
        s = jax.lax.dot_general(qh, kh, (((1,), (1,)), ((), ())),
                                preferred_element_type=jnp.float32) * scale  # (Sq, Sk)
        m = jnp.max(s, axis=-1, keepdims=True)
        p = jnp.exp(s - m)
        denom = jnp.sum(p, axis=-1, keepdims=True)
        oh = jnp.dot(p.astype(dt), vh, preferred_element_type=jnp.float32)   # (Sq, dk)
        oh = oh * pl.reciprocal(denom, approx=True)          # normalise after PV
        contrib = jnp.dot(oh.astype(dt), wo[lo:hi, :],
                          preferred_element_type=jnp.float32)
        acc = contrib if acc is None else acc + contrib

    out = acc + bo_ref[...].astype(jnp.float32)
    o_ref[...] = (xf + out).astype(o_ref.dtype)              # fused residual add


def attention_sublayer(x, kv, attn_p, ln_p, n_heads, eps, cross):
    """x + MHA(LN(x), src, src)  with src = LN(x) (cross=False) or kv (cross=True)."""
    B, Sq, D = x.shape
    assert D % n_heads == 0
    kernel = functools.partial(_attn_sublayer_kernel, n_heads=n_heads, eps=eps,
                               cross=cross)

    def full2d(shape):
        return pl.BlockSpec(shape, lambda b: (0, 0))

    in_specs = [pl.BlockSpec((None, Sq, D), lambda b: (b, 0, 0))]
    operands = [x]
    if cross:
        Sk = kv.shape[1]
        in_specs.append(pl.BlockSpec((None, Sk, D), lambda b: (b, 0, 0)))
        operands.append(kv)
    in_specs += [
        full2d((1, D)), full2d((1, D)),            # gamma, beta
        full2d((D, 3 * D)), full2d((1, 3 * D)),    # merged QKV weight / bias
        full2d((D, D)), full2d((1, D)),            # out-projection weight / bias
    ]
    operands += [ln_p["gamma"], ln_p["beta"], attn_p["wqkv"], attn_p["bqkv"],
                 attn_p["wo"], attn_p["bo"]]

    return pl.pallas_call(
        kernel,
        out_shape=jax.ShapeDtypeStruct((B, Sq, D), x.dtype),
        grid_spec=pltpu.PrefetchScalarGridSpec(
            num_scalar_prefetch=0,
            grid=(B,),
            in_specs=in_specs,
            out_specs=pl.BlockSpec((None, Sq, D), lambda b: (b, 0, 0)),
        ),
        compiler_params=_compiler_params(),
    )(*operands)


# ----------------------------------------------------------------------------
# Fused FFN sublayer kernel:  out[b] = x[b] + W2 @ relu(W1 @ LN(x)[0] + b1) + b2
# (the original SublayerConnection indexes [0] into the FFN *tensor* -> the FFN
#  of batch element 0 is broadcast into every batch element's residual add)
# ----------------------------------------------------------------------------
def _ffn_sublayer_kernel(xres_ref, xsrc_ref, g_ref, b_ref, w1_ref, b1_ref,
                         w2_ref, b2_ref, o_ref, *, eps):
    dt = xsrc_ref.dtype
    xs = xsrc_ref[...].astype(jnp.float32)                   # x[0]  (quirk source)
    nx = _layer_norm_f32(xs, g_ref, b_ref, eps).astype(dt)
    h = jnp.dot(nx, w1_ref[...], preferred_element_type=jnp.float32) \
        + b1_ref[...].astype(jnp.float32)
    h = jnp.maximum(h, 0.0).astype(dt)
    y = jnp.dot(h, w2_ref[...], preferred_element_type=jnp.float32) \
        + b2_ref[...].astype(jnp.float32)
    o_ref[...] = (xres_ref[...].astype(jnp.float32) + y).astype(o_ref.dtype)


def ffn_sublayer(x, ff_p, ln_p, eps):
    B, S, D = x.shape
    Fd = ff_p["w1"].shape[1]
    kernel = functools.partial(_ffn_sublayer_kernel, eps=eps)

    def full2d(shape):
        return pl.BlockSpec(shape, lambda b: (0, 0))

    return pl.pallas_call(
        kernel,
        out_shape=jax.ShapeDtypeStruct((B, S, D), x.dtype),
        grid_spec=pltpu.PrefetchScalarGridSpec(
            num_scalar_prefetch=0,
            grid=(B,),
            in_specs=[
                pl.BlockSpec((None, S, D), lambda b: (b, 0, 0)),  # residual x[b]
                pl.BlockSpec((None, S, D), lambda b: (0, 0, 0)),  # x[0] feeds the FFN
                full2d((1, D)), full2d((1, D)),
                full2d((D, Fd)), full2d((1, Fd)),
                full2d((Fd, D)), full2d((1, D)),
            ],
            out_specs=pl.BlockSpec((None, S, D), lambda b: (b, 0, 0)),
        ),
        compiler_params=_compiler_params(),
    )(x, x, ln_p["gamma"], ln_p["beta"],
      ff_p["w1"], ff_p["b1"], ff_p["w2"], ff_p["b2"])


# ----------------------------------------------------------------------------
# Standalone LayerNorm kernel (final Encoder / Decoder norm)
# ----------------------------------------------------------------------------
def _layernorm_kernel(x_ref, g_ref, b_ref, o_ref, *, eps):
    xf = x_ref[...].astype(jnp.float32)
    o_ref[...] = _layer_norm_f32(xf, g_ref, b_ref, eps).astype(o_ref.dtype)


def layer_norm(x, ln_p, eps):
    B, S, D = x.shape
    kernel = functools.partial(_layernorm_kernel, eps=eps)
    return pl.pallas_call(
        kernel,
        out_shape=jax.ShapeDtypeStruct((B, S, D), x.dtype),
        grid_spec=pltpu.PrefetchScalarGridSpec(
            num_scalar_prefetch=0,
            grid=(B,),
            in_specs=[
                pl.BlockSpec((None, S, D), lambda b: (b, 0, 0)),
                pl.BlockSpec((1, D), lambda b: (0, 0)),
                pl.BlockSpec((1, D), lambda b: (0, 0)),
            ],
            out_specs=pl.BlockSpec((None, S, D), lambda b: (b, 0, 0)),
        ),
        compiler_params=_compiler_params(),
    )(x, ln_p["gamma"], ln_p["beta"])


# ----------------------------------------------------------------------------
# Model plumbing (mirrors the PyTorch module; masks are None and Attention()
# ignores them, so they are omitted).
# ----------------------------------------------------------------------------
def build_transformer_forward(params, cfg, attn_fn, ffn_fn, ln_fn):
    n_heads, n_blocks, eps = cfg["n_heads"], cfg["n_blocks"], cfg["eps"]
    ap, fp, lp = params["attn"], params["ff"], params["ln"]

    def encoder_layer(x):
        # TODO(synk): print()/plt.imshow() of the attention map in EncoderLayer.forward
        # are host-only side effects (plt is not even imported there); omitted. The
        # p_attn tensor itself does not influence the returned embeddings.
        x = attn_fn(x, x, ap, lp, n_heads, eps, cross=False)
        x = ffn_fn(x, fp, lp, eps)
        return x

    def decoder_layer(x, memory):
        x = attn_fn(x, x, ap, lp, n_heads, eps, cross=False)
        x = attn_fn(x, memory, ap, lp, n_heads, eps, cross=True)  # memory NOT re-normed
        x = ffn_fn(x, fp, lp, eps)
        return x

    def encode(src):
        x = src
        for _ in range(n_blocks):   # clones() of one initialised layer -> shared weights
            x = encoder_layer(x)
        return ln_fn(x, lp, eps)

    def decode(tgt, memory):
        x = tgt
        for _ in range(n_blocks):
            x = decoder_layer(x, memory)
        return ln_fn(x, lp, eps)

    def encoder_decoder(src, tgt):
        return decode(tgt, encode(src))   # src/tgt embeds & generator are identity

    def transformer(src, tgt):
        # inputs: (B, emb_dims, seq) -> transpose(2, 1) exactly as the original
        src_t = jnp.transpose(src, (0, 2, 1))
        tgt_t = jnp.transpose(tgt, (0, 2, 1))
        tgt_embedding = jnp.transpose(encoder_decoder(src_t, tgt_t), (0, 2, 1))
        src_embedding = jnp.transpose(encoder_decoder(tgt_t, src_t), (0, 2, 1))
        return src_embedding, tgt_embedding

    return transformer


# ----------------------------------------------------------------------------
# Pure-JAX reference implementations (exact math) for verification
# ----------------------------------------------------------------------------
def layer_norm_ref(x, ln_p, eps):
    feat = x.shape[-1]
    mean = jnp.mean(x, axis=-1, keepdims=True)
    std = jnp.sqrt(jnp.sum((x - mean) ** 2, axis=-1, keepdims=True) / (feat - 1))
    return ln_p["gamma"] * (x - mean) / (std + eps) + ln_p["beta"]


def attention_sublayer_ref(x, kv, ap, lp, n_heads, eps, cross):
    D = x.shape[-1]
    nx = layer_norm_ref(x, lp, eps)
    src = kv if cross else nx
    wqkv, bqkv = ap["wqkv"], ap["bqkv"]
    q = nx @ wqkv[:, :D] + bqkv[:, :D]
    k = src @ wqkv[:, D:2 * D] + bqkv[:, D:2 * D]
    v = src @ wqkv[:, 2 * D:] + bqkv[:, 2 * D:]
    B, Sq, _ = q.shape
    Sk = k.shape[1]
    dk = D // n_heads
    qh = q.reshape(B, Sq, n_heads, dk).transpose(0, 2, 1, 3)
    kh = k.reshape(B, Sk, n_heads, dk).transpose(0, 2, 1, 3)
    vh = v.reshape(B, Sk, n_heads, dk).transpose(0, 2, 1, 3)
    s = jnp.einsum("bhqd,bhkd->bhqk", qh, kh) / math.sqrt(dk)
    p = jax.nn.softmax(s, axis=-1)
    o = jnp.einsum("bhqk,bhkd->bhqd", p, vh)
    o = o.transpose(0, 2, 1, 3).reshape(B, Sq, D)
    return x + (o @ ap["wo"] + ap["bo"])


def ffn_sublayer_ref(x, fp, lp, eps):
    nx = layer_norm_ref(x, lp, eps)
    h = jnp.maximum(nx @ fp["w1"] + fp["b1"], 0.0)
    y = h @ fp["w2"] + fp["b2"]
    return x + y[0]   # faithful SublayerConnection quirk


# ----------------------------------------------------------------------------
# Parameter init (nn.Linear-style uniform). deepcopy-at-init in the original
# means all attention / FFN / LayerNorm clones share the same initial values.
# QKV merge, (1, n) biases and (1, D) LN params are built once here (hoisted).
# ----------------------------------------------------------------------------
def init_params(key, emb_dims, ff_dims):
    ks = jax.random.split(key, 6)

    def lin(k, fan_in, fan_out):
        bound = 1.0 / math.sqrt(fan_in)
        kw, kb = jax.random.split(k)
        w = jax.random.uniform(kw, (fan_in, fan_out), jnp.float32, -bound, bound)
        b = jax.random.uniform(kb, (fan_out,), jnp.float32, -bound, bound)
        return w, b

    wq, bq = lin(ks[0], emb_dims, emb_dims)
    wk, bk = lin(ks[1], emb_dims, emb_dims)
    wv, bv = lin(ks[2], emb_dims, emb_dims)
    wo, bo = lin(ks[3], emb_dims, emb_dims)
    w1, b1 = lin(ks[4], emb_dims, ff_dims)
    w2, b2 = lin(ks[5], ff_dims, emb_dims)
    return {
        "attn": dict(
            wqkv=jnp.concatenate([wq, wk, wv], axis=1),
            bqkv=jnp.concatenate([bq, bk, bv]).reshape(1, 3 * emb_dims),
            wo=wo,
            bo=bo.reshape(1, emb_dims)),
        "ff": dict(w1=w1, b1=b1.reshape(1, ff_dims),
                   w2=w2, b2=b2.reshape(1, emb_dims)),
        "ln": dict(gamma=jnp.ones((1, emb_dims), jnp.float32),
                   beta=jnp.zeros((1, emb_dims), jnp.float32)),
    }


if __name__ == "__main__":
    key = jax.random.PRNGKey(0)
    batch, seq, emb_dims, n_heads, n_blocks, ff_dims = 2, 8, 32, 4, 1, 64
    k_src, k_tgt, k_par = jax.random.split(key, 3)

    # Transformer.forward takes (B, emb_dims, seq) point-feature tensors.
    src = jax.random.normal(k_src, (batch, emb_dims, seq), jnp.float32)
    tgt = jax.random.normal(k_tgt, (batch, emb_dims, seq), jnp.float32)
    params = init_params(k_par, emb_dims, ff_dims)
    cfg = dict(n_heads=n_heads, n_blocks=n_blocks, eps=1e-6)

    fwd = jax.jit(build_transformer_forward(params, cfg, attention_sublayer,
                                            ffn_sublayer, layer_norm))
    src_emb, tgt_emb = jax.block_until_ready(fwd(src, tgt))

    # Pure-JAX reference (exact softmax; kernels use approx reciprocal only in the
    # softmax denominator -> small tolerance is sufficient).
    ref_fwd = build_transformer_forward(params, cfg, attention_sublayer_ref,
                                        ffn_sublayer_ref, layer_norm_ref)
    src_ref, tgt_ref = ref_fwd(src, tgt)

    assert src_emb.shape == (batch, emb_dims, seq)
    assert tgt_emb.shape == (batch, emb_dims, seq)
    assert not bool(jnp.any(jnp.isnan(src_emb)))
    assert not bool(jnp.any(jnp.isnan(tgt_emb)))
    assert jnp.allclose(src_emb, src_ref, atol=2e-2, rtol=2e-2), "src_embedding mismatch"
    assert jnp.allclose(tgt_emb, tgt_ref, atol=2e-2, rtol=2e-2), "tgt_embedding mismatch"

    print("KERNEL_OK")
</pallas_src>

<mosaic_0001>
module attributes {stable_mosaic.version = 11 : i64} {
  func.func @_ffn_sublayer_kernel(%arg0: i32, %arg1: memref<1x8x32xf32, #tpu.memory_space<vmem>>, %arg2: memref<1x8x32xf32, #tpu.memory_space<vmem>>, %arg3: memref<1x32xf32, #tpu.memory_space<vmem>>, %arg4: memref<1x32xf32, #tpu.memory_space<vmem>>, %arg5: memref<32x64xf32, #tpu.memory_space<vmem>>, %arg6: memref<1x64xf32, #tpu.memory_space<vmem>>, %arg7: memref<64x32xf32, #tpu.memory_space<vmem>>, %arg8: memref<1x32xf32, #tpu.memory_space<vmem>>, %arg9: memref<1x8x32xf32, #tpu.memory_space<vmem>>) attributes {dimension_semantics = [#tpu.dimension_semantics<parallel>], iteration_bounds = array<i64: 2>, scalar_prefetch = 0 : i64, scratch_operands = 0 : i64, tpu.core_type = #tpu.core_type<tc>, window_params = [{transform_indices = @transform_0, window_bounds = array<i64: 1, 8, 32>}, {transform_indices = @transform_1, window_bounds = array<i64: 1, 8, 32>}, {pipeline_mode = #tpu.pipeline_mode<synchronous>, transform_indices = @transform_2, window_bounds = array<i64: 1, 32>}, {pipeline_mode = #tpu.pipeline_mode<synchronous>, transform_indices = @transform_3, window_bounds = array<i64: 1, 32>}, {pipeline_mode = #tpu.pipeline_mode<synchronous>, transform_indices = @transform_4, window_bounds = array<i64: 32, 64>}, {pipeline_mode = #tpu.pipeline_mode<synchronous>, transform_indices = @transform_5, window_bounds = array<i64: 1, 64>}, {pipeline_mode = #tpu.pipeline_mode<synchronous>, transform_indices = @transform_6, window_bounds = array<i64: 64, 32>}, {pipeline_mode = #tpu.pipeline_mode<synchronous>, transform_indices = @transform_7, window_bounds = array<i64: 1, 32>}, {transform_indices = @transform_8, window_bounds = array<i64: 1, 8, 32>}]} {
    %c0 = arith.constant 0 : index
    %c0_0 = arith.constant 0 : index
    %c0_1 = arith.constant 0 : index
    %0 = vector.load %arg2[%c0, %c0_0, %c0_1] : memref<1x8x32xf32, #tpu.memory_space<vmem>>, vector<1x8x32xf32>
    %1 = vector.shape_cast %0 : vector<1x8x32xf32> to vector<8x32xf32>
    %cst = arith.constant dense<0.000000e+00> : vector<8xf32>
    %2 = vector.multi_reduction <add>, %1, %cst [1] : vector<8x32xf32> to vector<8xf32>
    %3 = vector.shape_cast %2 : vector<8xf32> to vector<8x1xf32>
    %cst_2 = arith.constant 3.200000e+01 : f32
    %4 = vector.broadcast %cst_2 : f32 to vector<8x1xf32>
    %5 = arith.divf %3, %4 : vector<8x1xf32>
    %6 = vector.broadcast %5 : vector<8x1xf32> to vector<8x32xf32>
    %7 = arith.subf %1, %6 : vector<8x32xf32>
    %8 = arith.mulf %7, %7 : vector<8x32xf32>
    %cst_3 = arith.constant dense<0.000000e+00> : vector<8xf32>
    %9 = vector.multi_reduction <add>, %8, %cst_3 [1] : vector<8x32xf32> to vector<8xf32>
    %10 = vector.shape_cast %9 : vector<8xf32> to vector<8x1xf32>
    %cst_4 = arith.constant 3.100000e+01 : f32
    %11 = vector.broadcast %cst_4 : f32 to vector<8x1xf32>
    %12 = arith.divf %10, %11 : vector<8x1xf32>
    %13 = math.sqrt %12 : vector<8x1xf32>
    %cst_5 = arith.constant 9.99999997E-7 : f32
    %14 = vector.broadcast %cst_5 : f32 to vector<8x1xf32>
    %15 = arith.addf %13, %14 : vector<8x1xf32>
    %cst_6 = arith.constant 1.000000e+00 : f32
    %16 = vector.broadcast %cst_6 : f32 to vector<8x1xf32>
    %17 = arith.divf %16, %15 : vector<8x1xf32>
    %c0_7 = arith.constant 0 : index
    %c0_8 = arith.constant 0 : index
    %18 = vector.load %arg3[%c0_7, %c0_8] : memref<1x32xf32, #tpu.memory_space<vmem>>, vector<1x32xf32>
    %19 = vector.broadcast %18 : vector<1x32xf32> to vector<8x32xf32>
    %20 = arith.mulf %19, %7 : vector<8x32xf32>
    %21 = vector.broadcast %17 : vector<8x1xf32> to vector<8x32xf32>
    %22 = arith.mulf %20, %21 : vector<8x32xf32>
    %c0_9 = arith.constant 0 : index
    %c0_10 = arith.constant 0 : index
    %23 = vector.load %arg4[%c0_9, %c0_10] : memref<1x32xf32, #tpu.memory_space<vmem>>, vector<1x32xf32>
    %24 = vector.broadcast %23 : vector<1x32xf32> to vector<8x32xf32>
    %25 = arith.addf %22, %24 : vector<8x32xf32>
    %c0_11 = arith.constant 0 : index
    %c0_12 = arith.constant 0 : index
    %26 = vector.load %arg5[%c0_11, %c0_12] : memref<32x64xf32, #tpu.memory_space<vmem>>, vector<32x64xf32>
    %cst_13 = arith.constant dense<0.000000e+00> : vector<8x64xf32>
    %27 = tpu.matmul %25, %26, %cst_13 {dimension_numbers = #tpu.dot_dimension_numbers<[1], [0], [0], [1], [0, 0, 1, 1], [], []>} : vector<8x32xf32>, vector<32x64xf32>, vector<8x64xf32> -> vector<8x64xf32>
    %c0_14 = arith.constant 0 : index
    %c0_15 = arith.constant 0 : index
    %28 = vector.load %arg6[%c0_14, %c0_15] : memref<1x64xf32, #tpu.memory_space<vmem>>, vector<1x64xf32>
    %29 = vector.broadcast %28 : vector<1x64xf32> to vector<8x64xf32>
    %30 = arith.addf %27, %29 : vector<8x64xf32>
    %cst_16 = arith.constant 0.000000e+00 : f32
    %31 = vector.broadcast %cst_16 : f32 to vector<8x64xf32>
    %32 = arith.maximumf %30, %31 : vector<8x64xf32>
    %c0_17 = arith.constant 0 : index
    %c0_18 = arith.constant 0 : index
    %33 = vector.load %arg7[%c0_17, %c0_18] : memref<64x32xf32, #tpu.memory_space<vmem>>, vector<64x32xf32>
    %cst_19 = arith.constant dense<0.000000e+00> : vector<8x32xf32>
    %34 = tpu.matmul %32, %33, %cst_19 {dimension_numbers = #tpu.dot_dimension_numbers<[1], [0], [0], [1], [0, 0, 1, 1], [], []>} : vector<8x64xf32>, vector<64x32xf32>, vector<8x32xf32> -> vector<8x32xf32>
    %c0_20 = arith.constant 0 : index
    %c0_21 = arith.constant 0 : index
    %35 = vector.load %arg8[%c0_20, %c0_21] : memref<1x32xf32, #tpu.memory_space<vmem>>, vector<1x32xf32>
    %36 = vector.broadcast %35 : vector<1x32xf32> to vector<8x32xf32>
    %37 = arith.addf %34, %36 : vector<8x32xf32>
    %c0_22 = arith.constant 0 : index
    %c0_23 = arith.constant 0 : index
    %c0_24 = arith.constant 0 : index
    %38 = vector.load %arg1[%c0_22, %c0_23, %c0_24] : memref<1x8x32xf32, #tpu.memory_space<vmem>>, vector<1x8x32xf32>
    %39 = vector.shape_cast %38 : vector<1x8x32xf32> to vector<8x32xf32>
    %40 = arith.addf %39, %37 : vector<8x32xf32>
    %c0_25 = arith.constant 0 : index
    %c0_26 = arith.constant 0 : index
    %c0_27 = arith.constant 0 : index
    %41 = vector.load %arg9[%c0_25, %c0_26, %c0_27] : memref<1x8x32xf32, #tpu.memory_space<vmem>>, vector<1x8x32xf32>
    %42 = vector.shape_cast %41 : vector<1x8x32xf32> to vector<8x32xf32>
    %43 = vector.shape_cast %40 : vector<8x32xf32> to vector<1x8x32xf32>
    tpu.vector_store %arg9[%c0_25, %c0_26, %c0_27], %43 {strides = array<i32>} : memref<1x8x32xf32, #tpu.memory_space<vmem>>, vector<1x8x32xf32>,
    return
  }
  func.func @transform_0(%arg0: i32) -> (i32, i32, i32) {
    %c0_i32 = arith.constant 0 : i32
    %c0_i32_0 = arith.constant 0 : i32
    %c0_i32_1 = arith.constant 0 : i32
    return %arg0, %c0_i32, %c0_i32_0 : i32, i32, i32
  }
  func.func @transform_1(%arg0: i32) -> (i32, i32, i32) {
    %c0_i32 = arith.constant 0 : i32
    %c0_i32_0 = arith.constant 0 : i32
    %c0_i32_1 = arith.constant 0 : i32
    %c0_i32_2 = arith.constant 0 : i32
    return %c0_i32, %c0_i32_0, %c0_i32_1 : i32, i32, i32
  }
  func.func @transform_2(%arg0: i32) -> (i32, i32) {
    %c0_i32 = arith.constant 0 : i32
    %c0_i32_0 = arith.constant 0 : i32
    %c0_i32_1 = arith.constant 0 : i32
    return %c0_i32, %c0_i32_0 : i32, i32
  }
  func.func @transform_3(%arg0: i32) -> (i32, i32) {
    %c0_i32 = arith.constant 0 : i32
    %c0_i32_0 = arith.constant 0 : i32
    %c0_i32_1 = arith.constant 0 : i32
    return %c0_i32, %c0_i32_0 : i32, i32
  }
  func.func @transform_4(%arg0: i32) -> (i32, i32) {
    %c0_i32 = arith.constant 0 : i32
    %c0_i32_0 = arith.constant 0 : i32
    %c0_i32_1 = arith.constant 0 : i32
    return %c0_i32, %c0_i32_0 : i32, i32
  }
  func.func @transform_5(%arg0: i32) -> (i32, i32) {
    %c0_i32 = arith.constant 0 : i32
    %c0_i32_0 = arith.constant 0 : i32
    %c0_i32_1 = arith.constant 0 : i32
    return %c0_i32, %c0_i32_0 : i32, i32
  }
  func.func @transform_6(%arg0: i32) -> (i32, i32) {
    %c0_i32 = arith.constant 0 : i32
    %c0_i32_0 = arith.constant 0 : i32
    %c0_i32_1 = arith.constant 0 : i32
    return %c0_i32, %c0_i32_0 : i32, i32
  }
  func.func @transform_7(%arg0: i32) -> (i32, i32) {
    %c0_i32 = arith.constant 0 : i32
    %c0_i32_0 = arith.constant 0 : i32
    %c0_i32_1 = arith.constant 0 : i32
    return %c0_i32, %c0_i32_0 : i32, i32
  }
  func.func @transform_8(%arg0: i32) -> (i32, i32, i32) {
    %c0_i32 = arith.constant 0 : i32
    %c0_i32_0 = arith.constant 0 : i32
    %c0_i32_1 = arith.constant 0 : i32
    return %arg0, %c0_i32, %c0_i32_0 : i32, i32, i32
  }
}

module attributes {stable_mosaic.version = 11 : i64} {
  func.func @_attn_sublayer_kernel(%arg0: i32, %arg1: memref<1x8x32xf32, #tpu.memory_space<vmem>>, %arg2: memref<1x32xf32, #tpu.memory_space<vmem>>, %arg3: memref<1x32xf32, #tpu.memory_space<vmem>>, %arg4: memref<32x96xf32, #tpu.memory_space<vmem>>, %arg5: memref<1x96xf32, #tpu.memory_space<vmem>>, %arg6: memref<32x32xf32, #tpu.memory_space<vmem>>, %arg7: memref<1x32xf32, #tpu.memory_space<vmem>>, %arg8: memref<1x8x32xf32, #tpu.memory_space<vmem>>) attributes {dimension_semantics = [#tpu.dimension_semantics<parallel>], iteration_bounds = array<i64: 2>, scalar_prefetch = 0 : i64, scratch_operands = 0 : i64, tpu.core_type = #tpu.core_type<tc>, window_params = [{transform_indices = @transform_0, window_bounds = array<i64: 1, 8, 32>}, {pipeline_mode = #tpu.pipeline_mode<synchronous>, transform_indices = @transform_1, window_bounds = array<i64: 1, 32>}, {pipeline_mode = #tpu.pipeline_mode<synchronous>, transform_indices = @transform_2, window_bounds = array<i64: 1, 32>}, {pipeline_mode = #tpu.pipeline_mode<synchronous>, transform_indices = @transform_3, window_bounds = array<i64: 32, 96>}, {pipeline_mode = #tpu.pipeline_mode<synchronous>, transform_indices = @transform_4, window_bounds = array<i64: 1, 96>}, {pipeline_mode = #tpu.pipeline_mode<synchronous>, transform_indices = @transform_5, window_bounds = array<i64: 32, 32>}, {pipeline_mode = #tpu.pipeline_mode<synchronous>, transform_indices = @transform_6, window_bounds = array<i64: 1, 32>}, {transform_indices = @transform_7, window_bounds = array<i64: 1, 8, 32>}]} {
    %c0 = arith.constant 0 : index
    %c0_0 = arith.constant 0 : index
    %c0_1 = arith.constant 0 : index
    %0 = vector.load %arg1[%c0, %c0_0, %c0_1] : memref<1x8x32xf32, #tpu.memory_space<vmem>>, vector<1x8x32xf32>
    %1 = vector.shape_cast %0 : vector<1x8x32xf32> to vector<8x32xf32>
    %cst = arith.constant dense<0.000000e+00> : vector<8xf32>
    %2 = vector.multi_reduction <add>, %1, %cst [1] : vector<8x32xf32> to vector<8xf32>
    %3 = vector.shape_cast %2 : vector<8xf32> to vector<8x1xf32>
    %cst_2 = arith.constant 3.200000e+01 : f32
    %4 = vector.broadcast %cst_2 : f32 to vector<8x1xf32>
    %5 = arith.divf %3, %4 : vector<8x1xf32>
    %6 = vector.broadcast %5 : vector<8x1xf32> to vector<8x32xf32>
    %7 = arith.subf %1, %6 : vector<8x32xf32>
    %8 = arith.mulf %7, %7 : vector<8x32xf32>
    %cst_3 = arith.constant dense<0.000000e+00> : vector<8xf32>
    %9 = vector.multi_reduction <add>, %8, %cst_3 [1] : vector<8x32xf32> to vector<8xf32>
    %10 = vector.shape_cast %9 : vector<8xf32> to vector<8x1xf32>
    %cst_4 = arith.constant 3.100000e+01 : f32
    %11 = vector.broadcast %cst_4 : f32 to vector<8x1xf32>
    %12 = arith.divf %10, %11 : vector<8x1xf32>
    %13 = math.sqrt %12 : vector<8x1xf32>
    %cst_5 = arith.constant 9.99999997E-7 : f32
    %14 = vector.broadcast %cst_5 : f32 to vector<8x1xf32>
    %15 = arith.addf %13, %14 : vector<8x1xf32>
    %cst_6 = arith.constant 1.000000e+00 : f32
    %16 = vector.broadcast %cst_6 : f32 to vector<8x1xf32>
    %17 = arith.divf %16, %15 : vector<8x1xf32>
    %c0_7 = arith.constant 0 : index
    %c0_8 = arith.constant 0 : index
    %18 = vector.load %arg2[%c0_7, %c0_8] : memref<1x32xf32, #tpu.memory_space<vmem>>, vector<1x32xf32>
    %19 = vector.broadcast %18 : vector<1x32xf32> to vector<8x32xf32>
    %20 = arith.mulf %19, %7 : vector<8x32xf32>
    %21 = vector.broadcast %17 : vector<8x1xf32> to vector<8x32xf32>
    %22 = arith.mulf %20, %21 : vector<8x32xf32>
    %c0_9 = arith.constant 0 : index
    %c0_10 = arith.constant 0 : index
    %23 = vector.load %arg3[%c0_9, %c0_10] : memref<1x32xf32, #tpu.memory_space<vmem>>, vector<1x32xf32>
    %24 = vector.broadcast %23 : vector<1x32xf32> to vector<8x32xf32>
    %25 = arith.addf %22, %24 : vector<8x32xf32>
    %c0_11 = arith.constant 0 : index
    %c0_12 = arith.constant 0 : index
    %26 = vector.load %arg4[%c0_11, %c0_12] : memref<32x96xf32, #tpu.memory_space<vmem>>, vector<32x96xf32>
    %c0_13 = arith.constant 0 : index
    %c0_14 = arith.constant 0 : index
    %27 = vector.load %arg5[%c0_13, %c0_14] : memref<1x96xf32, #tpu.memory_space<vmem>>, vector<1x96xf32>
    %cst_15 = arith.constant dense<0.000000e+00> : vector<8x96xf32>
    %28 = tpu.matmul %25, %26, %cst_15 {dimension_numbers = #tpu.dot_dimension_numbers<[1], [0], [0], [1], [0, 0, 1, 1], [], []>} : vector<8x32xf32>, vector<32x96xf32>, vector<8x96xf32> -> vector<8x96xf32>
    %29 = vector.broadcast %27 : vector<1x96xf32> to vector<8x96xf32>
    %30 = arith.addf %28, %29 : vector<8x96xf32>
    %31 = vector.extract_strided_slice %30 {offsets = [0, 0], sizes = [8, 32], strides = [1, 1]} : vector<8x96xf32> to vector<8x32xf32>
    %32 = vector.extract_strided_slice %30 {offsets = [0, 32], sizes = [8, 32], strides = [1, 1]} : vector<8x96xf32> to vector<8x32xf32>
    %33 = vector.extract_strided_slice %30 {offsets = [0, 64], sizes = [8, 32], strides = [1, 1]} : vector<8x96xf32> to vector<8x32xf32>
    %c0_16 = arith.constant 0 : index
    %c0_17 = arith.constant 0 : index
    %34 = vector.load %arg6[%c0_16, %c0_17] : memref<32x32xf32, #tpu.memory_space<vmem>>, vector<32x32xf32>
    %35 = vector.extract_strided_slice %31 {offsets = [0, 0], sizes = [8, 8], strides = [1, 1]} : vector<8x32xf32> to vector<8x8xf32>
    %36 = vector.extract_strided_slice %32 {offsets = [0, 0], sizes = [8, 8], strides = [1, 1]} : vector<8x32xf32> to vector<8x8xf32>
    %37 = vector.extract_strided_slice %33 {offsets = [0, 0], sizes = [8, 8], strides = [1, 1]} : vector<8x32xf32> to vector<8x8xf32>
    %cst_18 = arith.constant dense<0.000000e+00> : vector<8x8xf32>
    %38 = tpu.matmul %35, %36, %cst_18 {dimension_numbers = #tpu.dot_dimension_numbers<[1], [1], [0], [0], [0, 0, 1, 0], [], []>} : vector<8x8xf32>, vector<8x8xf32>, vector<8x8xf32> -> vector<8x8xf32>
    %cst_19 = arith.constant 0.353553385 : f32
    %39 = vector.broadcast %cst_19 : f32 to vector<8x8xf32>
    %40 = arith.mulf %38, %39 : vector<8x8xf32>
    %cst_20 = arith.constant dense<0xFF800000> : vector<8xf32>
    %41 = vector.multi_reduction <maximumf>, %40, %cst_20 [1] : vector<8x8xf32> to vector<8xf32>
    %42 = vector.shape_cast %41 : vector<8xf32> to vector<8x1xf32>
    %43 = vector.broadcast %42 : vector<8x1xf32> to vector<8x8xf32>
    %44 = arith.subf %40, %43 : vector<8x8xf32>
    %45 = math.exp %44 : vector<8x8xf32>
    %cst_21 = arith.constant dense<0.000000e+00> : vector<8xf32>
    %46 = vector.multi_reduction <add>, %45, %cst_21 [1] : vector<8x8xf32> to vector<8xf32>
    %47 = vector.shape_cast %46 : vector<8xf32> to vector<8x1xf32>
    %cst_22 = arith.constant dense<0.000000e+00> : vector<8x8xf32>
    %48 = tpu.matmul %45, %37, %cst_22 {dimension_numbers = #tpu.dot_dimension_numbers<[1], [0], [0], [1], [0, 0, 1, 1], [], []>} : vector<8x8xf32>, vector<8x8xf32>, vector<8x8xf32> -> vector<8x8xf32>
    %49 = tpu.reciprocal %47 {approx = true} : vector<8x1xf32> -> vector<8x1xf32>
    %50 = vector.broadcast %49 : vector<8x1xf32> to vector<8x8xf32>
    %51 = arith.mulf %48, %50 : vector<8x8xf32>
    %52 = vector.extract_strided_slice %34 {offsets = [0, 0], sizes = [8, 32], strides = [1, 1]} : vector<32x32xf32> to vector<8x32xf32>
    %cst_23 = arith.constant dense<0.000000e+00> : vector<8x32xf32>
    %53 = tpu.matmul %51, %52, %cst_23 {dimension_numbers = #tpu.dot_dimension_numbers<[1], [0], [0], [1], [0, 0, 1, 1], [], []>} : vector<8x8xf32>, vector<8x32xf32>, vector<8x32xf32> -> vector<8x32xf32>
    %54 = vector.extract_strided_slice %31 {offsets = [0, 8], sizes = [8, 8], strides = [1, 1]} : vector<8x32xf32> to vector<8x8xf32>
    %55 = vector.extract_strided_slice %32 {offsets = [0, 8], sizes = [8, 8], strides = [1, 1]} : vector<8x32xf32> to vector<8x8xf32>
    %56 = vector.extract_strided_slice %33 {offsets = [0, 8], sizes = [8, 8], strides = [1, 1]} : vector<8x32xf32> to vector<8x8xf32>
    %cst_24 = arith.constant dense<0.000000e+00> : vector<8x8xf32>
    %57 = tpu.matmul %54, %55, %cst_24 {dimension_numbers = #tpu.dot_dimension_numbers<[1], [1], [0], [0], [0, 0, 1, 0], [], []>} : vector<8x8xf32>, vector<8x8xf32>, vector<8x8xf32> -> vector<8x8xf32>
    %cst_25 = arith.constant 0.353553385 : f32
    %58 = vector.broadcast %cst_25 : f32 to vector<8x8xf32>
    %59 = arith.mulf %57, %58 : vector<8x8xf32>
    %cst_26 = arith.constant dense<0xFF800000> : vector<8xf32>
    %60 = vector.multi_reduction <maximumf>, %59, %cst_26 [1] : vector<8x8xf32> to vector<8xf32>
    %61 = vector.shape_cast %60 : vector<8xf32> to vector<8x1xf32>
    %62 = vector.broadcast %61 : vector<8x1xf32> to vector<8x8xf32>
    %63 = arith.subf %59, %62 : vector<8x8xf32>
    %64 = math.exp %63 : vector<8x8xf32>
    %cst_27 = arith.constant dense<0.000000e+00> : vector<8xf32>
    %65 = vector.multi_reduction <add>, %64, %cst_27 [1] : vector<8x8xf32> to vector<8xf32>
    %66 = vector.shape_cast %65 : vector<8xf32> to vector<8x1xf32>
    %cst_28 = arith.constant dense<0.000000e+00> : vector<8x8xf32>
    %67 = tpu.matmul %64, %56, %cst_28 {dimension_numbers = #tpu.dot_dimension_numbers<[1], [0], [0], [1], [0, 0, 1, 1], [], []>} : vector<8x8xf32>, vector<8x8xf32>, vector<8x8xf32> -> vector<8x8xf32>
    %68 = tpu.reciprocal %66 {approx = true} : vector<8x1xf32> -> vector<8x1xf32>
    %69 = vector.broadcast %68 : vector<8x1xf32> to vector<8x8xf32>
    %70 = arith.mulf %67, %69 : vector<8x8xf32>
    %71 = vector.extract_strided_slice %34 {offsets = [8, 0], sizes = [8, 32], strides = [1, 1]} : vector<32x32xf32> to vector<8x32xf32>
    %cst_29 = arith.constant dense<0.000000e+00> : vector<8x32xf32>
    %72 = tpu.matmul %70, %71, %cst_29 {dimension_numbers = #tpu.dot_dimension_numbers<[1], [0], [0], [1], [0, 0, 1, 1], [], []>} : vector<8x8xf32>, vector<8x32xf32>, vector<8x32xf32> -> vector<8x32xf32>
    %73 = arith.addf %53, %72 : vector<8x32xf32>
    %74 = vector.extract_strided_slice %31 {offsets = [0, 16], sizes = [8, 8], strides = [1, 1]} : vector<8x32xf32> to vector<8x8xf32>
    %75 = vector.extract_strided_slice %32 {offsets = [0, 16], sizes = [8, 8], strides = [1, 1]} : vector<8x32xf32> to vector<8x8xf32>
    %76 = vector.extract_strided_slice %33 {offsets = [0, 16], sizes = [8, 8], strides = [1, 1]} : vector<8x32xf32> to vector<8x8xf32>
    %cst_30 = arith.constant dense<0.000000e+00> : vector<8x8xf32>
    %77 = tpu.matmul %74, %75, %cst_30 {dimension_numbers = #tpu.dot_dimension_numbers<[1], [1], [0], [0], [0, 0, 1, 0], [], []>} : vector<8x8xf32>, vector<8x8xf32>, vector<8x8xf32> -> vector<8x8xf32>
    %cst_31 = arith.constant 0.353553385 : f32
    %78 = vector.broadcast %cst_31 : f32 to vector<8x8xf32>
    %79 = arith.mulf %77, %78 : vector<8x8xf32>
    %cst_32 = arith.constant dense<0xFF800000> : vector<8xf32>
    %80 = vector.multi_reduction <maximumf>, %79, %cst_32 [1] : vector<8x8xf32> to vector<8xf32>
    %81 = vector.shape_cast %80 : vector<8xf32> to vector<8x1xf32>
    %82 = vector.broadcast %81 : vector<8x1xf32> to vector<8x8xf32>
    %83 = arith.subf %79, %82 : vector<8x8xf32>
    %84 = math.exp %83 : vector<8x8xf32>
    %cst_33 = arith.constant dense<0.000000e+00> : vector<8xf32>
    %85 = vector.multi_reduction <add>, %84, %cst_33 [1] : vector<8x8xf32> to vector<8xf32>
    %86 = vector.shape_cast %85 : vector<8xf32> to vector<8x1xf32>
    %cst_34 = arith.constant dense<0.000000e+00> : vector<8x8xf32>
    %87 = tpu.matmul %84, %76, %cst_34 {dimension_numbers = #tpu.dot_dimension_numbers<[1], [0], [0], [1], [0, 0, 1, 1], [], []>} : vector<8x8xf32>, vector<8x8xf32>, vector<8x8xf32> -> vector<8x8xf32>
    %88 = tpu.reciprocal %86 {approx = true} : vector<8x1xf32> -> vector<8x1xf32>
    %89 = vector.broadcast %88 : vector<8x1xf32> to vector<8x8xf32>
    %90 = arith.mulf %87, %89 : vector<8x8xf32>
    %91 = vector.extract_strided_slice %34 {offsets = [16, 0], sizes = [8, 32], strides = [1, 1]} : vector<32x32xf32> to vector<8x32xf32>
    %cst_35 = arith.constant dense<0.000000e+00> : vector<8x32xf32>
    %92 = tpu.matmul %90, %91, %cst_35 {dimension_numbers = #tpu.dot_dimension_numbers<[1], [0], [0], [1], [0, 0, 1, 1], [], []>} : vector<8x8xf32>, vector<8x32xf32>, vector<8x32xf32> -> vector<8x32xf32>
    %93 = arith.addf %73, %92 : vector<8x32xf32>
    %94 = vector.extract_strided_slice %31 {offsets = [0, 24], sizes = [8, 8], strides = [1, 1]} : vector<8x32xf32> to vector<8x8xf32>
    %95 = vector.extract_strided_slice %32 {offsets = [0, 24], sizes = [8, 8], strides = [1, 1]} : vector<8x32xf32> to vector<8x8xf32>
    %96 = vector.extract_strided_slice %33 {offsets = [0, 24], sizes = [8, 8], strides = [1, 1]} : vector<8x32xf32> to vector<8x8xf32>
    %cst_36 = arith.constant dense<0.000000e+00> : vector<8x8xf32>
    %97 = tpu.matmul %94, %95, %cst_36 {dimension_numbers = #tpu.dot_dimension_numbers<[1], [1], [0], [0], [0, 0, 1, 0], [], []>} : vector<8x8xf32>, vector<8x8xf32>, vector<8x8xf32> -> vector<8x8xf32>
    %cst_37 = arith.constant 0.353553385 : f32
    %98 = vector.broadcast %cst_37 : f32 to vector<8x8xf32>
    %99 = arith.mulf %97, %98 : vector<8x8xf32>
    %cst_38 = arith.constant dense<0xFF800000> : vector<8xf32>
    %100 = vector.multi_reduction <maximumf>, %99, %cst_38 [1] : vector<8x8xf32> to vector<8xf32>
    %101 = vector.shape_cast %100 : vector<8xf32> to vector<8x1xf32>
    %102 = vector.broadcast %101 : vector<8x1xf32> to vector<8x8xf32>
    %103 = arith.subf %99, %102 : vector<8x8xf32>
    %104 = math.exp %103 : vector<8x8xf32>
    %cst_39 = arith.constant dense<0.000000e+00> : vector<8xf32>
    %105 = vector.multi_reduction <add>, %104, %cst_39 [1] : vector<8x8xf32> to vector<8xf32>
    %106 = vector.shape_cast %105 : vector<8xf32> to vector<8x1xf32>
    %cst_40 = arith.constant dense<0.000000e+00> : vector<8x8xf32>
    %107 = tpu.matmul %104, %96, %cst_40 {dimension_numbers = #tpu.dot_dimension_numbers<[1], [0], [0], [1], [0, 0, 1, 1], [], []>} : vector<8x8xf32>, vector<8x8xf32>, vector<8x8xf32> -> vector<8x8xf32>
    %108 = tpu.reciprocal %106 {approx = true} : vector<8x1xf32> -> vector<8x1xf32>
    %109 = vector.broadcast %108 : vector<8x1xf32> to vector<8x8xf32>
    %110 = arith.mulf %107, %109 : vector<8x8xf32>
    %111 = vector.extract_strided_slice %34 {offsets = [24, 0], sizes = [8, 32], strides = [1, 1]} : vector<32x32xf32> to vector<8x32xf32>
    %cst_41 = arith.constant dense<0.000000e+00> : vector<8x32xf32>
    %112 = tpu.matmul %110, %111, %cst_41 {dimension_numbers = #tpu.dot_dimension_numbers<[1], [0], [0], [1], [0, 0, 1, 1], [], []>} : vector<8x8xf32>, vector<8x32xf32>, vector<8x32xf32> -> vector<8x32xf32>
    %113 = arith.addf %93, %112 : vector<8x32xf32>
    %c0_42 = arith.constant 0 : index
    %c0_43 = arith.constant 0 : index
    %114 = vector.load %arg7[%c0_42, %c0_43] : memref<1x32xf32, #tpu.memory_space<vmem>>, vector<1x32xf32>
    %115 = vector.broadcast %114 : vector<1x32xf32> to vector<8x32xf32>
    %116 = arith.addf %113, %115 : vector<8x32xf32>
    %117 = arith.addf %1, %116 : vector<8x32xf32>
    %c0_44 = arith.constant 0 : index
    %c0_45 = arith.constant 0 : index
    %c0_46 = arith.constant 0 : index
    %118 = vector.load %arg8[%c0_44, %c0_45, %c0_46] : memref<1x8x32xf32, #tpu.memory_space<vmem>>, vector<1x8x32xf32>
    %119 = vector.shape_cast %118 : vector<1x8x32xf32> to vector<8x32xf32>
    %120 = vector.shape_cast %117 : vector<8x32xf32> to vector<1x8x32xf32>
    tpu.vector_store %arg8[%c0_44, %c0_45, %c0_46], %120 {strides = array<i32>} : memref<1x8x32xf32, #tpu.memory_space<vmem>>, vector<1x8x32xf32>,
    return
  }
  func.func @transform_0(%arg0: i32) -> (i32, i32, i32) {
    %c0_i32 = arith.constant 0 : i32
    %c0_i32_0 = arith.constant 0 : i32
    %c0_i32_1 = arith.constant 0 : i32
    return %arg0, %c0_i32, %c0_i32_0 : i32, i32, i32
  }
  func.func @transform_1(%arg0: i32) -> (i32, i32) {
    %c0_i32 = arith.constant 0 : i32
    %c0_i32_0 = arith.constant 0 : i32
    %c0_i32_1 = arith.constant 0 : i32
    return %c0_i32, %c0_i32_0 : i32, i32
  }
  func.func @transform_2(%arg0: i32) -> (i32, i32) {
    %c0_i32 = arith.constant 0 : i32
    %c0_i32_0 = arith.constant 0 : i32
    %c0_i32_1 = arith.constant 0 : i32
    return %c0_i32, %c0_i32_0 : i32, i32
  }
  func.func @transform_3(%arg0: i32) -> (i32, i32) {
    %c0_i32 = arith.constant 0 : i32
    %c0_i32_0 = arith.constant 0 : i32
    %c0_i32_1 = arith.constant 0 : i32
    return %c0_i32, %c0_i32_0 : i32, i32
  }
  func.func @transform_4(%arg0: i32) -> (i32, i32) {
    %c0_i32 = arith.constant 0 : i32
    %c0_i32_0 = arith.constant 0 : i32
    %c0_i32_1 = arith.constant 0 : i32
    return %c0_i32, %c0_i32_0 : i32, i32
  }
  func.func @transform_5(%arg0: i32) -> (i32, i32) {
    %c0_i32 = arith.constant 0 : i32
    %c0_i32_0 = arith.constant 0 : i32
    %c0_i32_1 = arith.constant 0 : i32
    return %c0_i32, %c0_i32_0 : i32, i32
  }
  func.func @transform_6(%arg0: i32) -> (i32, i32) {
    %c0_i32 = arith.constant 0 : i32
    %c0_i32_0 = arith.constant 0 : i32
    %c0_i32_1 = arith.constant 0 : i32
    return %c0_i32, %c0_i32_0 : i32, i32
  }
  func.func @transform_7(%arg0: i32) -> (i32, i32, i32) {
    %c0_i32 = arith.constant 0 : i32
    %c0_i32_0 = arith.constant 0 : i32
    %c0_i32_1 = arith.constant 0 : i32
    return %arg0, %c0_i32, %c0_i32_0 : i32, i32, i32
  }
}

module attributes {stable_mosaic.version = 11 : i64} {
  func.func @_layernorm_kernel(%arg0: i32, %arg1: memref<1x8x32xf32, #tpu.memory_space<vmem>>, %arg2: memref<1x32xf32, #tpu.memory_space<vmem>>, %arg3: memref<1x32xf32, #tpu.memory_space<vmem>>, %arg4: memref<1x8x32xf32, #tpu.memory_space<vmem>>) attributes {dimension_semantics = [#tpu.dimension_semantics<parallel>], iteration_bounds = array<i64: 2>, scalar_prefetch = 0 : i64, scratch_operands = 0 : i64, tpu.core_type = #tpu.core_type<tc>, window_params = [{transform_indices = @transform_0, window_bounds = array<i64: 1, 8, 32>}, {pipeline_mode = #tpu.pipeline_mode<synchronous>, transform_indices = @transform_1, window_bounds = array<i64: 1, 32>}, {pipeline_mode = #tpu.pipeline_mode<synchronous>, transform_indices = @transform_2, window_bounds = array<i64: 1, 32>}, {transform_indices = @transform_3, window_bounds = array<i64: 1, 8, 32>}]} {
    %c0 = arith.constant 0 : index
    %c0_0 = arith.constant 0 : index
    %c0_1 = arith.constant 0 : index
    %0 = vector.load %arg1[%c0, %c0_0, %c0_1] : memref<1x8x32xf32, #tpu.memory_space<vmem>>, vector<1x8x32xf32>
    %1 = vector.shape_cast %0 : vector<1x8x32xf32> to vector<8x32xf32>
    %cst = arith.constant dense<0.000000e+00> : vector<8xf32>
    %2 = vector.multi_reduction <add>, %1, %cst [1] : vector<8x32xf32> to vector<8xf32>
    %3 = vector.shape_cast %2 : vector<8xf32> to vector<8x1xf32>
    %cst_2 = arith.constant 3.200000e+01 : f32
    %4 = vector.broadcast %cst_2 : f32 to vector<8x1xf32>
    %5 = arith.divf %3, %4 : vector<8x1xf32>
    %6 = vector.broadcast %5 : vector<8x1xf32> to vector<8x32xf32>
    %7 = arith.subf %1, %6 : vector<8x32xf32>
    %8 = arith.mulf %7, %7 : vector<8x32xf32>
    %cst_3 = arith.constant dense<0.000000e+00> : vector<8xf32>
    %9 = vector.multi_reduction <add>, %8, %cst_3 [1] : vector<8x32xf32> to vector<8xf32>
    %10 = vector.shape_cast %9 : vector<8xf32> to vector<8x1xf32>
    %cst_4 = arith.constant 3.100000e+01 : f32
    %11 = vector.broadcast %cst_4 : f32 to vector<8x1xf32>
    %12 = arith.divf %10, %11 : vector<8x1xf32>
    %13 = math.sqrt %12 : vector<8x1xf32>
    %cst_5 = arith.constant 9.99999997E-7 : f32
    %14 = vector.broadcast %cst_5 : f32 to vector<8x1xf32>
    %15 = arith.addf %13, %14 : vector<8x1xf32>
    %cst_6 = arith.constant 1.000000e+00 : f32
    %16 = vector.broadcast %cst_6 : f32 to vector<8x1xf32>
    %17 = arith.divf %16, %15 : vector<8x1xf32>
    %c0_7 = arith.constant 0 : index
    %c0_8 = arith.constant 0 : index
    %18 = vector.load %arg2[%c0_7, %c0_8] : memref<1x32xf32, #tpu.memory_space<vmem>>, vector<1x32xf32>
    %19 = vector.broadcast %18 : vector<1x32xf32> to vector<8x32xf32>
    %20 = arith.mulf %19, %7 : vector<8x32xf32>
    %21 = vector.broadcast %17 : vector<8x1xf32> to vector<8x32xf32>
    %22 = arith.mulf %20, %21 : vector<8x32xf32>
    %c0_9 = arith.constant 0 : index
    %c0_10 = arith.constant 0 : index
    %23 = vector.load %arg3[%c0_9, %c0_10] : memref<1x32xf32, #tpu.memory_space<vmem>>, vector<1x32xf32>
    %24 = vector.broadcast %23 : vector<1x32xf32> to vector<8x32xf32>
    %25 = arith.addf %22, %24 : vector<8x32xf32>
    %c0_11 = arith.constant 0 : index
    %c0_12 = arith.constant 0 : index
    %c0_13 = arith.constant 0 : index
    %26 = vector.load %arg4[%c0_11, %c0_12, %c0_13] : memref<1x8x32xf32, #tpu.memory_space<vmem>>, vector<1x8x32xf32>
    %27 = vector.shape_cast %26 : vector<1x8x32xf32> to vector<8x32xf32>
    %28 = vector.shape_cast %25 : vector<8x32xf32> to vector<1x8x32xf32>
    tpu.vector_store %arg4[%c0_11, %c0_12, %c0_13], %28 {strides = array<i32>} : memref<1x8x32xf32, #tpu.memory_space<vmem>>, vector<1x8x32xf32>,
    return
  }
  func.func @transform_0(%arg0: i32) -> (i32, i32, i32) {
    %c0_i32 = arith.constant 0 : i32
    %c0_i32_0 = arith.constant 0 : i32
    %c0_i32_1 = arith.constant 0 : i32
    return %arg0, %c0_i32, %c0_i32_0 : i32, i32, i32
  }
  func.func @transform_1(%arg0: i32) -> (i32, i32) {
    %c0_i32 = arith.constant 0 : i32
    %c0_i32_0 = arith.constant 0 : i32
    %c0_i32_1 = arith.constant 0 : i32
    return %c0_i32, %c0_i32_0 : i32, i32
  }
  func.func @transform_2(%arg0: i32) -> (i32, i32) {
    %c0_i32 = arith.constant 0 : i32
    %c0_i32_0 = arith.constant 0 : i32
    %c0_i32_1 = arith.constant 0 : i32
    return %c0_i32, %c0_i32_0 : i32, i32
  }
  func.func @transform_3(%arg0: i32) -> (i32, i32, i32) {
    %c0_i32 = arith.constant 0 : i32
    %c0_i32_0 = arith.constant 0 : i32
    %c0_i32_1 = arith.constant 0 : i32
    return %arg0, %c0_i32, %c0_i32_0 : i32, i32, i32
  }
}

module attributes {stable_mosaic.version = 11 : i64} {
  func.func @_attn_sublayer_kernel(%arg0: i32, %arg1: memref<1x8x32xf32, #tpu.memory_space<vmem>>, %arg2: memref<1x8x32xf32, #tpu.memory_space<vmem>>, %arg3: memref<1x32xf32, #tpu.memory_space<vmem>>, %arg4: memref<1x32xf32, #tpu.memory_space<vmem>>, %arg5: memref<32x96xf32, #tpu.memory_space<vmem>>, %arg6: memref<1x96xf32, #tpu.memory_space<vmem>>, %arg7: memref<32x32xf32, #tpu.memory_space<vmem>>, %arg8: memref<1x32xf32, #tpu.memory_space<vmem>>, %arg9: memref<1x8x32xf32, #tpu.memory_space<vmem>>) attributes {dimension_semantics = [#tpu.dimension_semantics<parallel>], iteration_bounds = array<i64: 2>, scalar_prefetch = 0 : i64, scratch_operands = 0 : i64, tpu.core_type = #tpu.core_type<tc>, window_params = [{transform_indices = @transform_0, window_bounds = array<i64: 1, 8, 32>}, {transform_indices = @transform_1, window_bounds = array<i64: 1, 8, 32>}, {pipeline_mode = #tpu.pipeline_mode<synchronous>, transform_indices = @transform_2, window_bounds = array<i64: 1, 32>}, {pipeline_mode = #tpu.pipeline_mode<synchronous>, transform_indices = @transform_3, window_bounds = array<i64: 1, 32>}, {pipeline_mode = #tpu.pipeline_mode<synchronous>, transform_indices = @transform_4, window_bounds = array<i64: 32, 96>}, {pipeline_mode = #tpu.pipeline_mode<synchronous>, transform_indices = @transform_5, window_bounds = array<i64: 1, 96>}, {pipeline_mode = #tpu.pipeline_mode<synchronous>, transform_indices = @transform_6, window_bounds = array<i64: 32, 32>}, {pipeline_mode = #tpu.pipeline_mode<synchronous>, transform_indices = @transform_7, window_bounds = array<i64: 1, 32>}, {transform_indices = @transform_8, window_bounds = array<i64: 1, 8, 32>}]} {
    %c0 = arith.constant 0 : index
    %c0_0 = arith.constant 0 : index
    %c0_1 = arith.constant 0 : index
    %0 = vector.load %arg1[%c0, %c0_0, %c0_1] : memref<1x8x32xf32, #tpu.memory_space<vmem>>, vector<1x8x32xf32>
    %1 = vector.shape_cast %0 : vector<1x8x32xf32> to vector<8x32xf32>
    %cst = arith.constant dense<0.000000e+00> : vector<8xf32>
    %2 = vector.multi_reduction <add>, %1, %cst [1] : vector<8x32xf32> to vector<8xf32>
    %3 = vector.shape_cast %2 : vector<8xf32> to vector<8x1xf32>
    %cst_2 = arith.constant 3.200000e+01 : f32
    %4 = vector.broadcast %cst_2 : f32 to vector<8x1xf32>
    %5 = arith.divf %3, %4 : vector<8x1xf32>
    %6 = vector.broadcast %5 : vector<8x1xf32> to vector<8x32xf32>
    %7 = arith.subf %1, %6 : vector<8x32xf32>
    %8 = arith.mulf %7, %7 : vector<8x32xf32>
    %cst_3 = arith.constant dense<0.000000e+00> : vector<8xf32>
    %9 = vector.multi_reduction <add>, %8, %cst_3 [1] : vector<8x32xf32> to vector<8xf32>
    %10 = vector.shape_cast %9 : vector<8xf32> to vector<8x1xf32>
    %cst_4 = arith.constant 3.100000e+01 : f32
    %11 = vector.broadcast %cst_4 : f32 to vector<8x1xf32>
    %12 = arith.divf %10, %11 : vector<8x1xf32>
    %13 = math.sqrt %12 : vector<8x1xf32>
    %cst_5 = arith.constant 9.99999997E-7 : f32
    %14 = vector.broadcast %cst_5 : f32 to vector<8x1xf32>
    %15 = arith.addf %13, %14 : vector<8x1xf32>
    %cst_6 = arith.constant 1.000000e+00 : f32
    %16 = vector.broadcast %cst_6 : f32 to vector<8x1xf32>
    %17 = arith.divf %16, %15 : vector<8x1xf32>
    %c0_7 = arith.constant 0 : index
    %c0_8 = arith.constant 0 : index
    %18 = vector.load %arg3[%c0_7, %c0_8] : memref<1x32xf32, #tpu.memory_space<vmem>>, vector<1x32xf32>
    %19 = vector.broadcast %18 : vector<1x32xf32> to vector<8x32xf32>
    %20 = arith.mulf %19, %7 : vector<8x32xf32>
    %21 = vector.broadcast %17 : vector<8x1xf32> to vector<8x32xf32>
    %22 = arith.mulf %20, %21 : vector<8x32xf32>
    %c0_9 = arith.constant 0 : index
    %c0_10 = arith.constant 0 : index
    %23 = vector.load %arg4[%c0_9, %c0_10] : memref<1x32xf32, #tpu.memory_space<vmem>>, vector<1x32xf32>
    %24 = vector.broadcast %23 : vector<1x32xf32> to vector<8x32xf32>
    %25 = arith.addf %22, %24 : vector<8x32xf32>
    %c0_11 = arith.constant 0 : index
    %c0_12 = arith.constant 0 : index
    %26 = vector.load %arg5[%c0_11, %c0_12] : memref<32x96xf32, #tpu.memory_space<vmem>>, vector<32x96xf32>
    %c0_13 = arith.constant 0 : index
    %c0_14 = arith.constant 0 : index
    %27 = vector.load %arg6[%c0_13, %c0_14] : memref<1x96xf32, #tpu.memory_space<vmem>>, vector<1x96xf32>
    %c0_15 = arith.constant 0 : index
    %c0_16 = arith.constant 0 : index
    %c0_17 = arith.constant 0 : index
    %28 = vector.load %arg2[%c0_15, %c0_16, %c0_17] : memref<1x8x32xf32, #tpu.memory_space<vmem>>, vector<1x8x32xf32>
    %29 = vector.shape_cast %28 : vector<1x8x32xf32> to vector<8x32xf32>
    %30 = vector.extract_strided_slice %26 {offsets = [0, 0], sizes = [32, 32], strides = [1, 1]} : vector<32x96xf32> to vector<32x32xf32>
    %cst_18 = arith.constant dense<0.000000e+00> : vector<8x32xf32>
    %31 = tpu.matmul %25, %30, %cst_18 {dimension_numbers = #tpu.dot_dimension_numbers<[1], [0], [0], [1], [0, 0, 1, 1], [], []>} : vector<8x32xf32>, vector<32x32xf32>, vector<8x32xf32> -> vector<8x32xf32>
    %32 = vector.extract_strided_slice %27 {offsets = [0, 0], sizes = [1, 32], strides = [1, 1]} : vector<1x96xf32> to vector<1x32xf32>
    %33 = vector.broadcast %32 : vector<1x32xf32> to vector<8x32xf32>
    %34 = arith.addf %31, %33 : vector<8x32xf32>
    %35 = vector.extract_strided_slice %26 {offsets = [0, 32], sizes = [32, 64], strides = [1, 1]} : vector<32x96xf32> to vector<32x64xf32>
    %cst_19 = arith.constant dense<0.000000e+00> : vector<8x64xf32>
    %36 = tpu.matmul %29, %35, %cst_19 {dimension_numbers = #tpu.dot_dimension_numbers<[1], [0], [0], [1], [0, 0, 1, 1], [], []>} : vector<8x32xf32>, vector<32x64xf32>, vector<8x64xf32> -> vector<8x64xf32>
    %37 = vector.extract_strided_slice %27 {offsets = [0, 32], sizes = [1, 64], strides = [1, 1]} : vector<1x96xf32> to vector<1x64xf32>
    %38 = vector.broadcast %37 : vector<1x64xf32> to vector<8x64xf32>
    %39 = arith.addf %36, %38 : vector<8x64xf32>
    %40 = vector.extract_strided_slice %39 {offsets = [0, 0], sizes = [8, 32], strides = [1, 1]} : vector<8x64xf32> to vector<8x32xf32>
    %41 = vector.extract_strided_slice %39 {offsets = [0, 32], sizes = [8, 32], strides = [1, 1]} : vector<8x64xf32> to vector<8x32xf32>
    %c0_20 = arith.constant 0 : index
    %c0_21 = arith.constant 0 : index
    %42 = vector.load %arg7[%c0_20, %c0_21] : memref<32x32xf32, #tpu.memory_space<vmem>>, vector<32x32xf32>
    %43 = vector.extract_strided_slice %34 {offsets = [0, 0], sizes = [8, 8], strides = [1, 1]} : vector<8x32xf32> to vector<8x8xf32>
    %44 = vector.extract_strided_slice %40 {offsets = [0, 0], sizes = [8, 8], strides = [1, 1]} : vector<8x32xf32> to vector<8x8xf32>
    %45 = vector.extract_strided_slice %41 {offsets = [0, 0], sizes = [8, 8], strides = [1, 1]} : vector<8x32xf32> to vector<8x8xf32>
    %cst_22 = arith.constant dense<0.000000e+00> : vector<8x8xf32>
    %46 = tpu.matmul %43, %44, %cst_22 {dimension_numbers = #tpu.dot_dimension_numbers<[1], [1], [0], [0], [0, 0, 1, 0], [], []>} : vector<8x8xf32>, vector<8x8xf32>, vector<8x8xf32> -> vector<8x8xf32>
    %cst_23 = arith.constant 0.353553385 : f32
    %47 = vector.broadcast %cst_23 : f32 to vector<8x8xf32>
    %48 = arith.mulf %46, %47 : vector<8x8xf32>
    %cst_24 = arith.constant dense<0xFF800000> : vector<8xf32>
    %49 = vector.multi_reduction <maximumf>, %48, %cst_24 [1] : vector<8x8xf32> to vector<8xf32>
    %50 = vector.shape_cast %49 : vector<8xf32> to vector<8x1xf32>
    %51 = vector.broadcast %50 : vector<8x1xf32> to vector<8x8xf32>
    %52 = arith.subf %48, %51 : vector<8x8xf32>
    %53 = math.exp %52 : vector<8x8xf32>
    %cst_25 = arith.constant dense<0.000000e+00> : vector<8xf32>
    %54 = vector.multi_reduction <add>, %53, %cst_25 [1] : vector<8x8xf32> to vector<8xf32>
    %55 = vector.shape_cast %54 : vector<8xf32> to vector<8x1xf32>
    %cst_26 = arith.constant dense<0.000000e+00> : vector<8x8xf32>
    %56 = tpu.matmul %53, %45, %cst_26 {dimension_numbers = #tpu.dot_dimension_numbers<[1], [0], [0], [1], [0, 0, 1, 1], [], []>} : vector<8x8xf32>, vector<8x8xf32>, vector<8x8xf32> -> vector<8x8xf32>
    %57 = tpu.reciprocal %55 {approx = true} : vector<8x1xf32> -> vector<8x1xf32>
    %58 = vector.broadcast %57 : vector<8x1xf32> to vector<8x8xf32>
    %59 = arith.mulf %56, %58 : vector<8x8xf32>
    %60 = vector.extract_strided_slice %42 {offsets = [0, 0], sizes = [8, 32], strides = [1, 1]} : vector<32x32xf32> to vector<8x32xf32>
    %cst_27 = arith.constant dense<0.000000e+00> : vector<8x32xf32>
    %61 = tpu.matmul %59, %60, %cst_27 {dimension_numbers = #tpu.dot_dimension_numbers<[1], [0], [0], [1], [0, 0, 1, 1], [], []>} : vector<8x8xf32>, vector<8x32xf32>, vector<8x32xf32> -> vector<8x32xf32>
    %62 = vector.extract_strided_slice %34 {offsets = [0, 8], sizes = [8, 8], strides = [1, 1]} : vector<8x32xf32> to vector<8x8xf32>
    %63 = vector.extract_strided_slice %40 {offsets = [0, 8], sizes = [8, 8], strides = [1, 1]} : vector<8x32xf32> to vector<8x8xf32>
    %64 = vector.extract_strided_slice %41 {offsets = [0, 8], sizes = [8, 8], strides = [1, 1]} : vector<8x32xf32> to vector<8x8xf32>
    %cst_28 = arith.constant dense<0.000000e+00> : vector<8x8xf32>
    %65 = tpu.matmul %62, %63, %cst_28 {dimension_numbers = #tpu.dot_dimension_numbers<[1], [1], [0], [0], [0, 0, 1, 0], [], []>} : vector<8x8xf32>, vector<8x8xf32>, vector<8x8xf32> -> vector<8x8xf32>
    %cst_29 = arith.constant 0.353553385 : f32
    %66 = vector.broadcast %cst_29 : f32 to vector<8x8xf32>
    %67 = arith.mulf %65, %66 : vector<8x8xf32>
    %cst_30 = arith.constant dense<0xFF800000> : vector<8xf32>
    %68 = vector.multi_reduction <maximumf>, %67, %cst_30 [1] : vector<8x8xf32> to vector<8xf32>
    %69 = vector.shape_cast %68 : vector<8xf32> to vector<8x1xf32>
    %70 = vector.broadcast %69 : vector<8x1xf32> to vector<8x8xf32>
    %71 = arith.subf %67, %70 : vector<8x8xf32>
    %72 = math.exp %71 : vector<8x8xf32>
    %cst_31 = arith.constant dense<0.000000e+00> : vector<8xf32>
    %73 = vector.multi_reduction <add>, %72, %cst_31 [1] : vector<8x8xf32> to vector<8xf32>
    %74 = vector.shape_cast %73 : vector<8xf32> to vector<8x1xf32>
    %cst_32 = arith.constant dense<0.000000e+00> : vector<8x8xf32>
    %75 = tpu.matmul %72, %64, %cst_32 {dimension_numbers = #tpu.dot_dimension_numbers<[1], [0], [0], [1], [0, 0, 1, 1], [], []>} : vector<8x8xf32>, vector<8x8xf32>, vector<8x8xf32> -> vector<8x8xf32>
    %76 = tpu.reciprocal %74 {approx = true} : vector<8x1xf32> -> vector<8x1xf32>
    %77 = vector.broadcast %76 : vector<8x1xf32> to vector<8x8xf32>
    %78 = arith.mulf %75, %77 : vector<8x8xf32>
    %79 = vector.extract_strided_slice %42 {offsets = [8, 0], sizes = [8, 32], strides = [1, 1]} : vector<32x32xf32> to vector<8x32xf32>
    %cst_33 = arith.constant dense<0.000000e+00> : vector<8x32xf32>
    %80 = tpu.matmul %78, %79, %cst_33 {dimension_numbers = #tpu.dot_dimension_numbers<[1], [0], [0], [1], [0, 0, 1, 1], [], []>} : vector<8x8xf32>, vector<8x32xf32>, vector<8x32xf32> -> vector<8x32xf32>
    %81 = arith.addf %61, %80 : vector<8x32xf32>
    %82 = vector.extract_strided_slice %34 {offsets = [0, 16], sizes = [8, 8], strides = [1, 1]} : vector<8x32xf32> to vector<8x8xf32>
    %83 = vector.extract_strided_slice %40 {offsets = [0, 16], sizes = [8, 8], strides = [1, 1]} : vector<8x32xf32> to vector<8x8xf32>
    %84 = vector.extract_strided_slice %41 {offsets = [0, 16], sizes = [8, 8], strides = [1, 1]} : vector<8x32xf32> to vector<8x8xf32>
    %cst_34 = arith.constant dense<0.000000e+00> : vector<8x8xf32>
    %85 = tpu.matmul %82, %83, %cst_34 {dimension_numbers = #tpu.dot_dimension_numbers<[1], [1], [0], [0], [0, 0, 1, 0], [], []>} : vector<8x8xf32>, vector<8x8xf32>, vector<8x8xf32> -> vector<8x8xf32>
    %cst_35 = arith.constant 0.353553385 : f32
    %86 = vector.broadcast %cst_35 : f32 to vector<8x8xf32>
    %87 = arith.mulf %85, %86 : vector<8x8xf32>
    %cst_36 = arith.constant dense<0xFF800000> : vector<8xf32>
    %88 = vector.multi_reduction <maximumf>, %87, %cst_36 [1] : vector<8x8xf32> to vector<8xf32>
    %89 = vector.shape_cast %88 : vector<8xf32> to vector<8x1xf32>
    %90 = vector.broadcast %89 : vector<8x1xf32> to vector<8x8xf32>
    %91 = arith.subf %87, %90 : vector<8x8xf32>
    %92 = math.exp %91 : vector<8x8xf32>
    %cst_37 = arith.constant dense<0.000000e+00> : vector<8xf32>
    %93 = vector.multi_reduction <add>, %92, %cst_37 [1] : vector<8x8xf32> to vector<8xf32>
    %94 = vector.shape_cast %93 : vector<8xf32> to vector<8x1xf32>
    %cst_38 = arith.constant dense<0.000000e+00> : vector<8x8xf32>
    %95 = tpu.matmul %92, %84, %cst_38 {dimension_numbers = #tpu.dot_dimension_numbers<[1], [0], [0], [1], [0, 0, 1, 1], [], []>} : vector<8x8xf32>, vector<8x8xf32>, vector<8x8xf32> -> vector<8x8xf32>
    %96 = tpu.reciprocal %94 {approx = true} : vector<8x1xf32> -> vector<8x1xf32>
    %97 = vector.broadcast %96 : vector<8x1xf32> to vector<8x8xf32>
    %98 = arith.mulf %95, %97 : vector<8x8xf32>
    %99 = vector.extract_strided_slice %42 {offsets = [16, 0], sizes = [8, 32], strides = [1, 1]} : vector<32x32xf32> to vector<8x32xf32>
    %cst_39 = arith.constant dense<0.000000e+00> : vector<8x32xf32>
    %100 = tpu.matmul %98, %99, %cst_39 {dimension_numbers = #tpu.dot_dimension_numbers<[1], [0], [0], [1], [0, 0, 1, 1], [], []>} : vector<8x8xf32>, vector<8x32xf32>, vector<8x32xf32> -> vector<8x32xf32>
    %101 = arith.addf %81, %100 : vector<8x32xf32>
    %102 = vector.extract_strided_slice %34 {offsets = [0, 24], sizes = [8, 8], strides = [1, 1]} : vector<8x32xf32> to vector<8x8xf32>
    %103 = vector.extract_strided_slice %40 {offsets = [0, 24], sizes = [8, 8], strides = [1, 1]} : vector<8x32xf32> to vector<8x8xf32>
    %104 = vector.extract_strided_slice %41 {offsets = [0, 24], sizes = [8, 8], strides = [1, 1]} : vector<8x32xf32> to vector<8x8xf32>
    %cst_40 = arith.constant dense<0.000000e+00> : vector<8x8xf32>
    %105 = tpu.matmul %102, %103, %cst_40 {dimension_numbers = #tpu.dot_dimension_numbers<[1], [1], [0], [0], [0, 0, 1, 0], [], []>} : vector<8x8xf32>, vector<8x8xf32>, vector<8x8xf32> -> vector<8x8xf32>
    %cst_41 = arith.constant 0.353553385 : f32
    %106 = vector.broadcast %cst_41 : f32 to vector<8x8xf32>
    %107 = arith.mulf %105, %106 : vector<8x8xf32>
    %cst_42 = arith.constant dense<0xFF800000> : vector<8xf32>
    %108 = vector.multi_reduction <maximumf>, %107, %cst_42 [1] : vector<8x8xf32> to vector<8xf32>
    %109 = vector.shape_cast %108 : vector<8xf32> to vector<8x1xf32>
    %110 = vector.broadcast %109 : vector<8x1xf32> to vector<8x8xf32>
    %111 = arith.subf %107, %110 : vector<8x8xf32>
    %112 = math.exp %111 : vector<8x8xf32>
    %cst_43 = arith.constant dense<0.000000e+00> : vector<8xf32>
    %113 = vector.multi_reduction <add>, %112, %cst_43 [1] : vector<8x8xf32> to vector<8xf32>
    %114 = vector.shape_cast %113 : vector<8xf32> to vector<8x1xf32>
    %cst_44 = arith.constant dense<0.000000e+00> : vector<8x8xf32>
    %115 = tpu.matmul %112, %104, %cst_44 {dimension_numbers = #tpu.dot_dimension_numbers<[1], [0], [0], [1], [0, 0, 1, 1], [], []>} : vector<8x8xf32>, vector<8x8xf32>, vector<8x8xf32> -> vector<8x8xf32>
    %116 = tpu.reciprocal %114 {approx = true} : vector<8x1xf32> -> vector<8x1xf32>
    %117 = vector.broadcast %116 : vector<8x1xf32> to vector<8x8xf32>
    %118 = arith.mulf %115, %117 : vector<8x8xf32>
    %119 = vector.extract_strided_slice %42 {offsets = [24, 0], sizes = [8, 32], strides = [1, 1]} : vector<32x32xf32> to vector<8x32xf32>
    %cst_45 = arith.constant dense<0.000000e+00> : vector<8x32xf32>
    %120 = tpu.matmul %118, %119, %cst_45 {dimension_numbers = #tpu.dot_dimension_numbers<[1], [0], [0], [1], [0, 0, 1, 1], [], []>} : vector<8x8xf32>, vector<8x32xf32>, vector<8x32xf32> -> vector<8x32xf32>
    %121 = arith.addf %101, %120 : vector<8x32xf32>
    %c0_46 = arith.constant 0 : index
    %c0_47 = arith.constant 0 : index
    %122 = vector.load %arg8[%c0_46, %c0_47] : memref<1x32xf32, #tpu.memory_space<vmem>>, vector<1x32xf32>
    %123 = vector.broadcast %122 : vector<1x32xf32> to vector<8x32xf32>
    %124 = arith.addf %121, %123 : vector<8x32xf32>
    %125 = arith.addf %1, %124 : vector<8x32xf32>
    %c0_48 = arith.constant 0 : index
    %c0_49 = arith.constant 0 : index
    %c0_50 = arith.constant 0 : index
    %126 = vector.load %arg9[%c0_48, %c0_49, %c0_50] : memref<1x8x32xf32, #tpu.memory_space<vmem>>, vector<1x8x32xf32>
    %127 = vector.shape_cast %126 : vector<1x8x32xf32> to vector<8x32xf32>
    %128 = vector.shape_cast %125 : vector<8x32xf32> to vector<1x8x32xf32>
    tpu.vector_store %arg9[%c0_48, %c0_49, %c0_50], %128 {strides = array<i32>} : memref<1x8x32xf32, #tpu.memory_space<vmem>>, vector<1x8x32xf32>,
    return
  }
  func.func @transform_0(%arg0: i32) -> (i32, i32, i32) {
    %c0_i32 = arith.constant 0 : i32
    %c0_i32_0 = arith.constant 0 : i32
    %c0_i32_1 = arith.constant 0 : i32
    return %arg0, %c0_i32, %c0_i32_0 : i32, i32, i32
  }
  func.func @transform_1(%arg0: i32) -> (i32, i32, i32) {
    %c0_i32 = arith.constant 0 : i32
    %c0_i32_0 = arith.constant 0 : i32
    %c0_i32_1 = arith.constant 0 : i32
    return %arg0, %c0_i32, %c0_i32_0 : i32, i32, i32
  }
  func.func @transform_2(%arg0: i32) -> (i32, i32) {
    %c0_i32 = arith.constant 0 : i32
    %c0_i32_0 = arith.constant 0 : i32
    %c0_i32_1 = arith.constant 0 : i32
    return %c0_i32, %c0_i32_0 : i32, i32
  }
  func.func @transform_3(%arg0: i32) -> (i32, i32) {
    %c0_i32 = arith.constant 0 : i32
    %c0_i32_0 = arith.constant 0 : i32
    %c0_i32_1 = arith.constant 0 : i32
    return %c0_i32, %c0_i32_0 : i32, i32
  }
  func.func @transform_4(%arg0: i32) -> (i32, i32) {
    %c0_i32 = arith.constant 0 : i32
    %c0_i32_0 = arith.constant 0 : i32
    %c0_i32_1 = arith.constant 0 : i32
    return %c0_i32, %c0_i32_0 : i32, i32
  }
  func.func @transform_5(%arg0: i32) -> (i32, i32) {
    %c0_i32 = arith.constant 0 : i32
    %c0_i32_0 = arith.constant 0 : i32
    %c0_i32_1 = arith.constant 0 : i32
    return %c0_i32, %c0_i32_0 : i32, i32
  }
  func.func @transform_6(%arg0: i32) -> (i32, i32) {
    %c0_i32 = arith.constant 0 : i32
    %c0_i32_0 = arith.constant 0 : i32
    %c0_i32_1 = arith.constant 0 : i32
    return %c0_i32, %c0_i32_0 : i32, i32
  }
  func.func @transform_7(%arg0: i32) -> (i32, i32) {
    %c0_i32 = arith.constant 0 : i32
    %c0_i32_0 = arith.constant 0 : i32
    %c0_i32_1 = arith.constant 0 : i32
    return %c0_i32, %c0_i32_0 : i32, i32
  }
  func.func @transform_8(%arg0: i32) -> (i32, i32, i32) {
    %c0_i32 = arith.constant 0 : i32
    %c0_i32_0 = arith.constant 0 : i32
    %c0_i32_1 = arith.constant 0 : i32
    return %arg0, %c0_i32, %c0_i32_0 : i32, i32, i32
  }
}

module attributes {stable_mosaic.version = 11 : i64} {
  func.func @_layernorm_kernel(%arg0: i32, %arg1: memref<1x8x32xf32, #tpu.memory_space<vmem>>, %arg2: memref<1x32xf32, #tpu.memory_space<vmem>>, %arg3: memref<1x32xf32, #tpu.memory_space<vmem>>, %arg4: memref<1x8x32xf32, #tpu.memory_space<vmem>>) attributes {dimension_semantics = [#tpu.dimension_semantics<parallel>], iteration_bounds = array<i64: 2>, scalar_prefetch = 0 : i64, scratch_operands = 0 : i64, tpu.core_type = #tpu.core_type<tc>, window_params = [{transform_indices = @transform_0, window_bounds = array<i64: 1, 8, 32>}, {pipeline_mode = #tpu.pipeline_mode<synchronous>, transform_indices = @transform_1, window_bounds = array<i64: 1, 32>}, {pipeline_mode = #tpu.pipeline_mode<synchronous>, transform_indices = @transform_2, window_bounds = array<i64: 1, 32>}, {transform_indices = @transform_3, window_bounds = array<i64: 1, 8, 32>}]} {
    %c0 = arith.constant 0 : index
    %c0_0 = arith.constant 0 : index
    %c0_1 = arith.constant 0 : index
    %0 = vector.load %arg1[%c0, %c0_0, %c0_1] : memref<1x8x32xf32, #tpu.memory_space<vmem>>, vector<1x8x32xf32>
    %1 = vector.shape_cast %0 : vector<1x8x32xf32> to vector<8x32xf32>
    %cst = arith.constant dense<0.000000e+00> : vector<8xf32>
    %2 = vector.multi_reduction <add>, %1, %cst [1] : vector<8x32xf32> to vector<8xf32>
    %3 = vector.shape_cast %2 : vector<8xf32> to vector<8x1xf32>
    %cst_2 = arith.constant 3.200000e+01 : f32
    %4 = vector.broadcast %cst_2 : f32 to vector<8x1xf32>
    %5 = arith.divf %3, %4 : vector<8x1xf32>
    %6 = vector.broadcast %5 : vector<8x1xf32> to vector<8x32xf32>
    %7 = arith.subf %1, %6 : vector<8x32xf32>
    %8 = arith.mulf %7, %7 : vector<8x32xf32>
    %cst_3 = arith.constant dense<0.000000e+00> : vector<8xf32>
    %9 = vector.multi_reduction <add>, %8, %cst_3 [1] : vector<8x32xf32> to vector<8xf32>
    %10 = vector.shape_cast %9 : vector<8xf32> to vector<8x1xf32>
    %cst_4 = arith.constant 3.100000e+01 : f32
    %11 = vector.broadcast %cst_4 : f32 to vector<8x1xf32>
    %12 = arith.divf %10, %11 : vector<8x1xf32>
    %13 = math.sqrt %12 : vector<8x1xf32>
    %cst_5 = arith.constant 9.99999997E-7 : f32
    %14 = vector.broadcast %cst_5 : f32 to vector<8x1xf32>
    %15 = arith.addf %13, %14 : vector<8x1xf32>
    %cst_6 = arith.constant 1.000000e+00 : f32
    %16 = vector.broadcast %cst_6 : f32 to vector<8x1xf32>
    %17 = arith.divf %16, %15 : vector<8x1xf32>
    %c0_7 = arith.constant 0 : index
    %c0_8 = arith.constant 0 : index
    %18 = vector.load %arg2[%c0_7, %c0_8] : memref<1x32xf32, #tpu.memory_space<vmem>>, vector<1x32xf32>
    %19 = vector.broadcast %18 : vector<1x32xf32> to vector<8x32xf32>
    %20 = arith.mulf %19, %7 : vector<8x32xf32>
    %21 = vector.broadcast %17 : vector<8x1xf32> to vector<8x32xf32>
    %22 = arith.mulf %20, %21 : vector<8x32xf32>
    %c0_9 = arith.constant 0 : index
    %c0_10 = arith.constant 0 : index
    %23 = vector.load %arg3[%c0_9, %c0_10] : memref<1x32xf32, #tpu.memory_space<vmem>>, vector<1x32xf32>
    %24 = vector.broadcast %23 : vector<1x32xf32> to vector<8x32xf32>
    %25 = arith.addf %22, %24 : vector<8x32xf32>
    %c0_11 = arith.constant 0 : index
    %c0_12 = arith.constant 0 : index
    %c0_13 = arith.constant 0 : index
    %26 = vector.load %arg4[%c0_11, %c0_12, %c0_13] : memref<1x8x32xf32, #tpu.memory_space<vmem>>, vector<1x8x32xf32>
    %27 = vector.shape_cast %26 : vector<1x8x32xf32> to vector<8x32xf32>
    %28 = vector.shape_cast %25 : vector<8x32xf32> to vector<1x8x32xf32>
    tpu.vector_store %arg4[%c0_11, %c0_12, %c0_13], %28 {strides = array<i32>} : memref<1x8x32xf32, #tpu.memory_space<vmem>>, vector<1x8x32xf32>,
    return
  }
  func.func @transform_0(%arg0: i32) -> (i32, i32, i32) {
    %c0_i32 = arith.constant 0 : i32
    %c0_i32_0 = arith.constant 0 : i32
    %c0_i32_1 = arith.constant 0 : i32
    return %arg0, %c0_i32, %c0_i32_0 : i32, i32, i32
  }
  func.func @transform_1(%arg0: i32) -> (i32, i32) {
    %c0_i32 = arith.constant 0 : i32
    %c0_i32_0 = arith.constant 0 : i32
    %c0_i32_1 = arith.constant 0 : i32
    return %c0_i32, %c0_i32_0 : i32, i32
  }
  func.func @transform_2(%arg0: i32) -> (i32, i32) {
    %c0_i32 = arith.constant 0 : i32
    %c0_i32_0 = arith.constant 0 : i32
    %c0_i32_1 = arith.constant 0 : i32
    return %c0_i32, %c0_i32_0 : i32, i32
  }
  func.func @transform_3(%arg0: i32) -> (i32, i32, i32) {
    %c0_i32 = arith.constant 0 : i32
    %c0_i32_0 = arith.constant 0 : i32
    %c0_i32_1 = arith.constant 0 : i32
    return %arg0, %c0_i32, %c0_i32_0 : i32, i32, i32
  }
}

</mosaic_0001>

<llo_original>
// kernel: transformer.15
$region0: #{transformer.15}
  #allocation0 [shape = 'u32[]', space=smem, size = 0x4, offset = 0x4, fixed_abs, tag = 'smem constant byte address 0x4 - core index']
  #allocation1 [shape = 'u32[72,128]{1,0:T(1,128)}', space=vmem, size = 0x9000, scoped, tag = 'internal scratch']
  %s0 = inlined_call_operand.vmem [shape: f32[2,8,32], index: 0, kind: input, shape index: {}]
  %s1 = inlined_call_operand.vmem [shape: f32[1,32], index: 1, kind: input, shape index: {}]
  %s2 = inlined_call_operand.vmem [shape: f32[1,32], index: 2, kind: input, shape index: {}]
  %s3 = inlined_call_operand.vmem [shape: f32[2,8,32], index: 3, kind: output, shape index: {}]
  %s4 = sld [smem:[#allocation0]]
  $region45: #{transformer.15} parent=0
    _
  %s6 = ssub.s32 1, %s4
  %s7 = scalar_select 0, %s6, %s4
  loop: start=0, step=1, limit=4
  $region2: #{transformer.15} parent=0 // loop_pre_header
    _
  $region3: #{transformer.15} parent=0 // loop_header
    %s9 = sphi 0, %s13
    %p10 = scmp.ge.s32.totalorder %s9, 4
    %s19 = sphi 0, %s21
    %s22 = sphi 0, %s19
    %s23 = sphi 0, %s22
    %s39 = sphi 0, %s23
    %s43 = sphi 0, %s43
    %s45 = sphi 0, %s43
    %s46 = sphi 0, %s45
    %s60 = sphi 0, %s46
    %s64 = sphi 0, %s64
    %s66 = sphi 0, %s64
    %s67 = sphi 0, %s66
    %s81 = sphi 0, %s67
    %s87 = sphi 0, %s89
    %s90 = sphi 0, %s87
    %s91 = sphi 0, %s90
    %s107 = sphi 0, %s91
  $region4: #{transformer.15} parent=0 // loop_header_branch
    %12 = sbr.rel (%p10) target = $region8
  $region5: #{transformer.15} parent=0 // loop_body
    %s14 = ssub.s32 %s9, 1
    %s15 = ssub.s32 %s9, 2
    %s16 = sadd.s32 %s9, 1
    %s17 = ssub.s32 %s9, %s16
    %p18 = scmp.eq.s32.totalorder %s17, 0
    %s20 = sadd.s32 %s19, 1
    %s21 = scalar_select %p18, %s19, %s20
    %p24 = pneg %p18
    %p25 = scmp.eq.s32.totalorder %s9, 1
    %p26 = por %p24, %p25
    %p27 = scmp.ne.s32.totalorder %s19, %s22
    %p28 = scmp.eq.s32.totalorder %s9, 0
    %p29 = por %p27, %p28
    %p30 = scmp.ne.s32.totalorder %s19, %s22
    %p31 = scmp.eq.s32.totalorder %s14, 1
    %p32 = por %p30, %p31
    %p33 = scmp.ne.s32.totalorder %s22, %s23
    %p34 = scmp.eq.s32.totalorder %s14, 0
    %p35 = por %p33, %p34
    %p36 = scmp.ne.s32.totalorder %s22, %s23
    %p37 = scmp.eq.s32.totalorder %s15, 1
    %p38 = por %p36, %p37
    %p40 = scmp.ne.s32.totalorder %s23, %s39
    %p41 = scmp.eq.s32.totalorder %s15, 0
    %p42 = por %p40, %p41
    %s44 = sadd.s32 %s43, 1
    %p47 = scmp.eq.s32.totalorder %s9, 1
    %p48 = scmp.ne.s32.totalorder %s43, %s45
    %p49 = scmp.eq.s32.totalorder %s9, 0
    %p50 = por %p48, %p49
    %p51 = scmp.ne.s32.totalorder %s43, %s45
    %p52 = scmp.eq.s32.totalorder %s14, 1
    %p53 = por %p51, %p52
    %p54 = scmp.ne.s32.totalorder %s45, %s46
    %p55 = scmp.eq.s32.totalorder %s14, 0
    %p56 = por %p54, %p55
    %p57 = scmp.ne.s32.totalorder %s45, %s46
    %p58 = scmp.eq.s32.totalorder %s15, 1
    %p59 = por %p57, %p58
    %p61 = scmp.ne.s32.totalorder %s46, %s60
    %p62 = scmp.eq.s32.totalorder %s15, 0
    %p63 = por %p61, %p62
    %s65 = sadd.s32 %s64, 1
    %p68 = scmp.eq.s32.totalorder %s9, 1
    %p69 = scmp.ne.s32.totalorder %s64, %s66
    %p70 = scmp.eq.s32.totalorder %s9, 0
    %p71 = por %p69, %p70
    %p72 = scmp.ne.s32.totalorder %s64, %s66
    %p73 = scmp.eq.s32.totalorder %s14, 1
    %p74 = por %p72, %p73
    %p75 = scmp.ne.s32.totalorder %s66, %s67
    %p76 = scmp.eq.s32.totalorder %s14, 0
    %p77 = por %p75, %p76
    %p78 = scmp.ne.s32.totalorder %s66, %s67
    %p79 = scmp.eq.s32.totalorder %s15, 1
    %p80 = por %p78, %p79
    %p82 = scmp.ne.s32.totalorder %s67, %s81
    %p83 = scmp.eq.s32.totalorder %s15, 0
    %p84 = por %p82, %p83
    %s85 = ssub.s32 %s9, %s16
    %p86 = scmp.eq.s32.totalorder %s85, 0
    %s88 = sadd.s32 %s87, 1
    %s89 = scalar_select %p86, %s87, %s88
    %p92 = pneg %p86
    %p93 = scmp.eq.s32.totalorder %s9, 1
    %p94 = por %p92, %p93
    %p95 = scmp.ne.s32.totalorder %s87, %s90
    %p96 = scmp.eq.s32.totalorder %s9, 0
    %p97 = por %p95, %p96
    %p98 = scmp.ne.s32.totalorder %s87, %s90
    %p99 = scmp.eq.s32.totalorder %s14, 1
    %p100 = por %p98, %p99
    %p101 = scmp.ne.s32.totalorder %s90, %s91
    %p102 = scmp.eq.s32.totalorder %s14, 0
    %p103 = por %p101, %p102
    %p104 = scmp.ne.s32.totalorder %s90, %s91
    %p105 = scmp.eq.s32.totalorder %s15, 1
    %p106 = por %p104, %p105
    %p108 = scmp.ne.s32.totalorder %s91, %s107
    %p109 = scmp.eq.s32.totalorder %s15, 0
    %p110 = por %p108, %p109
    %p111 = scmp.le.s32.totalorder 1, %s9
    %p112 = scmp.lt.s32.totalorder %s9, 3
    %p113 = pnand %p111, %p112
    %p114 = pneg %p113
    // Predicated region
    $region9: #{transformer.15} parent=5 // pred_check
      _
    $region10: #{transformer.15} parent=5 // pred_check_branch
      %116 = sbr.rel (%p113) target = $region12
    $region11: #{transformer.15} parent=5 // pred_region
      %s117 = ssub.s32 %s9, 1
      // Predicated region
      $region13: #{transformer.15} parent=11 // pred_check
        %p118 = pneg %p56
      $region14: #{transformer.15} parent=11 // pred_check_branch
        %120 = sbr.rel (%p118) target = $region16
      $region15: #{transformer.15} parent=11 // pred_region
        _
      $region16: #{transformer.15} parent=11 // pred_fallthru
        _
      // Predicated region
      $region17: #{transformer.15} parent=11 // pred_check
        %p121 = pneg %p77
      $region18: #{transformer.15} parent=11 // pred_check_branch
        %123 = sbr.rel (%p121) target = $region20
      $region19: #{transformer.15} parent=11 // pred_region
        _
      $region20: #{transformer.15} parent=11 // pred_fallthru
        _
    $region12: #{transformer.15} parent=5 // pred_fallthru
      _
    %p124 = scmp.lt.s32.totalorder %s9, 2
    // Predicated region
    $region21: #{transformer.15} parent=5 // pred_check
      %p125 = pneg %p124
    $region22: #{transformer.15} parent=5 // pred_check_branch
      %127 = sbr.rel (%p125) target = $region24
    $region23: #{transformer.15} parent=5 // pred_region
      // Predicated region
      $region25: #{transformer.15} parent=23 // pred_check
        %p128 = pneg %p29
      $region26: #{transformer.15} parent=23 // pred_check_branch
        %130 = sbr.rel (%p128) target = $region28
      $region27: #{transformer.15} parent=23 // pred_region
        %p131 = scmp.lt.s32.totalorder %s9, 1
        %s132 = scalar_select %p131, %s9, 1
        %s133 = smul.addr %s132, 8
        %s134 = scalar_lea.vmem %s0, %s133
      $region28: #{transformer.15} parent=23 // pred_fallthru
        _
    $region24: #{transformer.15} parent=5 // pred_fallthru
      _
    %p135 = scmp.le.s32.totalorder 1, %s9
    %p136 = scmp.lt.s32.totalorder %s9, 3
    %p137 = pnand %p135, %p136
    %p138 = pneg %p137
    // Predicated region
    $region29: #{transformer.15} parent=5 // pred_check
      _
    $region30: #{transformer.15} parent=5 // pred_check_branch
      %140 = sbr.rel (%p137) target = $region32
    $region31: #{transformer.15} parent=5 // pred_region
      %s141 = ssub.s32 %s9, 1
      %p142 = scmp.lt.s32.totalorder %s14, 1
      %s143 = scalar_select %p142, %s14, 1
      %s144 = smul.addr %s143, 8
      %s145 = scalar_lea.vmem %s0, %s144
      %p146 = pneg %p35
      %p147 = pneg %p32
      %p148 = pneg %p56
      %p149 = pneg %p53
      %p150 = pneg %p77
      %p151 = pneg %p74
      %p152 = pneg %p103
      %p153 = pneg %p100
      %p154 = scmp.lt.s32.totalorder %s14, 1
      %s155 = scalar_select %p154, %s14, 1
      %s156 = smul.addr %s155, 8
      %s157 = scalar_lea.vmem %s3, %s156
      %p158 = scmp.lt.s32.totalorder %s14, 1
      %s159 = scalar_select %p158, %s14, 1
      %s160 = smul.addr %s159, 8
      %s161 = scalar_lea.vmem %s0, %s160
      %p162 = scmp.lt.s32.totalorder %s14, 1
      %s163 = scalar_select %p162, %s14, 1
      %s164 = smul.addr %s163, 8
      %s165 = scalar_lea.vmem %s3, %s164
      %v166 = vld [vmem:[%s161] sm:$0xff]
      %vm167 = vcmask 261120
      %v168 = vsel %vm167, %v166, 0.0
      %169 = vadd.xlane.f32.xlu0 %v168
      %v170 = vpop.xlane.xlu0 %169
      %v171 = vrcp.pop 32.0
      %v172 = vmul.f32 32.0, %v171
      %v173 = vsub.f32 1.0, %v172
      %v174 = vmul.f32 %v171, %v173
      %v175 = vadd.f32 %v171, %v174
      %vm176 = vweird.f32 %v171
      %v177 = vsel %vm176, %v171, %v175
      %v178 = vmul.f32 %v170, %v177
      %v179 = vsub.f32 %v166, %v178
      %v180 = vmul.f32 %v179, %v179
      %v181 = vsel %vm167, %v180, 0.0
      %182 = vadd.xlane.f32.xlu0 %v181
      %v183 = vpop.xlane.xlu0 %182
      %v184 = vrcp.pop 31.0
      %v185 = vmul.f32 31.0, %v184
      %v186 = vsub.f32 1.0, %v185
      %v187 = vmul.f32 %v184, %v186
      %v188 = vadd.f32 %v184, %v187
      %vm189 = vweird.f32 %v184
      %v190 = vsel %vm189, %v184, %v188
      %v191 = vmul.f32 %v183, %v190
      %v192 = vrsqrt.pop %v191
      %v193 = vmul.f32 %v192, %v191
      %v194 = vmul.f32 %v193, %v192
      %v195 = vmul.f32 0.5, %v194
      %v196 = vsub.f32 1.5, %v195
      %v197 = vmul.f32 %v192, %v196
      %v198 = vmul.f32 %v191, %v197
      %vm199 = vcmp.eq.f32.partialorder %v191, inf
      %v200 = vsel %vm199, %v191, %v198
      %vm201 = vcmp.eq.f32.partialorder %v191, 0.0
      %v202 = vand.u32 %v191, 2147483648
      %v203 = vsel %vm201, %v202, %v200
      %v204 = vadd.f32 %v203, 1e-06
      %v205 = vrcp.pop %v204
      %v206 = vmul.f32 %v204, %v205
      %v207 = vsub.f32 1.0, %v206
      %v208 = vmul.f32 %v205, %v207
      %v209 = vadd.f32 %v205, %v208
      %vm210 = vweird.f32 %v204
      %vm211 = vweird.f32 %v205
      %vm212 = vmor %vm210, %vm211
      %v213 = vsel %vm212, %v205, %v209
      %v214 = vand.u32 2147483647, %v204
      %vm215 = vcmp.eq.f32.partialorder %v214, 8.507059e+37
      %v216 = vand.u32 %v204, 2147483648
      %v217 = vor.u32 1.1754944e-38, %v216
      %v218 = vsel %vm215, %v217, %v213
      %v219 = vmul.f32 1.0, %v218
      %v220 = vld [vmem:[%s1] sm:$0x1]
      %v222 = vperm.slane %v220, 0
      %v224 = vmul.f32 %v222, %v179
      %v225 = vmul.f32 %v224, %v219
      %v226 = vld [vmem:[%s2] sm:$0x1]
      %v228 = vperm.slane %v226, 0
      %v230 = vadd.f32 %v225, %v228
      %231 = vst.msk [vmem:[%s165] sm:$0xff] %vm167, %v230
      %p232 = scmp.lt.s32.totalorder %s14, 1
      %s233 = scalar_select %p232, %s14, 1
      %s234 = smul.addr %s233, 8
      %s235 = scalar_lea.vmem %s3, %s234
      // Predicated region
      $region33: #{transformer.15} parent=31 // pred_check
        %p236 = pneg %p100
      $region34: #{transformer.15} parent=31 // pred_check_branch
        %238 = sbr.rel (%p236) target = $region36
      $region35: #{transformer.15} parent=31 // pred_region
        _
      $region36: #{transformer.15} parent=31 // pred_fallthru
        _
    $region32: #{transformer.15} parent=5 // pred_fallthru
      _
    %p239 = scmp.le.s32.totalorder 2, %s9
    // Predicated region
    $region37: #{transformer.15} parent=5 // pred_check
      %p240 = pneg %p239
    $region38: #{transformer.15} parent=5 // pred_check_branch
      %242 = sbr.rel (%p240) target = $region40
    $region39: #{transformer.15} parent=5 // pred_region
      %s243 = ssub.s32 %s9, 2
      // Predicated region
      $region41: #{transformer.15} parent=39 // pred_check
        %p244 = pneg %p106
      $region42: #{transformer.15} parent=39 // pred_check_branch
        %246 = sbr.rel (%p244) target = $region44
      $region43: #{transformer.15} parent=39 // pred_region
        %p247 = scmp.lt.s32.totalorder %s15, 1
        %s248 = scalar_select %p247, %s15, 1
        %s249 = smul.addr %s248, 8
        %s250 = scalar_lea.vmem %s3, %s249
      $region44: #{transformer.15} parent=39 // pred_fallthru
        _
    $region40: #{transformer.15} parent=5 // pred_fallthru
      _
  $region6: #{transformer.15} parent=0 // loop_footer
    %s13 = sadd.s32 1, %s9
  $region7: #{transformer.15} parent=0 // loop_footer_branch
    %8 = sbr.rel target = $region3
  $region8: #{transformer.15} parent=0 // loop_exit
    _

// kernel: transformer.14
$region0: #{transformer.14}
  #allocation0 [shape = 'u32[]', space=smem, size = 0x4, offset = 0x4, fixed_abs, tag = 'smem constant byte address 0x4 - core index']
  #allocation1 [shape = 'u32[72,128]{1,0:T(1,128)}', space=vmem, size = 0x9000, scoped, tag = 'internal scratch']
  %s0 = inlined_call_operand.vmem [shape: f32[2,8,32], index: 0, kind: input, shape index: {}, may-alias: {0,1}]
  %s1 = inlined_call_operand.vmem [shape: f32[2,8,32], index: 1, kind: input, shape index: {}, may-alias: {0,1}]
  %s2 = inlined_call_operand.vmem [shape: f32[1,32], index: 2, kind: input, shape index: {}]
  %s3 = inlined_call_operand.vmem [shape: f32[1,32], index: 3, kind: input, shape index: {}]
  %s4 = inlined_call_operand.hbm [shape: f32[32,64], index: 4, kind: input, shape index: {}]
  %s5 = inlined_call_operand.vmem [shape: f32[1,64], index: 5, kind: input, shape index: {}]
  %s6 = inlined_call_operand.hbm [shape: f32[64,32], index: 6, kind: input, shape index: {}]
  %s7 = inlined_call_operand.vmem [shape: f32[1,32], index: 7, kind: input, shape index: {}]
  %s8 = inlined_call_operand.vmem [shape: f32[2,8,32], index: 8, kind: output, shape index: {}]
  %s9 = sld [smem:[#allocation0]]
  $region73: #{transformer.14} parent=0
    _
  %s11 = ssub.s32 1, %s9
  %s12 = scalar_select 0, %s11, %s9
  $region1: #{transformer.14} parent=0
    #allocation2 [shape = 'u8[16384]{0}', space=vmem, size = 0x4000, scoped, tag = 'input window, operand 4, single buffered']
    #allocation3 [shape = 's32[2]{0}', space=sflag, size = 0x8, scoped, tag = 'scoped memory for transformer.14']
    #allocation4 [shape = 'u8[32768]{0}', space=vmem, size = 0x8000, scoped, tag = 'input window, operand 6, single buffered']
    #allocation5 [shape = 's32[1]{0}', space=sflag, size = 0x4, scoped, tag = 'scoped memory for transformer.14']
    %13 = vsyncpa [#allocation3], 0
    %14 = vsyncpa [#allocation5], 0
    loop: start=0, step=1, limit=4
    $region2: #{transformer.14} parent=1 // loop_pre_header
      _
    $region3: #{transformer.14} parent=1 // loop_header
      %s16 = sphi 0, %s20
      %p17 = scmp.ge.s32.totalorder %s16, 4
      %s26 = sphi 0, %s28
      %s29 = sphi 0, %s26
      %s30 = sphi 0, %s29
      %s46 = sphi 0, %s30
      %s50 = sphi 0, %s50
      %s52 = sphi 0, %s50
      %s53 = sphi 0, %s52
      %s67 = sphi 0, %s53
      %s71 = sphi 0, %s71
      %s73 = sphi 0, %s71
      %s74 = sphi 0, %s73
      %s88 = sphi 0, %s74
      %s92 = sphi 0, %s92
      %s94 = sphi 0, %s92
      %s95 = sphi 0, %s94
      %s109 = sphi 0, %s95
      %s113 = sphi 0, %s113
      %s115 = sphi 0, %s113
      %s116 = sphi 0, %s115
      %s130 = sphi 0, %s116
      %s134 = sphi 0, %s134
      %s136 = sphi 0, %s134
      %s137 = sphi 0, %s136
      %s151 = sphi 0, %s137
      %s155 = sphi 0, %s155
      %s157 = sphi 0, %s155
      %s158 = sphi 0, %s157
      %s172 = sphi 0, %s158
      %s176 = sphi 0, %s176
      %s178 = sphi 0, %s176
      %s179 = sphi 0, %s178
      %s193 = sphi 0, %s179
      %s199 = sphi 0, %s201
      %s202 = sphi 0, %s199
      %s203 = sphi 0, %s202
      %s219 = sphi 0, %s203
    $region4: #{transformer.14} parent=1 // loop_header_branch
      %19 = sbr.rel (%p17) target = $region8
    $region5: #{transformer.14} parent=1 // loop_body
      %s21 = ssub.s32 %s16, 1
      %s22 = ssub.s32 %s16, 2
      %s23 = sadd.s32 %s16, 1
      %s24 = ssub.s32 %s16, %s23
      %p25 = scmp.eq.s32.totalorder %s24, 0
      %s27 = sadd.s32 %s26, 1
      %s28 = scalar_select %p25, %s26, %s27
      %p31 = pneg %p25
      %p32 = scmp.eq.s32.totalorder %s16, 1
      %p33 = por %p31, %p32
      %p34 = scmp.ne.s32.totalorder %s26, %s29
      %p35 = scmp.eq.s32.totalorder %s16, 0
      %p36 = por %p34, %p35
      %p37 = scmp.ne.s32.totalorder %s26, %s29
      %p38 = scmp.eq.s32.totalorder %s21, 1
      %p39 = por %p37, %p38
      %p40 = scmp.ne.s32.totalorder %s29, %s30
      %p41 = scmp.eq.s32.totalorder %s21, 0
      %p42 = por %p40, %p41
      %p43 = scmp.ne.s32.totalorder %s29, %s30
      %p44 = scmp.eq.s32.totalorder %s22, 1
      %p45 = por %p43, %p44
      %p47 = scmp.ne.s32.totalorder %s30, %s46
      %p48 = scmp.eq.s32.totalorder %s22, 0
      %p49 = por %p47, %p48
      %s51 = sadd.s32 %s50, 1
      %p54 = scmp.eq.s32.totalorder %s16, 1
      %p55 = scmp.ne.s32.totalorder %s50, %s52
      %p56 = scmp.eq.s32.totalorder %s16, 0
      %p57 = por %p55, %p56
      %p58 = scmp.ne.s32.totalorder %s50, %s52
      %p59 = scmp.eq.s32.totalorder %s21, 1
      %p60 = por %p58, %p59
      %p61 = scmp.ne.s32.totalorder %s52, %s53
      %p62 = scmp.eq.s32.totalorder %s21, 0
      %p63 = por %p61, %p62
      %p64 = scmp.ne.s32.totalorder %s52, %s53
      %p65 = scmp.eq.s32.totalorder %s22, 1
      %p66 = por %p64, %p65
      %p68 = scmp.ne.s32.totalorder %s53, %s67
      %p69 = scmp.eq.s32.totalorder %s22, 0
      %p70 = por %p68, %p69
      %s72 = sadd.s32 %s71, 1
      %p75 = scmp.eq.s32.totalorder %s16, 1
      %p76 = scmp.ne.s32.totalorder %s71, %s73
      %p77 = scmp.eq.s32.totalorder %s16, 0
      %p78 = por %p76, %p77
      %p79 = scmp.ne.s32.totalorder %s71, %s73
      %p80 = scmp.eq.s32.totalorder %s21, 1
      %p81 = por %p79, %p80
      %p82 = scmp.ne.s32.totalorder %s73, %s74
      %p83 = scmp.eq.s32.totalorder %s21, 0
      %p84 = por %p82, %p83
      %p85 = scmp.ne.s32.totalorder %s73, %s74
      %p86 = scmp.eq.s32.totalorder %s22, 1
      %p87 = por %p85, %p86
      %p89 = scmp.ne.s32.totalorder %s74, %s88
      %p90 = scmp.eq.s32.totalorder %s22, 0
      %p91 = por %p89, %p90
      %s93 = sadd.s32 %s92, 1
      %p96 = scmp.eq.s32.totalorder %s16, 1
      %p97 = scmp.ne.s32.totalorder %s92, %s94
      %p98 = scmp.eq.s32.totalorder %s16, 0
      %p99 = por %p97, %p98
      %p100 = scmp.ne.s32.totalorder %s92, %s94
      %p101 = scmp.eq.s32.totalorder %s21, 1
      %p102 = por %p100, %p101
      %p103 = scmp.ne.s32.totalorder %s94, %s95
      %p104 = scmp.eq.s32.totalorder %s21, 0
      %p105 = por %p103, %p104
      %p106 = scmp.ne.s32.totalorder %s94, %s95
      %p107 = scmp.eq.s32.totalorder %s22, 1
      %p108 = por %p106, %p107
      %p110 = scmp.ne.s32.totalorder %s95, %s109
      %p111 = scmp.eq.s32.totalorder %s22, 0
      %p112 = por %p110, %p111
      %s114 = sadd.s32 %s113, 1
      %p117 = scmp.eq.s32.totalorder %s16, 1
      %p118 = scmp.ne.s32.totalorder %s113, %s115
      %p119 = scmp.eq.s32.totalorder %s16, 0
      %p120 = por %p118, %p119
      %p121 = scmp.ne.s32.totalorder %s113, %s115
      %p122 = scmp.eq.s32.totalorder %s21, 1
      %p123 = por %p121, %p122
      %p124 = scmp.ne.s32.totalorder %s115, %s116
      %p125 = scmp.eq.s32.totalorder %s21, 0
      %p126 = por %p124, %p125
      %p127 = scmp.ne.s32.totalorder %s115, %s116
      %p128 = scmp.eq.s32.totalorder %s22, 1
      %p129 = por %p127, %p128
      %p131 = scmp.ne.s32.totalorder %s116, %s130
      %p132 = scmp.eq.s32.totalorder %s22, 0
      %p133 = por %p131, %p132
      %s135 = sadd.s32 %s134, 1
      %p138 = scmp.eq.s32.totalorder %s16, 1
      %p139 = scmp.ne.s32.totalorder %s134, %s136
      %p140 = scmp.eq.s32.totalorder %s16, 0
      %p141 = por %p139, %p140
      %p142 = scmp.ne.s32.totalorder %s134, %s136
      %p143 = scmp.eq.s32.totalorder %s21, 1
      %p144 = por %p142, %p143
      %p145 = scmp.ne.s32.totalorder %s136, %s137
      %p146 = scmp.eq.s32.totalorder %s21, 0
      %p147 = por %p145, %p146
      %p148 = scmp.ne.s32.totalorder %s136, %s137
      %p149 = scmp.eq.s32.totalorder %s22, 1
      %p150 = por %p148, %p149
      %p152 = scmp.ne.s32.totalorder %s137, %s151
      %p153 = scmp.eq.s32.totalorder %s22, 0
      %p154 = por %p152, %p153
      %s156 = sadd.s32 %s155, 1
      %p159 = scmp.eq.s32.totalorder %s16, 1
      %p160 = scmp.ne.s32.totalorder %s155, %s157
      %p161 = scmp.eq.s32.totalorder %s16, 0
      %p162 = por %p160, %p161
      %p163 = scmp.ne.s32.totalorder %s155, %s157
      %p164 = scmp.eq.s32.totalorder %s21, 1
      %p165 = por %p163, %p164
      %p166 = scmp.ne.s32.totalorder %s157, %s158
      %p167 = scmp.eq.s32.totalorder %s21, 0
      %p168 = por %p166, %p167
      %p169 = scmp.ne.s32.totalorder %s157, %s158
      %p170 = scmp.eq.s32.totalorder %s22, 1
      %p171 = por %p169, %p170
      %p173 = scmp.ne.s32.totalorder %s158, %s172
      %p174 = scmp.eq.s32.totalorder %s22, 0
      %p175 = por %p173, %p174
      %s177 = sadd.s32 %s176, 1
      %p180 = scmp.eq.s32.totalorder %s16, 1
      %p181 = scmp.ne.s32.totalorder %s176, %s178
      %p182 = scmp.eq.s32.totalorder %s16, 0
      %p183 = por %p181, %p182
      %p184 = scmp.ne.s32.totalorder %s176, %s178
      %p185 = scmp.eq.s32.totalorder %s21, 1
      %p186 = por %p184, %p185
      %p187 = scmp.ne.s32.totalorder %s178, %s179
      %p188 = scmp.eq.s32.totalorder %s21, 0
      %p189 = por %p187, %p188
      %p190 = scmp.ne.s32.totalorder %s178, %s179
      %p191 = scmp.eq.s32.totalorder %s22, 1
      %p192 = por %p190, %p191
      %p194 = scmp.ne.s32.totalorder %s179, %s193
      %p195 = scmp.eq.s32.totalorder %s22, 0
      %p196 = por %p194, %p195
      %s197 = ssub.s32 %s16, %s23
      %p198 = scmp.eq.s32.totalorder %s197, 0
      %s200 = sadd.s32 %s199, 1
      %s201 = scalar_select %p198, %s199, %s200
      %p204 = pneg %p198
      %p205 = scmp.eq.s32.totalorder %s16, 1
      %p206 = por %p204, %p205
      %p207 = scmp.ne.s32.totalorder %s199, %s202
      %p208 = scmp.eq.s32.totalorder %s16, 0
      %p209 = por %p207, %p208
      %p210 = scmp.ne.s32.totalorder %s199, %s202
      %p211 = scmp.eq.s32.totalorder %s21, 1
      %p212 = por %p210, %p211
      %p213 = scmp.ne.s32.totalorder %s202, %s203
      %p214 = scmp.eq.s32.totalorder %s21, 0
      %p215 = por %p213, %p214
      %p216 = scmp.ne.s32.totalorder %s202, %s203
      %p217 = scmp.eq.s32.totalorder %s22, 1
      %p218 = por %p216, %p217
      %p220 = scmp.ne.s32.totalorder %s203, %s219
      %p221 = scmp.eq.s32.totalorder %s22, 0
      %p222 = por %p220, %p221
      %p223 = scmp.le.s32.totalorder 1, %s16
      %p224 = scmp.lt.s32.totalorder %s16, 3
      %p225 = pnand %p223, %p224
      %p226 = pneg %p225
      // Predicated region
      $region9: #{transformer.14} parent=5 // pred_check
        _
      $region10: #{transformer.14} parent=5 // pred_check_branch
        %228 = sbr.rel (%p225) target = $region12
      $region11: #{transformer.14} parent=5 // pred_region
        %s229 = ssub.s32 %s16, 1
        // Predicated region
        $region13: #{transformer.14} parent=11 // pred_check
          %p230 = pneg %p63
        $region14: #{transformer.14} parent=11 // pred_check_branch
          %232 = sbr.rel (%p230) target = $region16
        $region15: #{transformer.14} parent=11 // pred_region
          _
        $region16: #{transformer.14} parent=11 // pred_fallthru
          _
        // Predicated region
        $region17: #{transformer.14} parent=11 // pred_check
          %p233 = pneg %p84
        $region18: #{transformer.14} parent=11 // pred_check_branch
          %235 = sbr.rel (%p233) target = $region20
        $region19: #{transformer.14} parent=11 // pred_region
          _
        $region20: #{transformer.14} parent=11 // pred_fallthru
          _
        // Predicated region
        $region21: #{transformer.14} parent=11 // pred_check
          %p236 = pneg %p105
        $region22: #{transformer.14} parent=11 // pred_check_branch
          %238 = sbr.rel (%p236) target = $region24
        $region23: #{transformer.14} parent=11 // pred_region
          _
        $region24: #{transformer.14} parent=11 // pred_fallthru
          _
        // Predicated region
        $region25: #{transformer.14} parent=11 // pred_check
          %p239 = pneg %p126
        $region26: #{transformer.14} parent=11 // pred_check_branch
          %241 = sbr.rel (%p239) target = $region28
        $region27: #{transformer.14} parent=11 // pred_region
          %243 = vsyncadd [#allocation3], 0
          %s244 = sshll.u32 %s4, 4
          %s245 = int_to_ptr.hbm [resolvable:$true] %s244
          %s246 = sshll.u32 [#allocation2], 4
          %s247 = int_to_ptr.vmem [resolvable:$true] %s246
          %252 = dma.hbm_to_vmem [thread:$0]  %s245, 512, %s247, [#allocation3], 128, 128, 8
        $region28: #{transformer.14} parent=11 // pred_fallthru
          _
        // Predicated region
        $region29: #{transformer.14} parent=11 // pred_check
          %p253 = pneg %p147
        $region30: #{transformer.14} parent=11 // pred_check_branch
          %255 = sbr.rel (%p253) target = $region32
        $region31: #{transformer.14} parent=11 // pred_region
          _
        $region32: #{transformer.14} parent=11 // pred_fallthru
          _
        // Predicated region
        $region33: #{transformer.14} parent=11 // pred_check
          %p256 = pneg %p168
        $region34: #{transformer.14} parent=11 // pred_check_branch
          %258 = sbr.rel (%p256) target = $region36
        $region35: #{transformer.14} parent=11 // pred_region
          %260 = vsyncadd [#allocation5], 0
          %s261 = sshll.u32 %s6, 4
          %s262 = int_to_ptr.hbm [resolvable:$true] %s261
          %s263 = sshll.u32 [#allocation4], 4
          %s264 = int_to_ptr.vmem [resolvable:$true] %s263
          %269 = dma.hbm_to_vmem [thread:$0]  %s262, 1024, %s264, [#allocation5], 128, 128, 8
        $region36: #{transformer.14} parent=11 // pred_fallthru
          _
        // Predicated region
        $region37: #{transformer.14} parent=11 // pred_check
          %p270 = pneg %p189
        $region38: #{transformer.14} parent=11 // pred_check_branch
          %272 = sbr.rel (%p270) target = $region40
        $region39: #{transformer.14} parent=11 // pred_region
          _
        $region40: #{transformer.14} parent=11 // pred_fallthru
          _
      $region12: #{transformer.14} parent=5 // pred_fallthru
        _
      %p273 = scmp.lt.s32.totalorder %s16, 2
      // Predicated region
      $region41: #{transformer.14} parent=5 // pred_check
        %p274 = pneg %p273
      $region42: #{transformer.14} parent=5 // pred_check_branch
        %276 = sbr.rel (%p274) target = $region44
      $region43: #{transformer.14} parent=5 // pred_region
        // Predicated region
        $region45: #{transformer.14} parent=43 // pred_check
          %p277 = pneg %p36
        $region46: #{transformer.14} parent=43 // pred_check_branch
          %279 = sbr.rel (%p277) target = $region48
        $region47: #{transformer.14} parent=43 // pred_region
          %p280 = scmp.lt.s32.totalorder %s16, 1
          %s281 = scalar_select %p280, %s16, 1
          %s282 = smul.addr %s281, 8
          %s283 = scalar_lea.vmem %s0, %s282
        $region48: #{transformer.14} parent=43 // pred_fallthru
          _
      $region44: #{transformer.14} parent=5 // pred_fallthru
        _
      %p284 = scmp.le.s32.totalorder 1, %s16
      %p285 = scmp.lt.s32.totalorder %s16, 3
      %p286 = pnand %p284, %p285
      %p287 = pneg %p286
      // Predicated region
      $region49: #{transformer.14} parent=5 // pred_check
        _
      $region50: #{transformer.14} parent=5 // pred_check_branch
        %289 = sbr.rel (%p286) target = $region52
      $region51: #{transformer.14} parent=5 // pred_region
        %s290 = ssub.s32 %s16, 1
        // Predicated region
        $region53: #{transformer.14} parent=51 // pred_check
          %p291 = pneg %p126
        $region54: #{transformer.14} parent=51 // pred_check_branch
          %293 = sbr.rel (%p291) target = $region56
        $region55: #{transformer.14} parent=51 // pred_region
          %295 = dma.done [#allocation3], 512
        $region56: #{transformer.14} parent=51 // pred_fallthru
          _
        // Predicated region
        $region57: #{transformer.14} parent=51 // pred_check
          %p296 = pneg %p168
        $region58: #{transformer.14} parent=51 // pred_check_branch
          %298 = sbr.rel (%p296) target = $region60
        $region59: #{transformer.14} parent=51 // pred_region
          %300 = dma.done [#allocation5], 1024
        $region60: #{transformer.14} parent=51 // pred_fallthru
          _
        %p301 = scmp.lt.s32.totalorder %s21, 1
        %s302 = scalar_select %p301, %s21, 1
        %s303 = smul.addr %s302, 8
        %s304 = scalar_lea.vmem %s0, %s303
        %p305 = pneg %p42
        %p306 = pneg %p39
        %p307 = pneg %p63
        %p308 = pneg %p60
        %p309 = pneg %p84
        %p310 = pneg %p81
        %p311 = pneg %p105
        %p312 = pneg %p102
        %p313 = pneg %p126
        %p314 = pneg %p123
        %p315 = pneg %p147
        %p316 = pneg %p144
        %p317 = pneg %p168
        %p318 = pneg %p165
        %p319 = pneg %p189
        %p320 = pneg %p186
        %p321 = pneg %p215
        %p322 = pneg %p212
        %p323 = scmp.lt.s32.totalorder %s21, 1
        %s324 = scalar_select %p323, %s21, 1
        %s325 = smul.addr %s324, 8
        %s326 = scalar_lea.vmem %s8, %s325
        %p327 = scmp.lt.s32.totalorder %s21, 1
        %s328 = scalar_select %p327, %s21, 1
        %s329 = smul.addr %s328, 8
        %s330 = scalar_lea.vmem %s0, %s329
        %p331 = scmp.lt.s32.totalorder %s21, 1
        %s332 = scalar_select %p331, %s21, 1
        %s333 = smul.addr %s332, 8
        %s334 = scalar_lea.vmem %s8, %s333
        %v335 = vld [vmem:[%s1] sm:$0xff]
        %vm336 = vcmask 261120
        %v337 = vsel %vm336, %v335, 0.0
        %338 = vadd.xlane.f32.xlu0 %v337
        %v339 = vpop.xlane.xlu0 %338
        %v340 = vrcp.pop 32.0
        %v341 = vmul.f32 32.0, %v340
        %v342 = vsub.f32 1.0, %v341
        %v343 = vmul.f32 %v340, %v342
        %v344 = vadd.f32 %v340, %v343
        %vm345 = vweird.f32 %v340
        %v346 = vsel %vm345, %v340, %v344
        %v347 = vmul.f32 %v339, %v346
        %v348 = vsub.f32 %v335, %v347
        %v349 = vmul.f32 %v348, %v348
        %v350 = vsel %vm336, %v349, 0.0
        %351 = vadd.xlane.f32.xlu0 %v350
        %v352 = vpop.xlane.xlu0 %351
        %v353 = vrcp.pop 31.0
        %v354 = vmul.f32 31.0, %v353
        %v355 = vsub.f32 1.0, %v354
        %v356 = vmul.f32 %v353, %v355
        %v357 = vadd.f32 %v353, %v356
        %vm358 = vweird.f32 %v353
        %v359 = vsel %vm358, %v353, %v357
        %v360 = vmul.f32 %v352, %v359
        %v361 = vrsqrt.pop %v360
        %v362 = vmul.f32 %v361, %v360
        %v363 = vmul.f32 %v362, %v361
        %v364 = vmul.f32 0.5, %v363
        %v365 = vsub.f32 1.5, %v364
        %v366 = vmul.f32 %v361, %v365
        %v367 = vmul.f32 %v360, %v366
        %vm368 = vcmp.eq.f32.partialorder %v360, inf
        %v369 = vsel %vm368, %v360, %v367
        %vm370 = vcmp.eq.f32.partialorder %v360, 0.0
        %v371 = vand.u32 %v360, 2147483648
        %v372 = vsel %vm370, %v371, %v369
        %v373 = vadd.f32 %v372, 1e-06
        %v374 = vrcp.pop %v373
        %v375 = vmul.f32 %v373, %v374
        %v376 = vsub.f32 1.0, %v375
        %v377 = vmul.f32 %v374, %v376
        %v378 = vadd.f32 %v374, %v377
        %vm379 = vweird.f32 %v373
        %vm380 = vweird.f32 %v374
        %vm381 = vmor %vm379, %vm380
        %v382 = vsel %vm381, %v374, %v378
        %v383 = vand.u32 2147483647, %v373
        %vm384 = vcmp.eq.f32.partialorder %v383, 8.507059e+37
        %v385 = vand.u32 %v373, 2147483648
        %v386 = vor.u32 1.1754944e-38, %v385
        %v387 = vsel %vm384, %v386, %v382
        %v388 = vmul.f32 1.0, %v387
        %v389 = vld [vmem:[%s2] sm:$0x1]
        %v391 = vperm.slane %v389, 0
        %v393 = vmul.f32 %v391, %v348
        %v394 = vmul.f32 %v393, %v388
        %v395 = vld [vmem:[%s3] sm:$0x1]
        %v397 = vperm.slane %v395, 0
        %v399 = vadd.f32 %v394, %v397
        %v400 = vld [vmem:[#allocation2] sm:$0xff]
        %v401 = vld [vmem:[#allocation2 + $0x8] sm:$0xff]
        %v402 = vld [vmem:[#allocation2 + $0x10] sm:$0xff]
        %v403 = vld [vmem:[#allocation2 + $0x18] sm:$0xff]
        %v404 = vld [vmem:[%s5] sm:$0x1]
        %v406 = vperm.slane %v404, 0
        %v409 = vsel %vm336, %v399, 0
        %411 = vmatpush.msra.mxu0 0.0
        %412 = vmatpush.msra.mxu0 0.0
        %413 = vmatpush.msra.mxu0 0.0
        %414 = vmatpush.msra.mxu0 0.0
        %415 = vmatpush.msra.mxu0 0.0
        %416 = vmatpush.msra.mxu0 0.0
        %417 = vmatpush.msra.mxu0 0.0
        %418 = vmatpush.msra.mxu0 0.0
        %419 = vmatpush.msra.mxu0 0.0
        %420 = vmatpush.msra.mxu0 0.0
        %421 = vmatpush.msra.mxu0 0.0
        %422 = vmatpush.msra.mxu0 0.0
        %423 = vmatpush.msra.mxu0 %v403
        %424 = vmatpush.msra.mxu0 %v402
        %425 = vmatpush.msra.mxu0 %v401
        %426 = vmatpush.msra.mxu0 %v400
        %427 = vmatmul.f32.gmra.mxu0 %v409
        %v428 = vpop.f32.mrf.mxu0
        %v429 = vadd.f32 %v406, %v428
        %430 = vdwg.mxu0
        %v431 = vmax.f32 %v429, 0.0
        %v432 = vld [vmem:[#allocation4] sm:$0xff]
        %v433 = vld [vmem:[#allocation4 + $0x8] sm:$0xff]
        %v434 = vld [vmem:[#allocation4 + $0x10] sm:$0xff]
        %v435 = vld [vmem:[#allocation4 + $0x18] sm:$0xff]
        %v436 = vld [vmem:[#allocation4 + $0x20] sm:$0xff]
        %v437 = vld [vmem:[#allocation4 + $0x28] sm:$0xff]
        %v438 = vld [vmem:[#allocation4 + $0x30] sm:$0xff]
        %v439 = vld [vmem:[#allocation4 + $0x38] sm:$0xff]
        %v440 = vld [vmem:[%s7] sm:$0x1]
        %v442 = vperm.slane %v440, 0
        %vm444 = vcmask 523264
        %v446 = vsel %vm444, %v431, 0
        %448 = vmatpush.msra.mxu0 0.0
        %449 = vmatpush.msra.mxu0 0.0
        %450 = vmatpush.msra.mxu0 0.0
        %451 = vmatpush.msra.mxu0 0.0
        %452 = vmatpush.msra.mxu0 0.0
        %453 = vmatpush.msra.mxu0 0.0
        %454 = vmatpush.msra.mxu0 0.0
        %455 = vmatpush.msra.mxu0 0.0
        %456 = vmatpush.msra.mxu0 %v439
        %457 = vmatpush.msra.mxu0 %v438
        %458 = vmatpush.msra.mxu0 %v437
        %459 = vmatpush.msra.mxu0 %v436
        %460 = vmatpush.msra.mxu0 %v435
        %461 = vmatpush.msra.mxu0 %v434
        %462 = vmatpush.msra.mxu0 %v433
        %463 = vmatpush.msra.mxu0 %v432
        %464 = vmatmul.f32.gmra.mxu0 %v446
        %v465 = vpop.f32.mrf.mxu0
        %v466 = vadd.f32 %v442, %v465
        %467 = vdwg.mxu0
        %v468 = vld [vmem:[%s330] sm:$0xff]
        %v469 = vadd.f32 %v468, %v466
        %470 = vst.msk [vmem:[%s334] sm:$0xff] %vm336, %v469
        %p471 = scmp.lt.s32.totalorder %s21, 1
        %s472 = scalar_select %p471, %s21, 1
        %s473 = smul.addr %s472, 8
        %s474 = scalar_lea.vmem %s8, %s473
        // Predicated region
        $region61: #{transformer.14} parent=51 // pred_check
          %p475 = pneg %p212
        $region62: #{transformer.14} parent=51 // pred_check_branch
          %477 = sbr.rel (%p475) target = $region64
        $region63: #{transformer.14} parent=51 // pred_region
          _
        $region64: #{transformer.14} parent=51 // pred_fallthru
          _
      $region52: #{transformer.14} parent=5 // pred_fallthru
        _
      %p478 = scmp.le.s32.totalorder 2, %s16
      // Predicated region
      $region65: #{transformer.14} parent=5 // pred_check
        %p479 = pneg %p478
      $region66: #{transformer.14} parent=5 // pred_check_branch
        %481 = sbr.rel (%p479) target = $region68
      $region67: #{transformer.14} parent=5 // pred_region
        %s482 = ssub.s32 %s16, 2
        // Predicated region
        $region69: #{transformer.14} parent=67 // pred_check
          %p483 = pneg %p218
        $region70: #{transformer.14} parent=67 // pred_check_branch
          %485 = sbr.rel (%p483) target = $region72
        $region71: #{transformer.14} parent=67 // pred_region
          %p486 = scmp.lt.s32.totalorder %s22, 1
          %s487 = scalar_select %p486, %s22, 1
          %s488 = smul.addr %s487, 8
          %s489 = scalar_lea.vmem %s8, %s488
        $region72: #{transformer.14} parent=67 // pred_fallthru
          _
      $region68: #{transformer.14} parent=5 // pred_fallthru
        _
    $region6: #{transformer.14} parent=1 // loop_footer
      %s20 = sadd.s32 1, %s16
    $region7: #{transformer.14} parent=1 // loop_footer_branch
      %15 = sbr.rel target = $region3
    $region8: #{transformer.14} parent=1 // loop_exit
      _
    %490 = vsyncpa [#allocation3], 1
    %s491 = scalar_lea.sflag [#allocation3], 1
    %492 = vsyncpa %s491, 1
    %493 = vsyncpa [#allocation5], 1

// kernel: transformer.19
$region0: #{transformer.19}
  #allocation0 [shape = 'u32[]', space=smem, size = 0x4, offset = 0x4, fixed_abs, tag = 'smem constant byte address 0x4 - core index']
  #allocation1 [shape = 'u32[72,128]{1,0:T(1,128)}', space=vmem, size = 0x9000, scoped, tag = 'internal scratch']
  %s0 = inlined_call_operand.hbm [shape: f32[2,8,32], index: 0, kind: input, shape index: {}]
  %s1 = inlined_call_operand.vmem [shape: f32[1,32], index: 1, kind: input, shape index: {}]
  %s2 = inlined_call_operand.vmem [shape: f32[1,32], index: 2, kind: input, shape index: {}]
  %s3 = inlined_call_operand.hbm [shape: f32[32,96], index: 3, kind: input, shape index: {}]
  %s4 = inlined_call_operand.vmem [shape: f32[1,96], index: 4, kind: input, shape index: {}]
  %s5 = inlined_call_operand.hbm [shape: f32[32,32], index: 5, kind: input, shape index: {}]
  %s6 = inlined_call_operand.vmem [shape: f32[1,32], index: 6, kind: input, shape index: {}]
  %s7 = inlined_call_operand.vmem [shape: f32[2,8,32], index: 7, kind: output, shape index: {}]
  %s8 = sld [smem:[#allocation0]]
  $region73: #{transformer.19} parent=0
    _
  %s10 = ssub.s32 1, %s8
  %s11 = scalar_select 0, %s10, %s8
  $region1: #{transformer.19} parent=0
    #allocation2 [shape = 'u8[8192]{0}', space=vmem, size = 0x2000, scoped, tag = 'input window, operand 0']
    #allocation3 [shape = 's32[2]{0}', space=sflag, size = 0x8, scoped, tag = 'scoped memory for transformer.19']
    #allocation4 [shape = 'u8[16384]{0}', space=vmem, size = 0x4000, scoped, tag = 'input window, operand 3, single buffered']
    #allocation5 [shape = 's32[1]{0}', space=sflag, size = 0x4, scoped, tag = 'scoped memory for transformer.19']
    #allocation6 [shape = 'u8[16384]{0}', space=vmem, size = 0x4000, scoped, tag = 'input window, operand 5, single buffered']
    %12 = vsyncpa [#allocation3], 0
    %s13 = scalar_lea.sflag [#allocation3], 1
    %14 = vsyncpa %s13, 0
    %15 = vsyncpa [#allocation5], 0
    loop: start=0, step=1, limit=4
    $region2: #{transformer.19} parent=1 // loop_pre_header
      _
    $region3: #{transformer.19} parent=1 // loop_header
      %s17 = sphi 0, %s21
      %p18 = scmp.ge.s32.totalorder %s17, 4
      %s27 = sphi 0, %s29
      %s30 = sphi 0, %s27
      %s31 = sphi 0, %s30
      %s47 = sphi 0, %s31
      %s51 = sphi 0, %s51
      %s53 = sphi 0, %s51
      %s54 = sphi 0, %s53
      %s68 = sphi 0, %s54
      %s72 = sphi 0, %s72
      %s74 = sphi 0, %s72
      %s75 = sphi 0, %s74
      %s89 = sphi 0, %s75
      %s93 = sphi 0, %s93
      %s95 = sphi 0, %s93
      %s96 = sphi 0, %s95
      %s110 = sphi 0, %s96
      %s114 = sphi 0, %s114
      %s116 = sphi 0, %s114
      %s117 = sphi 0, %s116
      %s131 = sphi 0, %s117
      %s135 = sphi 0, %s135
      %s137 = sphi 0, %s135
      %s138 = sphi 0, %s137
      %s152 = sphi 0, %s138
      %s156 = sphi 0, %s156
      %s158 = sphi 0, %s156
      %s159 = sphi 0, %s158
      %s173 = sphi 0, %s159
      %s179 = sphi 0, %s181
      %s182 = sphi 0, %s179
      %s183 = sphi 0, %s182
      %s199 = sphi 0, %s183
    $region4: #{transformer.19} parent=1 // loop_header_branch
      %20 = sbr.rel (%p18) target = $region8
    $region5: #{transformer.19} parent=1 // loop_body
      %s22 = ssub.s32 %s17, 1
      %s23 = ssub.s32 %s17, 2
      %s24 = sadd.s32 %s17, 1
      %s25 = ssub.s32 %s17, %s24
      %p26 = scmp.eq.s32.totalorder %s25, 0
      %s28 = sadd.s32 %s27, 1
      %s29 = scalar_select %p26, %s27, %s28
      %p32 = pneg %p26
      %p33 = scmp.eq.s32.totalorder %s17, 1
      %p34 = por %p32, %p33
      %p35 = scmp.ne.s32.totalorder %s27, %s30
      %p36 = scmp.eq.s32.totalorder %s17, 0
      %p37 = por %p35, %p36
      %p38 = scmp.ne.s32.totalorder %s27, %s30
      %p39 = scmp.eq.s32.totalorder %s22, 1
      %p40 = por %p38, %p39
      %p41 = scmp.ne.s32.totalorder %s30, %s31
      %p42 = scmp.eq.s32.totalorder %s22, 0
      %p43 = por %p41, %p42
      %p44 = scmp.ne.s32.totalorder %s30, %s31
      %p45 = scmp.eq.s32.totalorder %s23, 1
      %p46 = por %p44, %p45
      %p48 = scmp.ne.s32.totalorder %s31, %s47
      %p49 = scmp.eq.s32.totalorder %s23, 0
      %p50 = por %p48, %p49
      %s52 = sadd.s32 %s51, 1
      %p55 = scmp.eq.s32.totalorder %s17, 1
      %p56 = scmp.ne.s32.totalorder %s51, %s53
      %p57 = scmp.eq.s32.totalorder %s17, 0
      %p58 = por %p56, %p57
      %p59 = scmp.ne.s32.totalorder %s51, %s53
      %p60 = scmp.eq.s32.totalorder %s22, 1
      %p61 = por %p59, %p60
      %p62 = scmp.ne.s32.totalorder %s53, %s54
      %p63 = scmp.eq.s32.totalorder %s22, 0
      %p64 = por %p62, %p63
      %p65 = scmp.ne.s32.totalorder %s53, %s54
      %p66 = scmp.eq.s32.totalorder %s23, 1
      %p67 = por %p65, %p66
      %p69 = scmp.ne.s32.totalorder %s54, %s68
      %p70 = scmp.eq.s32.totalorder %s23, 0
      %p71 = por %p69, %p70
      %s73 = sadd.s32 %s72, 1
      %p76 = scmp.eq.s32.totalorder %s17, 1
      %p77 = scmp.ne.s32.totalorder %s72, %s74
      %p78 = scmp.eq.s32.totalorder %s17, 0
      %p79 = por %p77, %p78
      %p80 = scmp.ne.s32.totalorder %s72, %s74
      %p81 = scmp.eq.s32.totalorder %s22, 1
      %p82 = por %p80, %p81
      %p83 = scmp.ne.s32.totalorder %s74, %s75
      %p84 = scmp.eq.s32.totalorder %s22, 0
      %p85 = por %p83, %p84
      %p86 = scmp.ne.s32.totalorder %s74, %s75
      %p87 = scmp.eq.s32.totalorder %s23, 1
      %p88 = por %p86, %p87
      %p90 = scmp.ne.s32.totalorder %s75, %s89
      %p91 = scmp.eq.s32.totalorder %s23, 0
      %p92 = por %p90, %p91
      %s94 = sadd.s32 %s93, 1
      %p97 = scmp.eq.s32.totalorder %s17, 1
      %p98 = scmp.ne.s32.totalorder %s93, %s95
      %p99 = scmp.eq.s32.totalorder %s17, 0
      %p100 = por %p98, %p99
      %p101 = scmp.ne.s32.totalorder %s93, %s95
      %p102 = scmp.eq.s32.totalorder %s22, 1
      %p103 = por %p101, %p102
      %p104 = scmp.ne.s32.totalorder %s95, %s96
      %p105 = scmp.eq.s32.totalorder %s22, 0
      %p106 = por %p104, %p105
      %p107 = scmp.ne.s32.totalorder %s95, %s96
      %p108 = scmp.eq.s32.totalorder %s23, 1
      %p109 = por %p107, %p108
      %p111 = scmp.ne.s32.totalorder %s96, %s110
      %p112 = scmp.eq.s32.totalorder %s23, 0
      %p113 = por %p111, %p112
      %s115 = sadd.s32 %s114, 1
      %p118 = scmp.eq.s32.totalorder %s17, 1
      %p119 = scmp.ne.s32.totalorder %s114, %s116
      %p120 = scmp.eq.s32.totalorder %s17, 0
      %p121 = por %p119, %p120
      %p122 = scmp.ne.s32.totalorder %s114, %s116
      %p123 = scmp.eq.s32.totalorder %s22, 1
      %p124 = por %p122, %p123
      %p125 = scmp.ne.s32.totalorder %s116, %s117
      %p126 = scmp.eq.s32.totalorder %s22, 0
      %p127 = por %p125, %p126
      %p128 = scmp.ne.s32.totalorder %s116, %s117
      %p129 = scmp.eq.s32.totalorder %s23, 1
      %p130 = por %p128, %p129
      %p132 = scmp.ne.s32.totalorder %s117, %s131
      %p133 = scmp.eq.s32.totalorder %s23, 0
      %p134 = por %p132, %p133
      %s136 = sadd.s32 %s135, 1
      %p139 = scmp.eq.s32.totalorder %s17, 1
      %p140 = scmp.ne.s32.totalorder %s135, %s137
      %p141 = scmp.eq.s32.totalorder %s17, 0
      %p142 = por %p140, %p141
      %p143 = scmp.ne.s32.totalorder %s135, %s137
      %p144 = scmp.eq.s32.totalorder %s22, 1
      %p145 = por %p143, %p144
      %p146 = scmp.ne.s32.totalorder %s137, %s138
      %p147 = scmp.eq.s32.totalorder %s22, 0
      %p148 = por %p146, %p147
      %p149 = scmp.ne.s32.totalorder %s137, %s138
      %p150 = scmp.eq.s32.totalorder %s23, 1
      %p151 = por %p149, %p150
      %p153 = scmp.ne.s32.totalorder %s138, %s152
      %p154 = scmp.eq.s32.totalorder %s23, 0
      %p155 = por %p153, %p154
      %s157 = sadd.s32 %s156, 1
      %p160 = scmp.eq.s32.totalorder %s17, 1
      %p161 = scmp.ne.s32.totalorder %s156, %s158
      %p162 = scmp.eq.s32.totalorder %s17, 0
      %p163 = por %p161, %p162
      %p164 = scmp.ne.s32.totalorder %s156, %s158
      %p165 = scmp.eq.s32.totalorder %s22, 1
      %p166 = por %p164, %p165
      %p167 = scmp.ne.s32.totalorder %s158, %s159
      %p168 = scmp.eq.s32.totalorder %s22, 0
      %p169 = por %p167, %p168
      %p170 = scmp.ne.s32.totalorder %s158, %s159
      %p171 = scmp.eq.s32.totalorder %s23, 1
      %p172 = por %p170, %p171
      %p174 = scmp.ne.s32.totalorder %s159, %s173
      %p175 = scmp.eq.s32.totalorder %s23, 0
      %p176 = por %p174, %p175
      %s177 = ssub.s32 %s17, %s24
      %p178 = scmp.eq.s32.totalorder %s177, 0
      %s180 = sadd.s32 %s179, 1
      %s181 = scalar_select %p178, %s179, %s180
      %p184 = pneg %p178
      %p185 = scmp.eq.s32.totalorder %s17, 1
      %p186 = por %p184, %p185
      %p187 = scmp.ne.s32.totalorder %s179, %s182
      %p188 = scmp.eq.s32.totalorder %s17, 0
      %p189 = por %p187, %p188
      %p190 = scmp.ne.s32.totalorder %s179, %s182
      %p191 = scmp.eq.s32.totalorder %s22, 1
      %p192 = por %p190, %p191
      %p193 = scmp.ne.s32.totalorder %s182, %s183
      %p194 = scmp.eq.s32.totalorder %s22, 0
      %p195 = por %p193, %p194
      %p196 = scmp.ne.s32.totalorder %s182, %s183
      %p197 = scmp.eq.s32.totalorder %s23, 1
      %p198 = por %p196, %p197
      %p200 = scmp.ne.s32.totalorder %s183, %s199
      %p201 = scmp.eq.s32.totalorder %s23, 0
      %p202 = por %p200, %p201
      %p203 = scmp.le.s32.totalorder 1, %s17
      %p204 = scmp.lt.s32.totalorder %s17, 3
      %p205 = pnand %p203, %p204
      %p206 = pneg %p205
      // Predicated region
      $region9: #{transformer.19} parent=5 // pred_check
        _
      $region10: #{transformer.19} parent=5 // pred_check_branch
        %208 = sbr.rel (%p205) target = $region12
      $region11: #{transformer.19} parent=5 // pred_region
        %s209 = ssub.s32 %s17, 1
        // Predicated region
        $region13: #{transformer.19} parent=11 // pred_check
          %p210 = pneg %p64
        $region14: #{transformer.19} parent=11 // pred_check_branch
          %212 = sbr.rel (%p210) target = $region16
        $region15: #{transformer.19} parent=11 // pred_region
          _
        $region16: #{transformer.19} parent=11 // pred_fallthru
          _
        // Predicated region
        $region17: #{transformer.19} parent=11 // pred_check
          %p213 = pneg %p85
        $region18: #{transformer.19} parent=11 // pred_check_branch
          %215 = sbr.rel (%p213) target = $region20
        $region19: #{transformer.19} parent=11 // pred_region
          _
        $region20: #{transformer.19} parent=11 // pred_fallthru
          _
        // Predicated region
        $region21: #{transformer.19} parent=11 // pred_check
          %p216 = pneg %p106
        $region22: #{transformer.19} parent=11 // pred_check_branch
          %218 = sbr.rel (%p216) target = $region24
        $region23: #{transformer.19} parent=11 // pred_region
          %220 = vsyncadd [#allocation5], 0
          %s221 = sshll.u32 %s3, 4
          %s222 = int_to_ptr.hbm [resolvable:$true] %s221
          %s223 = sshll.u32 [#allocation4], 4
          %s224 = int_to_ptr.vmem [resolvable:$true] %s223
          %229 = dma.hbm_to_vmem [thread:$0]  %s222, 512, %s224, [#allocation5], 128, 128, 8
        $region24: #{transformer.19} parent=11 // pred_fallthru
          _
        // Predicated region
        $region25: #{transformer.19} parent=11 // pred_check
          %p230 = pneg %p127
        $region26: #{transformer.19} parent=11 // pred_check_branch
          %232 = sbr.rel (%p230) target = $region28
        $region27: #{transformer.19} parent=11 // pred_region
          _
        $region28: #{transformer.19} parent=11 // pred_fallthru
          _
        // Predicated region
        $region29: #{transformer.19} parent=11 // pred_check
          %p233 = pneg %p148
        $region30: #{transformer.19} parent=11 // pred_check_branch
          %235 = sbr.rel (%p233) target = $region32
        $region31: #{transformer.19} parent=11 // pred_region
          %237 = vsyncadd [#allocation5], 0
          %s238 = sshll.u32 %s5, 4
          %s239 = int_to_ptr.hbm [resolvable:$true] %s238
          %s240 = sshll.u32 [#allocation6], 4
          %s241 = int_to_ptr.vmem [resolvable:$true] %s240
          %246 = dma.hbm_to_vmem [thread:$0]  %s239, 512, %s241, [#allocation5], 128, 128, 8
        $region32: #{transformer.19} parent=11 // pred_fallthru
          _
        // Predicated region
        $region33: #{transformer.19} parent=11 // pred_check
          %p247 = pneg %p169
        $region34: #{transformer.19} parent=11 // pred_check_branch
          %249 = sbr.rel (%p247) target = $region36
        $region35: #{transformer.19} parent=11 // pred_region
          _
        $region36: #{transformer.19} parent=11 // pred_fallthru
          _
      $region12: #{transformer.19} parent=5 // pred_fallthru
        _
      %p250 = scmp.lt.s32.totalorder %s17, 2
      // Predicated region
      $region37: #{transformer.19} parent=5 // pred_check
        %p251 = pneg %p250
      $region38: #{transformer.19} parent=5 // pred_check_branch
        %253 = sbr.rel (%p251) target = $region40
      $region39: #{transformer.19} parent=5 // pred_region
        // Predicated region
        $region41: #{transformer.19} parent=39 // pred_check
          %p254 = pneg %p37
        $region42: #{transformer.19} parent=39 // pred_check_branch
          %256 = sbr.rel (%p254) target = $region44
        $region43: #{transformer.19} parent=39 // pred_region
          %s257 = sand.u32 %s27, 1
          %s258 = scalar_lea.sflag [#allocation3], %s257
          %s259 = sand.u32 %s27, 1
          %s260 = smul.addr %s259, 8
          %s261 = scalar_lea.vmem [#allocation2], %s260
          %263 = vsyncadd %s258, 0
          %s264 = smul.addr %s17, 8
          %s265 = scalar_lea.hbm %s0, %s264
          %s267 = sshll.u32 %s265, 4
          %s268 = int_to_ptr.hbm [resolvable:$true] %s267
          %s269 = sshll.u32 %s261, 4
          %s270 = int_to_ptr.vmem [resolvable:$true] %s269
          %272 = dma.hbm_to_vmem [thread:$0]  %s268, 128, %s270, %s258
        $region44: #{transformer.19} parent=39 // pred_fallthru
          _
      $region40: #{transformer.19} parent=5 // pred_fallthru
        _
      %p273 = scmp.le.s32.totalorder 1, %s17
      %p274 = scmp.lt.s32.totalorder %s17, 3
      %p275 = pnand %p273, %p274
      %p276 = pneg %p275
      // Predicated region
      $region45: #{transformer.19} parent=5 // pred_check
        _
      $region46: #{transformer.19} parent=5 // pred_check_branch
        %278 = sbr.rel (%p275) target = $region48
      $region47: #{transformer.19} parent=5 // pred_region
        %s279 = ssub.s32 %s17, 1
        %s280 = sand.u32 %s30, 1
        %s281 = scalar_lea.sflag [#allocation3], %s280
        %s282 = sand.u32 %s30, 1
        %s283 = smul.addr %s282, 8
        %s284 = scalar_lea.vmem [#allocation2], %s283
        // Predicated region
        $region49: #{transformer.19} parent=47 // pred_check
          %p285 = pneg %p43
        $region50: #{transformer.19} parent=47 // pred_check_branch
          %287 = sbr.rel (%p285) target = $region52
        $region51: #{transformer.19} parent=47 // pred_region
          %289 = dma.done %s281, 128
        $region52: #{transformer.19} parent=47 // pred_fallthru
          _
        // Predicated region
        $region53: #{transformer.19} parent=47 // pred_check
          %p290 = pneg %p106
        $region54: #{transformer.19} parent=47 // pred_check_branch
          %292 = sbr.rel (%p290) target = $region56
        $region55: #{transformer.19} parent=47 // pred_region
          %294 = dma.done [#allocation5], 512
        $region56: #{transformer.19} parent=47 // pred_fallthru
          _
        // Predicated region
        $region57: #{transformer.19} parent=47 // pred_check
          %p295 = pneg %p148
        $region58: #{transformer.19} parent=47 // pred_check_branch
          %297 = sbr.rel (%p295) target = $region60
        $region59: #{transformer.19} parent=47 // pred_region
          %299 = dma.done [#allocation5], 512
        $region60: #{transformer.19} parent=47 // pred_fallthru
          _
        %s300 = sand.u32 %s30, 1
        %s301 = scalar_lea.sflag [#allocation3], %s300
        %s302 = sand.u32 %s30, 1
        %s303 = smul.addr %s302, 8
        %s304 = scalar_lea.vmem [#allocation2], %s303
        %p305 = pneg %p43
        %p306 = pneg %p40
        %p307 = pneg %p64
        %p308 = pneg %p61
        %p309 = pneg %p85
        %p310 = pneg %p82
        %p311 = pneg %p106
        %p312 = pneg %p103
        %p313 = pneg %p127
        %p314 = pneg %p124
        %p315 = pneg %p148
        %p316 = pneg %p145
        %p317 = pneg %p169
        %p318 = pneg %p166
        %p319 = pneg %p195
        %p320 = pneg %p192
        %p321 = scmp.lt.s32.totalorder %s22, 1
        %s322 = scalar_select %p321, %s22, 1
        %s323 = smul.addr %s322, 8
        %s324 = scalar_lea.vmem %s7, %s323
        %p325 = scmp.lt.s32.totalorder %s22, 1
        %s326 = scalar_select %p325, %s22, 1
        %s327 = smul.addr %s326, 8
        %s328 = scalar_lea.vmem %s7, %s327
        %v329 = vld [vmem:[%s284] sm:$0xff]
        %vm330 = vcmask 261120
        %v331 = vsel %vm330, %v329, 0.0
        %332 = vadd.xlane.f32.xlu0 %v331
        %v333 = vpop.xlane.xlu0 %332
        %v334 = vrcp.pop 32.0
        %v335 = vmul.f32 32.0, %v334
        %v336 = vsub.f32 1.0, %v335
        %v337 = vmul.f32 %v334, %v336
        %v338 = vadd.f32 %v334, %v337
        %vm339 = vweird.f32 %v334
        %v340 = vsel %vm339, %v334, %v338
        %v341 = vmul.f32 %v333, %v340
        %v342 = vsub.f32 %v329, %v341
        %v343 = vmul.f32 %v342, %v342
        %v344 = vsel %vm330, %v343, 0.0
        %345 = vadd.xlane.f32.xlu0 %v344
        %v346 = vpop.xlane.xlu0 %345
        %v347 = vrcp.pop 31.0
        %v348 = vmul.f32 31.0, %v347
        %v349 = vsub.f32 1.0, %v348
        %v350 = vmul.f32 %v347, %v349
        %v351 = vadd.f32 %v347, %v350
        %vm352 = vweird.f32 %v347
        %v353 = vsel %vm352, %v347, %v351
        %v354 = vmul.f32 %v346, %v353
        %v355 = vrsqrt.pop %v354
        %v356 = vmul.f32 %v355, %v354
        %v357 = vmul.f32 %v356, %v355
        %v358 = vmul.f32 0.5, %v357
        %v359 = vsub.f32 1.5, %v358
        %v360 = vmul.f32 %v355, %v359
        %v361 = vmul.f32 %v354, %v360
        %vm362 = vcmp.eq.f32.partialorder %v354, inf
        %v363 = vsel %vm362, %v354, %v361
        %vm364 = vcmp.eq.f32.partialorder %v354, 0.0
        %v365 = vand.u32 %v354, 2147483648
        %v366 = vsel %vm364, %v365, %v363
        %v367 = vadd.f32 %v366, 1e-06
        %v368 = vrcp.pop %v367
        %v369 = vmul.f32 %v367, %v368
        %v370 = vsub.f32 1.0, %v369
        %v371 = vmul.f32 %v368, %v370
        %v372 = vadd.f32 %v368, %v371
        %vm373 = vweird.f32 %v367
        %vm374 = vweird.f32 %v368
        %vm375 = vmor %vm373, %vm374
        %v376 = vsel %vm375, %v368, %v372
        %v377 = vand.u32 2147483647, %v367
        %vm378 = vcmp.eq.f32.partialorder %v377, 8.507059e+37
        %v379 = vand.u32 %v367, 2147483648
        %v380 = vor.u32 1.1754944e-38, %v379
        %v381 = vsel %vm378, %v380, %v376
        %v382 = vmul.f32 1.0, %v381
        %v383 = vld [vmem:[%s1] sm:$0x1]
        %v385 = vperm.slane %v383, 0
        %v387 = vmul.f32 %v385, %v342
        %v388 = vmul.f32 %v387, %v382
        %v389 = vld [vmem:[%s2] sm:$0x1]
        %v391 = vperm.slane %v389, 0
        %v393 = vadd.f32 %v388, %v391
        %v394 = vld [vmem:[#allocation4] sm:$0xff]
        %v395 = vld [vmem:[#allocation4 + $0x8] sm:$0xff]
        %v396 = vld [vmem:[#allocation4 + $0x10] sm:$0xff]
        %v397 = vld [vmem:[#allocation4 + $0x18] sm:$0xff]
        %v398 = vld [vmem:[%s4] sm:$0x1]
        %v400 = vperm.slane %v398, 0
        %v403 = vsel %vm330, %v393, 0
        %405 = vmatpush.msra.mxu0 0.0
        %406 = vmatpush.msra.mxu0 0.0
        %407 = vmatpush.msra.mxu0 0.0
        %408 = vmatpush.msra.mxu0 0.0
        %409 = vmatpush.msra.mxu0 0.0
        %410 = vmatpush.msra.mxu0 0.0
        %411 = vmatpush.msra.mxu0 0.0
        %412 = vmatpush.msra.mxu0 0.0
        %413 = vmatpush.msra.mxu0 0.0
        %414 = vmatpush.msra.mxu0 0.0
        %415 = vmatpush.msra.mxu0 0.0
        %416 = vmatpush.msra.mxu0 0.0
        %417 = vmatpush.msra.mxu0 %v397
        %418 = vmatpush.msra.mxu0 %v396
        %419 = vmatpush.msra.mxu0 %v395
        %420 = vmatpush.msra.mxu0 %v394
        %421 = vmatmul.f32.gmra.mxu0 %v403
        %v422 = vpop.f32.mrf.mxu0
        %v423 = vadd.f32 %v400, %v422
        %424 = vdwg.mxu0
        %v425 = vld [vmem:[#allocation6] sm:$0xff]
        %v426 = vld [vmem:[#allocation6 + $0x8] sm:$0xff]
        %v427 = vld [vmem:[#allocation6 + $0x10] sm:$0xff]
        %v428 = vld [vmem:[#allocation6 + $0x18] sm:$0xff]
        %430 = vrot.lane.b32.xlu0 %v423, 96
        %v431 = vpop.permute.xlu0 %430
        %vm432 = vcmask 64512
        %v433 = vsel %vm432, %v423, 0
        %v435 = vsel %vm432, %v431, 0
        %437 = vmatpush.xpose.msra.mxu0 0.0
        %438 = vmatpush.xpose.msra.mxu0 0.0
        %439 = vmatpush.xpose.msra.mxu0 0.0
        %440 = vmatpush.xpose.msra.mxu0 0.0
        %441 = vmatpush.xpose.msra.mxu0 0.0
        %442 = vmatpush.xpose.msra.mxu0 0.0
        %443 = vmatpush.xpose.msra.mxu0 0.0
        %444 = vmatpush.xpose.msra.mxu0 0.0
        %445 = vmatpush.xpose.msra.mxu0 0.0
        %446 = vmatpush.xpose.msra.mxu0 0.0
        %447 = vmatpush.xpose.msra.mxu0 0.0
        %448 = vmatpush.xpose.msra.mxu0 0.0
        %449 = vmatpush.xpose.msra.mxu0 0.0
        %450 = vmatpush.xpose.msra.mxu0 0.0
        %451 = vmatpush.xpose.msra.mxu0 0.0
        %452 = vmatpush.xpose.msra.mxu0 %v435
        %453 = vmatmul.f32.gmra.mxu0 %v433
        %v454 = vpop.f32.mrf.mxu0
        %v455 = vadd.f32 0.0, %v454
        %456 = vdwg.mxu0
        %v457 = vmul.f32 %v455, 0.35355338
        %v458 = vsel %vm432, %v457, -inf
        %459 = vmax.xlane.f32.xlu0 %v458
        %v460 = vpop.xlane.xlu0 %459
        %v461 = vsub.f32 %v457, %v460
        %v462 = vmul.f32 %v461, 1.442695
        %v463 = vpow.pop %v462
        %v464 = vsel %vm432, %v463, 0.0
        %465 = vadd.xlane.f32.xlu0 %v464
        %v466 = vpop.xlane.xlu0 %465
        %467 = vrot.lane.b32.xlu0 %v423, 64
        %v468 = vpop.permute.xlu0 %467
        %v471 = vsel %vm432, %v463, 0
        %473 = vmatpush.msra.mxu0 0.0
        %474 = vmatpush.msra.mxu0 0.0
        %475 = vmatpush.msra.mxu0 0.0
        %476 = vmatpush.msra.mxu0 0.0
        %477 = vmatpush.msra.mxu0 0.0
        %478 = vmatpush.msra.mxu0 0.0
        %479 = vmatpush.msra.mxu0 0.0
        %480 = vmatpush.msra.mxu0 0.0
        %481 = vmatpush.msra.mxu0 0.0
        %482 = vmatpush.msra.mxu0 0.0
        %483 = vmatpush.msra.mxu0 0.0
        %484 = vmatpush.msra.mxu0 0.0
        %485 = vmatpush.msra.mxu0 0.0
        %486 = vmatpush.msra.mxu0 0.0
        %487 = vmatpush.msra.mxu0 0.0
        %488 = vmatpush.msra.mxu0 %v468
        %489 = vmatmul.f32.gmra.mxu0 %v471
        %v490 = vpop.f32.mrf.mxu0
        %v491 = vadd.f32 0.0, %v490
        %492 = vdwg.mxu0
        %v493 = vrcp.pop %v466
        %v494 = vmul.f32 %v491, %v493
        %495 = vrot.lane.b32.xlu0 %v423, 120
        %v496 = vpop.permute.xlu0 %495
        %497 = vrot.lane.b32.xlu0 %v423, 88
        %v498 = vpop.permute.xlu0 %497
        %v499 = vsel %vm432, %v496, 0
        %v501 = vsel %vm432, %v498, 0
        %503 = vmatpush.xpose.msra.mxu0 0.0
        %504 = vmatpush.xpose.msra.mxu0 0.0
        %505 = vmatpush.xpose.msra.mxu0 0.0
        %506 = vmatpush.xpose.msra.mxu0 0.0
        %507 = vmatpush.xpose.msra.mxu0 0.0
        %508 = vmatpush.xpose.msra.mxu0 0.0
        %509 = vmatpush.xpose.msra.mxu0 0.0
        %510 = vmatpush.xpose.msra.mxu0 0.0
        %511 = vmatpush.xpose.msra.mxu0 0.0
        %512 = vmatpush.xpose.msra.mxu0 0.0
        %513 = vmatpush.xpose.msra.mxu0 0.0
        %514 = vmatpush.xpose.msra.mxu0 0.0
        %515 = vmatpush.xpose.msra.mxu0 0.0
        %516 = vmatpush.xpose.msra.mxu0 0.0
        %517 = vmatpush.xpose.msra.mxu0 0.0
        %518 = vmatpush.xpose.msra.mxu0 %v501
        %519 = vmatmul.f32.gmra.mxu0 %v499
        %v520 = vpop.f32.mrf.mxu0
        %v521 = vadd.f32 0.0, %v520
        %522 = vdwg.mxu0
        %v523 = vmul.f32 %v521, 0.35355338
        %v524 = vsel %vm432, %v523, -inf
        %525 = vmax.xlane.f32.xlu0 %v524
        %v526 = vpop.xlane.xlu0 %525
        %v527 = vsub.f32 %v523, %v526
        %v528 = vmul.f32 %v527, 1.442695
        %v529 = vpow.pop %v528
        %v530 = vsel %vm432, %v529, 0.0
        %531 = vadd.xlane.f32.xlu0 %v530
        %v532 = vpop.xlane.xlu0 %531
        %533 = vrot.lane.b32.xlu0 %v423, 56
        %v534 = vpop.permute.xlu0 %533
        %v537 = vsel %vm432, %v529, 0
        %539 = vmatpush.msra.mxu0 0.0
        %540 = vmatpush.msra.mxu0 0.0
        %541 = vmatpush.msra.mxu0 0.0
        %542 = vmatpush.msra.mxu0 0.0
        %543 = vmatpush.msra.mxu0 0.0
        %544 = vmatpush.msra.mxu0 0.0
        %545 = vmatpush.msra.mxu0 0.0
        %546 = vmatpush.msra.mxu0 0.0
        %547 = vmatpush.msra.mxu0 0.0
        %548 = vmatpush.msra.mxu0 0.0
        %549 = vmatpush.msra.mxu0 0.0
        %550 = vmatpush.msra.mxu0 0.0
        %551 = vmatpush.msra.mxu0 0.0
        %552 = vmatpush.msra.mxu0 0.0
        %553 = vmatpush.msra.mxu0 0.0
        %554 = vmatpush.msra.mxu0 %v534
        %555 = vmatmul.f32.gmra.mxu0 %v537
        %v556 = vpop.f32.mrf.mxu0
        %v557 = vadd.f32 0.0, %v556
        %558 = vdwg.mxu0
        %v559 = vrcp.pop %v532
        %v560 = vmul.f32 %v557, %v559
        %v562 = vsel %vm432, %v560, 0
        %564 = vmatpush.msra.mxu0 0.0
        %565 = vmatpush.msra.mxu0 0.0
        %566 = vmatpush.msra.mxu0 0.0
        %567 = vmatpush.msra.mxu0 0.0
        %568 = vmatpush.msra.mxu0 0.0
        %569 = vmatpush.msra.mxu0 0.0
        %570 = vmatpush.msra.mxu0 0.0
        %571 = vmatpush.msra.mxu0 0.0
        %572 = vmatpush.msra.mxu0 0.0
        %573 = vmatpush.msra.mxu0 0.0
        %574 = vmatpush.msra.mxu0 0.0
        %575 = vmatpush.msra.mxu0 0.0
        %576 = vmatpush.msra.mxu0 0.0
        %577 = vmatpush.msra.mxu0 0.0
        %578 = vmatpush.msra.mxu0 0.0
        %579 = vmatpush.msra.mxu0 %v426
        %580 = vmatmul.f32.gmra.mxu0 %v562
        %v581 = vpop.f32.mrf.mxu0
        %v582 = vadd.f32 0.0, %v581
        %583 = vdwg.mxu0
        %v585 = vsel %vm432, %v494, 0
        %587 = vmatpush.msra.mxu0 0.0
        %588 = vmatpush.msra.mxu0 0.0
        %589 = vmatpush.msra.mxu0 0.0
        %590 = vmatpush.msra.mxu0 0.0
        %591 = vmatpush.msra.mxu0 0.0
        %592 = vmatpush.msra.mxu0 0.0
        %593 = vmatpush.msra.mxu0 0.0
        %594 = vmatpush.msra.mxu0 0.0
        %595 = vmatpush.msra.mxu0 0.0
        %596 = vmatpush.msra.mxu0 0.0
        %597 = vmatpush.msra.mxu0 0.0
        %598 = vmatpush.msra.mxu0 0.0
        %599 = vmatpush.msra.mxu0 0.0
        %600 = vmatpush.msra.mxu0 0.0
        %601 = vmatpush.msra.mxu0 0.0
        %602 = vmatpush.msra.mxu0 %v425
        %603 = vmatmul.f32.gmra.mxu0 %v585
        %v604 = vpop.f32.mrf.mxu0
        %v605 = vadd.f32 %v582, %v604
        %606 = vdwg.mxu0
        %607 = vrot.lane.b32.xlu0 %v423, 112
        %v608 = vpop.permute.xlu0 %607
        %609 = vrot.lane.b32.xlu0 %v423, 80
        %v610 = vpop.permute.xlu0 %609
        %v611 = vsel %vm432, %v608, 0
        %v613 = vsel %vm432, %v610, 0
        %615 = vmatpush.xpose.msra.mxu0 0.0
        %616 = vmatpush.xpose.msra.mxu0 0.0
        %617 = vmatpush.xpose.msra.mxu0 0.0
        %618 = vmatpush.xpose.msra.mxu0 0.0
        %619 = vmatpush.xpose.msra.mxu0 0.0
        %620 = vmatpush.xpose.msra.mxu0 0.0
        %621 = vmatpush.xpose.msra.mxu0 0.0
        %622 = vmatpush.xpose.msra.mxu0 0.0
        %623 = vmatpush.xpose.msra.mxu0 0.0
        %624 = vmatpush.xpose.msra.mxu0 0.0
        %625 = vmatpush.xpose.msra.mxu0 0.0
        %626 = vmatpush.xpose.msra.mxu0 0.0
        %627 = vmatpush.xpose.msra.mxu0 0.0
        %628 = vmatpush.xpose.msra.mxu0 0.0
        %629 = vmatpush.xpose.msra.mxu0 0.0
        %630 = vmatpush.xpose.msra.mxu0 %v613
        %631 = vmatmul.f32.gmra.mxu0 %v611
        %v632 = vpop.f32.mrf.mxu0
        %v633 = vadd.f32 0.0, %v632
        %634 = vdwg.mxu0
        %v635 = vmul.f32 %v633, 0.35355338
        %v636 = vsel %vm432, %v635, -inf
        %637 = vmax.xlane.f32.xlu0 %v636
        %v638 = vpop.xlane.xlu0 %637
        %v639 = vsub.f32 %v635, %v638
        %v640 = vmul.f32 %v639, 1.442695
        %v641 = vpow.pop %v640
        %v642 = vsel %vm432, %v641, 0.0
        %643 = vadd.xlane.f32.xlu0 %v642
        %v644 = vpop.xlane.xlu0 %643
        %645 = vrot.lane.b32.xlu0 %v423, 48
        %v646 = vpop.permute.xlu0 %645
        %v649 = vsel %vm432, %v641, 0
        %651 = vmatpush.msra.mxu0 0.0
        %652 = vmatpush.msra.mxu0 0.0
        %653 = vmatpush.msra.mxu0 0.0
        %654 = vmatpush.msra.mxu0 0.0
        %655 = vmatpush.msra.mxu0 0.0
        %656 = vmatpush.msra.mxu0 0.0
        %657 = vmatpush.msra.mxu0 0.0
        %658 = vmatpush.msra.mxu0 0.0
        %659 = vmatpush.msra.mxu0 0.0
        %660 = vmatpush.msra.mxu0 0.0
        %661 = vmatpush.msra.mxu0 0.0
        %662 = vmatpush.msra.mxu0 0.0
        %663 = vmatpush.msra.mxu0 0.0
        %664 = vmatpush.msra.mxu0 0.0
        %665 = vmatpush.msra.mxu0 0.0
        %666 = vmatpush.msra.mxu0 %v646
        %667 = vmatmul.f32.gmra.mxu0 %v649
        %v668 = vpop.f32.mrf.mxu0
        %v669 = vadd.f32 0.0, %v668
        %670 = vdwg.mxu0
        %v671 = vrcp.pop %v644
        %v672 = vmul.f32 %v669, %v671
        %v674 = vsel %vm432, %v672, 0
        %676 = vmatpush.msra.mxu0 0.0
        %677 = vmatpush.msra.mxu0 0.0
        %678 = vmatpush.msra.mxu0 0.0
        %679 = vmatpush.msra.mxu0 0.0
        %680 = vmatpush.msra.mxu0 0.0
        %681 = vmatpush.msra.mxu0 0.0
        %682 = vmatpush.msra.mxu0 0.0
        %683 = vmatpush.msra.mxu0 0.0
        %684 = vmatpush.msra.mxu0 0.0
        %685 = vmatpush.msra.mxu0 0.0
        %686 = vmatpush.msra.mxu0 0.0
        %687 = vmatpush.msra.mxu0 0.0
        %688 = vmatpush.msra.mxu0 0.0
        %689 = vmatpush.msra.mxu0 0.0
        %690 = vmatpush.msra.mxu0 0.0
        %691 = vmatpush.msra.mxu0 %v427
        %692 = vmatmul.f32.gmra.mxu0 %v674
        %v693 = vpop.f32.mrf.mxu0
        %v694 = vadd.f32 0.0, %v693
        %695 = vdwg.mxu0
        %v696 = vadd.f32 %v605, %v694
        %697 = vrot.lane.b32.xlu0 %v423, 104
        %v698 = vpop.permute.xlu0 %697
        %699 = vrot.lane.b32.xlu0 %v423, 72
        %v700 = vpop.permute.xlu0 %699
        %v701 = vsel %vm432, %v698, 0
        %v703 = vsel %vm432, %v700, 0
        %705 = vmatpush.xpose.msra.mxu0 0.0
        %706 = vmatpush.xpose.msra.mxu0 0.0
        %707 = vmatpush.xpose.msra.mxu0 0.0
        %708 = vmatpush.xpose.msra.mxu0 0.0
        %709 = vmatpush.xpose.msra.mxu0 0.0
        %710 = vmatpush.xpose.msra.mxu0 0.0
        %711 = vmatpush.xpose.msra.mxu0 0.0
        %712 = vmatpush.xpose.msra.mxu0 0.0
        %713 = vmatpush.xpose.msra.mxu0 0.0
        %714 = vmatpush.xpose.msra.mxu0 0.0
        %715 = vmatpush.xpose.msra.mxu0 0.0
        %716 = vmatpush.xpose.msra.mxu0 0.0
        %717 = vmatpush.xpose.msra.mxu0 0.0
        %718 = vmatpush.xpose.msra.mxu0 0.0
        %719 = vmatpush.xpose.msra.mxu0 0.0
        %720 = vmatpush.xpose.msra.mxu0 %v703
        %721 = vmatmul.f32.gmra.mxu0 %v701
        %v722 = vpop.f32.mrf.mxu0
        %v723 = vadd.f32 0.0, %v722
        %724 = vdwg.mxu0
        %v725 = vmul.f32 %v723, 0.35355338
        %v726 = vsel %vm432, %v725, -inf
        %727 = vmax.xlane.f32.xlu0 %v726
        %v728 = vpop.xlane.xlu0 %727
        %v729 = vsub.f32 %v725, %v728
        %v730 = vmul.f32 %v729, 1.442695
        %v731 = vpow.pop %v730
        %v732 = vsel %vm432, %v731, 0.0
        %733 = vadd.xlane.f32.xlu0 %v732
        %v734 = vpop.xlane.xlu0 %733
        %735 = vrot.lane.b32.xlu0 %v423, 40
        %v736 = vpop.permute.xlu0 %735
        %v739 = vsel %vm432, %v731, 0
        %741 = vmatpush.msra.mxu0 0.0
        %742 = vmatpush.msra.mxu0 0.0
        %743 = vmatpush.msra.mxu0 0.0
        %744 = vmatpush.msra.mxu0 0.0
        %745 = vmatpush.msra.mxu0 0.0
        %746 = vmatpush.msra.mxu0 0.0
        %747 = vmatpush.msra.mxu0 0.0
        %748 = vmatpush.msra.mxu0 0.0
        %749 = vmatpush.msra.mxu0 0.0
        %750 = vmatpush.msra.mxu0 0.0
        %751 = vmatpush.msra.mxu0 0.0
        %752 = vmatpush.msra.mxu0 0.0
        %753 = vmatpush.msra.mxu0 0.0
        %754 = vmatpush.msra.mxu0 0.0
        %755 = vmatpush.msra.mxu0 0.0
        %756 = vmatpush.msra.mxu0 %v736
        %757 = vmatmul.f32.gmra.mxu0 %v739
        %v758 = vpop.f32.mrf.mxu0
        %v759 = vadd.f32 0.0, %v758
        %760 = vdwg.mxu0
        %v761 = vrcp.pop %v734
        %v762 = vmul.f32 %v759, %v761
        %v764 = vsel %vm432, %v762, 0
        %766 = vmatpush.msra.mxu0 0.0
        %767 = vmatpush.msra.mxu0 0.0
        %768 = vmatpush.msra.mxu0 0.0
        %769 = vmatpush.msra.mxu0 0.0
        %770 = vmatpush.msra.mxu0 0.0
        %771 = vmatpush.msra.mxu0 0.0
        %772 = vmatpush.msra.mxu0 0.0
        %773 = vmatpush.msra.mxu0 0.0
        %774 = vmatpush.msra.mxu0 0.0
        %775 = vmatpush.msra.mxu0 0.0
        %776 = vmatpush.msra.mxu0 0.0
        %777 = vmatpush.msra.mxu0 0.0
        %778 = vmatpush.msra.mxu0 0.0
        %779 = vmatpush.msra.mxu0 0.0
        %780 = vmatpush.msra.mxu0 0.0
        %781 = vmatpush.msra.mxu0 %v428
        %782 = vmatmul.f32.gmra.mxu0 %v764
        %v783 = vpop.f32.mrf.mxu0
        %v784 = vadd.f32 0.0, %v783
        %785 = vdwg.mxu0
        %v786 = vadd.f32 %v696, %v784
        %v787 = vld [vmem:[%s6] sm:$0x1]
        %v789 = vperm.slane %v787, 0
        %v791 = vadd.f32 %v786, %v789
        %v792 = vadd.f32 %v329, %v791
        %793 = vst.msk [vmem:[%s328] sm:$0xff] %vm330, %v792
        %p794 = scmp.lt.s32.totalorder %s22, 1
        %s795 = scalar_select %p794, %s22, 1
        %s796 = smul.addr %s795, 8
        %s797 = scalar_lea.vmem %s7, %s796
        // Predicated region
        $region61: #{transformer.19} parent=47 // pred_check
          %p798 = pneg %p192
        $region62: #{transformer.19} parent=47 // pred_check_branch
          %800 = sbr.rel (%p798) target = $region64
        $region63: #{transformer.19} parent=47 // pred_region
          _
        $region64: #{transformer.19} parent=47 // pred_fallthru
          _
      $region48: #{transformer.19} parent=5 // pred_fallthru
        _
      %p801 = scmp.le.s32.totalorder 2, %s17
      // Predicated region
      $region65: #{transformer.19} parent=5 // pred_check
        %p802 = pneg %p801
      $region66: #{transformer.19} parent=5 // pred_check_branch
        %804 = sbr.rel (%p802) target = $region68
      $region67: #{transformer.19} parent=5 // pred_region
        %s805 = ssub.s32 %s17, 2
        // Predicated region
        $region69: #{transformer.19} parent=67 // pred_check
          %p806 = pneg %p198
        $region70: #{transformer.19} parent=67 // pred_check_branch
          %808 = sbr.rel (%p806) target = $region72
        $region71: #{transformer.19} parent=67 // pred_region
          %p809 = scmp.lt.s32.totalorder %s23, 1
          %s810 = scalar_select %p809, %s23, 1
          %s811 = smul.addr %s810, 8
          %s812 = scalar_lea.vmem %s7, %s811
        $region72: #{transformer.19} parent=67 // pred_fallthru
          _
      $region68: #{transformer.19} parent=5 // pred_fallthru
        _
    $region6: #{transformer.19} parent=1 // loop_footer
      %s21 = sadd.s32 1, %s17
    $region7: #{transformer.19} parent=1 // loop_footer_branch
      %16 = sbr.rel target = $region3
    $region8: #{transformer.19} parent=1 // loop_exit
      _
    %813 = vsyncpa [#allocation3], 1
    %s814 = scalar_lea.sflag [#allocation3], 1
    %815 = vsyncpa %s814, 1
    %816 = vsyncpa [#allocation5], 1

// kernel: transformer.16
$region0: #{transformer.16}
  #allocation0 [shape = 'u32[]', space=smem, size = 0x4, offset = 0x4, fixed_abs, tag = 'smem constant byte address 0x4 - core index']
  #allocation1 [shape = 'u32[72,128]{1,0:T(1,128)}', space=vmem, size = 0x9000, scoped, tag = 'internal scratch']
  %s0 = inlined_call_operand.vmem [shape: f32[2,8,32], index: 0, kind: input, shape index: {}]
  %s1 = inlined_call_operand.vmem [shape: f32[2,8,32], index: 1, kind: input, shape index: {}]
  %s2 = inlined_call_operand.vmem [shape: f32[1,32], index: 2, kind: input, shape index: {}]
  %s3 = inlined_call_operand.vmem [shape: f32[1,32], index: 3, kind: input, shape index: {}]
  %s4 = inlined_call_operand.hbm [shape: f32[32,96], index: 4, kind: input, shape index: {}]
  %s5 = inlined_call_operand.vmem [shape: f32[1,96], index: 5, kind: input, shape index: {}]
  %s6 = inlined_call_operand.hbm [shape: f32[32,32], index: 6, kind: input, shape index: {}]
  %s7 = inlined_call_operand.vmem [shape: f32[1,32], index: 7, kind: input, shape index: {}]
  %s8 = inlined_call_operand.vmem [shape: f32[2,8,32], index: 8, kind: output, shape index: {}]
  %s9 = sld [smem:[#allocation0]]
  $region73: #{transformer.16} parent=0
    _
  %s11 = ssub.s32 1, %s9
  %s12 = scalar_select 0, %s11, %s9
  $region1: #{transformer.16} parent=0
    #allocation2 [shape = 'u8[16384]{0}', space=vmem, size = 0x4000, scoped, tag = 'input window, operand 4, single buffered']
    #allocation3 [shape = 's32[2]{0}', space=sflag, size = 0x8, scoped, tag = 'scoped memory for transformer.16']
    #allocation4 [shape = 'u8[16384]{0}', space=vmem, size = 0x4000, scoped, tag = 'input window, operand 6, single buffered']
    #allocation5 [shape = 's32[1]{0}', space=sflag, size = 0x4, scoped, tag = 'scoped memory for transformer.16']
    %13 = vsyncpa [#allocation3], 0
    %14 = vsyncpa [#allocation5], 0
    loop: start=0, step=1, limit=4
    $region2: #{transformer.16} parent=1 // loop_pre_header
      _
    $region3: #{transformer.16} parent=1 // loop_header
      %s16 = sphi 0, %s20
      %p17 = scmp.ge.s32.totalorder %s16, 4
      %s26 = sphi 0, %s28
      %s29 = sphi 0, %s26
      %s30 = sphi 0, %s29
      %s46 = sphi 0, %s30
      %s52 = sphi 0, %s54
      %s55 = sphi 0, %s52
      %s56 = sphi 0, %s55
      %s72 = sphi 0, %s56
      %s76 = sphi 0, %s76
      %s78 = sphi 0, %s76
      %s79 = sphi 0, %s78
      %s93 = sphi 0, %s79
      %s97 = sphi 0, %s97
      %s99 = sphi 0, %s97
      %s100 = sphi 0, %s99
      %s114 = sphi 0, %s100
      %s118 = sphi 0, %s118
      %s120 = sphi 0, %s118
      %s121 = sphi 0, %s120
      %s135 = sphi 0, %s121
      %s139 = sphi 0, %s139
      %s141 = sphi 0, %s139
      %s142 = sphi 0, %s141
      %s156 = sphi 0, %s142
      %s160 = sphi 0, %s160
      %s162 = sphi 0, %s160
      %s163 = sphi 0, %s162
      %s177 = sphi 0, %s163
      %s181 = sphi 0, %s181
      %s183 = sphi 0, %s181
      %s184 = sphi 0, %s183
      %s198 = sphi 0, %s184
      %s204 = sphi 0, %s206
      %s207 = sphi 0, %s204
      %s208 = sphi 0, %s207
      %s224 = sphi 0, %s208
    $region4: #{transformer.16} parent=1 // loop_header_branch
      %19 = sbr.rel (%p17) target = $region8
    $region5: #{transformer.16} parent=1 // loop_body
      %s21 = ssub.s32 %s16, 1
      %s22 = ssub.s32 %s16, 2
      %s23 = sadd.s32 %s16, 1
      %s24 = ssub.s32 %s16, %s23
      %p25 = scmp.eq.s32.totalorder %s24, 0
      %s27 = sadd.s32 %s26, 1
      %s28 = scalar_select %p25, %s26, %s27
      %p31 = pneg %p25
      %p32 = scmp.eq.s32.totalorder %s16, 1
      %p33 = por %p31, %p32
      %p34 = scmp.ne.s32.totalorder %s26, %s29
      %p35 = scmp.eq.s32.totalorder %s16, 0
      %p36 = por %p34, %p35
      %p37 = scmp.ne.s32.totalorder %s26, %s29
      %p38 = scmp.eq.s32.totalorder %s21, 1
      %p39 = por %p37, %p38
      %p40 = scmp.ne.s32.totalorder %s29, %s30
      %p41 = scmp.eq.s32.totalorder %s21, 0
      %p42 = por %p40, %p41
      %p43 = scmp.ne.s32.totalorder %s29, %s30
      %p44 = scmp.eq.s32.totalorder %s22, 1
      %p45 = por %p43, %p44
      %p47 = scmp.ne.s32.totalorder %s30, %s46
      %p48 = scmp.eq.s32.totalorder %s22, 0
      %p49 = por %p47, %p48
      %s50 = ssub.s32 %s16, %s23
      %p51 = scmp.eq.s32.totalorder %s50, 0
      %s53 = sadd.s32 %s52, 1
      %s54 = scalar_select %p51, %s52, %s53
      %p57 = pneg %p51
      %p58 = scmp.eq.s32.totalorder %s16, 1
      %p59 = por %p57, %p58
      %p60 = scmp.ne.s32.totalorder %s52, %s55
      %p61 = scmp.eq.s32.totalorder %s16, 0
      %p62 = por %p60, %p61
      %p63 = scmp.ne.s32.totalorder %s52, %s55
      %p64 = scmp.eq.s32.totalorder %s21, 1
      %p65 = por %p63, %p64
      %p66 = scmp.ne.s32.totalorder %s55, %s56
      %p67 = scmp.eq.s32.totalorder %s21, 0
      %p68 = por %p66, %p67
      %p69 = scmp.ne.s32.totalorder %s55, %s56
      %p70 = scmp.eq.s32.totalorder %s22, 1
      %p71 = por %p69, %p70
      %p73 = scmp.ne.s32.totalorder %s56, %s72
      %p74 = scmp.eq.s32.totalorder %s22, 0
      %p75 = por %p73, %p74
      %s77 = sadd.s32 %s76, 1
      %p80 = scmp.eq.s32.totalorder %s16, 1
      %p81 = scmp.ne.s32.totalorder %s76, %s78
      %p82 = scmp.eq.s32.totalorder %s16, 0
      %p83 = por %p81, %p82
      %p84 = scmp.ne.s32.totalorder %s76, %s78
      %p85 = scmp.eq.s32.totalorder %s21, 1
      %p86 = por %p84, %p85
      %p87 = scmp.ne.s32.totalorder %s78, %s79
      %p88 = scmp.eq.s32.totalorder %s21, 0
      %p89 = por %p87, %p88
      %p90 = scmp.ne.s32.totalorder %s78, %s79
      %p91 = scmp.eq.s32.totalorder %s22, 1
      %p92 = por %p90, %p91
      %p94 = scmp.ne.s32.totalorder %s79, %s93
      %p95 = scmp.eq.s32.totalorder %s22, 0
      %p96 = por %p94, %p95
      %s98 = sadd.s32 %s97, 1
      %p101 = scmp.eq.s32.totalorder %s16, 1
      %p102 = scmp.ne.s32.totalorder %s97, %s99
      %p103 = scmp.eq.s32.totalorder %s16, 0
      %p104 = por %p102, %p103
      %p105 = scmp.ne.s32.totalorder %s97, %s99
      %p106 = scmp.eq.s32.totalorder %s21, 1
      %p107 = por %p105, %p106
      %p108 = scmp.ne.s32.totalorder %s99, %s100
      %p109 = scmp.eq.s32.totalorder %s21, 0
      %p110 = por %p108, %p109
      %p111 = scmp.ne.s32.totalorder %s99, %s100
      %p112 = scmp.eq.s32.totalorder %s22, 1
      %p113 = por %p111, %p112
      %p115 = scmp.ne.s32.totalorder %s100, %s114
      %p116 = scmp.eq.s32.totalorder %s22, 0
      %p117 = por %p115, %p116
      %s119 = sadd.s32 %s118, 1
      %p122 = scmp.eq.s32.totalorder %s16, 1
      %p123 = scmp.ne.s32.totalorder %s118, %s120
      %p124 = scmp.eq.s32.totalorder %s16, 0
      %p125 = por %p123, %p124
      %p126 = scmp.ne.s32.totalorder %s118, %s120
      %p127 = scmp.eq.s32.totalorder %s21, 1
      %p128 = por %p126, %p127
      %p129 = scmp.ne.s32.totalorder %s120, %s121
      %p130 = scmp.eq.s32.totalorder %s21, 0
      %p131 = por %p129, %p130
      %p132 = scmp.ne.s32.totalorder %s120, %s121
      %p133 = scmp.eq.s32.totalorder %s22, 1
      %p134 = por %p132, %p133
      %p136 = scmp.ne.s32.totalorder %s121, %s135
      %p137 = scmp.eq.s32.totalorder %s22, 0
      %p138 = por %p136, %p137
      %s140 = sadd.s32 %s139, 1
      %p143 = scmp.eq.s32.totalorder %s16, 1
      %p144 = scmp.ne.s32.totalorder %s139, %s141
      %p145 = scmp.eq.s32.totalorder %s16, 0
      %p146 = por %p144, %p145
      %p147 = scmp.ne.s32.totalorder %s139, %s141
      %p148 = scmp.eq.s32.totalorder %s21, 1
      %p149 = por %p147, %p148
      %p150 = scmp.ne.s32.totalorder %s141, %s142
      %p151 = scmp.eq.s32.totalorder %s21, 0
      %p152 = por %p150, %p151
      %p153 = scmp.ne.s32.totalorder %s141, %s142
      %p154 = scmp.eq.s32.totalorder %s22, 1
      %p155 = por %p153, %p154
      %p157 = scmp.ne.s32.totalorder %s142, %s156
      %p158 = scmp.eq.s32.totalorder %s22, 0
      %p159 = por %p157, %p158
      %s161 = sadd.s32 %s160, 1
      %p164 = scmp.eq.s32.totalorder %s16, 1
      %p165 = scmp.ne.s32.totalorder %s160, %s162
      %p166 = scmp.eq.s32.totalorder %s16, 0
      %p167 = por %p165, %p166
      %p168 = scmp.ne.s32.totalorder %s160, %s162
      %p169 = scmp.eq.s32.totalorder %s21, 1
      %p170 = por %p168, %p169
      %p171 = scmp.ne.s32.totalorder %s162, %s163
      %p172 = scmp.eq.s32.totalorder %s21, 0
      %p173 = por %p171, %p172
      %p174 = scmp.ne.s32.totalorder %s162, %s163
      %p175 = scmp.eq.s32.totalorder %s22, 1
      %p176 = por %p174, %p175
      %p178 = scmp.ne.s32.totalorder %s163, %s177
      %p179 = scmp.eq.s32.totalorder %s22, 0
      %p180 = por %p178, %p179
      %s182 = sadd.s32 %s181, 1
      %p185 = scmp.eq.s32.totalorder %s16, 1
      %p186 = scmp.ne.s32.totalorder %s181, %s183
      %p187 = scmp.eq.s32.totalorder %s16, 0
      %p188 = por %p186, %p187
      %p189 = scmp.ne.s32.totalorder %s181, %s183
      %p190 = scmp.eq.s32.totalorder %s21, 1
      %p191 = por %p189, %p190
      %p192 = scmp.ne.s32.totalorder %s183, %s184
      %p193 = scmp.eq.s32.totalorder %s21, 0
      %p194 = por %p192, %p193
      %p195 = scmp.ne.s32.totalorder %s183, %s184
      %p196 = scmp.eq.s32.totalorder %s22, 1
      %p197 = por %p195, %p196
      %p199 = scmp.ne.s32.totalorder %s184, %s198
      %p200 = scmp.eq.s32.totalorder %s22, 0
      %p201 = por %p199, %p200
      %s202 = ssub.s32 %s16, %s23
      %p203 = scmp.eq.s32.totalorder %s202, 0
      %s205 = sadd.s32 %s204, 1
      %s206 = scalar_select %p203, %s204, %s205
      %p209 = pneg %p203
      %p210 = scmp.eq.s32.totalorder %s16, 1
      %p211 = por %p209, %p210
      %p212 = scmp.ne.s32.totalorder %s204, %s207
      %p213 = scmp.eq.s32.totalorder %s16, 0
      %p214 = por %p212, %p213
      %p215 = scmp.ne.s32.totalorder %s204, %s207
      %p216 = scmp.eq.s32.totalorder %s21, 1
      %p217 = por %p215, %p216
      %p218 = scmp.ne.s32.totalorder %s207, %s208
      %p219 = scmp.eq.s32.totalorder %s21, 0
      %p220 = por %p218, %p219
      %p221 = scmp.ne.s32.totalorder %s207, %s208
      %p222 = scmp.eq.s32.totalorder %s22, 1
      %p223 = por %p221, %p222
      %p225 = scmp.ne.s32.totalorder %s208, %s224
      %p226 = scmp.eq.s32.totalorder %s22, 0
      %p227 = por %p225, %p226
      %p228 = scmp.le.s32.totalorder 1, %s16
      %p229 = scmp.lt.s32.totalorder %s16, 3
      %p230 = pnand %p228, %p229
      %p231 = pneg %p230
      // Predicated region
      $region9: #{transformer.16} parent=5 // pred_check
        _
      $region10: #{transformer.16} parent=5 // pred_check_branch
        %233 = sbr.rel (%p230) target = $region12
      $region11: #{transformer.16} parent=5 // pred_region
        %s234 = ssub.s32 %s16, 1
        // Predicated region
        $region13: #{transformer.16} parent=11 // pred_check
          %p235 = pneg %p89
        $region14: #{transformer.16} parent=11 // pred_check_branch
          %237 = sbr.rel (%p235) target = $region16
        $region15: #{transformer.16} parent=11 // pred_region
          _
        $region16: #{transformer.16} parent=11 // pred_fallthru
          _
        // Predicated region
        $region17: #{transformer.16} parent=11 // pred_check
          %p238 = pneg %p110
        $region18: #{transformer.16} parent=11 // pred_check_branch
          %240 = sbr.rel (%p238) target = $region20
        $region19: #{transformer.16} parent=11 // pred_region
          _
        $region20: #{transformer.16} parent=11 // pred_fallthru
          _
        // Predicated region
        $region21: #{transformer.16} parent=11 // pred_check
          %p241 = pneg %p131
        $region22: #{transformer.16} parent=11 // pred_check_branch
          %243 = sbr.rel (%p241) target = $region24
        $region23: #{transformer.16} parent=11 // pred_region
          %245 = vsyncadd [#allocation3], 0
          %s246 = sshll.u32 %s4, 4
          %s247 = int_to_ptr.hbm [resolvable:$true] %s246
          %s248 = sshll.u32 [#allocation2], 4
          %s249 = int_to_ptr.vmem [resolvable:$true] %s248
          %254 = dma.hbm_to_vmem [thread:$0]  %s247, 512, %s249, [#allocation3], 128, 128, 8
        $region24: #{transformer.16} parent=11 // pred_fallthru
          _
        // Predicated region
        $region25: #{transformer.16} parent=11 // pred_check
          %p255 = pneg %p152
        $region26: #{transformer.16} parent=11 // pred_check_branch
          %257 = sbr.rel (%p255) target = $region28
        $region27: #{transformer.16} parent=11 // pred_region
          _
        $region28: #{transformer.16} parent=11 // pred_fallthru
          _
        // Predicated region
        $region29: #{transformer.16} parent=11 // pred_check
          %p258 = pneg %p173
        $region30: #{transformer.16} parent=11 // pred_check_branch
          %260 = sbr.rel (%p258) target = $region32
        $region31: #{transformer.16} parent=11 // pred_region
          %262 = vsyncadd [#allocation5], 0
          %s263 = sshll.u32 %s6, 4
          %s264 = int_to_ptr.hbm [resolvable:$true] %s263
          %s265 = sshll.u32 [#allocation4], 4
          %s266 = int_to_ptr.vmem [resolvable:$true] %s265
          %271 = dma.hbm_to_vmem [thread:$0]  %s264, 512, %s266, [#allocation5], 128, 128, 8
        $region32: #{transformer.16} parent=11 // pred_fallthru
          _
        // Predicated region
        $region33: #{transformer.16} parent=11 // pred_check
          %p272 = pneg %p194
        $region34: #{transformer.16} parent=11 // pred_check_branch
          %274 = sbr.rel (%p272) target = $region36
        $region35: #{transformer.16} parent=11 // pred_region
          _
        $region36: #{transformer.16} parent=11 // pred_fallthru
          _
      $region12: #{transformer.16} parent=5 // pred_fallthru
        _
      %p275 = scmp.lt.s32.totalorder %s16, 2
      // Predicated region
      $region37: #{transformer.16} parent=5 // pred_check
        %p276 = pneg %p275
      $region38: #{transformer.16} parent=5 // pred_check_branch
        %278 = sbr.rel (%p276) target = $region40
      $region39: #{transformer.16} parent=5 // pred_region
        // Predicated region
        $region41: #{transformer.16} parent=39 // pred_check
          %p279 = pneg %p36
        $region42: #{transformer.16} parent=39 // pred_check_branch
          %281 = sbr.rel (%p279) target = $region44
        $region43: #{transformer.16} parent=39 // pred_region
          %p282 = scmp.lt.s32.totalorder %s16, 1
          %s283 = scalar_select %p282, %s16, 1
          %s284 = smul.addr %s283, 8
          %s285 = scalar_lea.vmem %s0, %s284
        $region44: #{transformer.16} parent=39 // pred_fallthru
          _
        // Predicated region
        $region45: #{transformer.16} parent=39 // pred_check
          %p286 = pneg %p62
        $region46: #{transformer.16} parent=39 // pred_check_branch
          %288 = sbr.rel (%p286) target = $region48
        $region47: #{transformer.16} parent=39 // pred_region
          %p289 = scmp.lt.s32.totalorder %s16, 1
          %s290 = scalar_select %p289, %s16, 1
          %s291 = smul.addr %s290, 8
          %s292 = scalar_lea.vmem %s1, %s291
        $region48: #{transformer.16} parent=39 // pred_fallthru
          _
      $region40: #{transformer.16} parent=5 // pred_fallthru
        _
      %p293 = scmp.le.s32.totalorder 1, %s16
      %p294 = scmp.lt.s32.totalorder %s16, 3
      %p295 = pnand %p293, %p294
      %p296 = pneg %p295
      // Predicated region
      $region49: #{transformer.16} parent=5 // pred_check
        _
      $region50: #{transformer.16} parent=5 // pred_check_branch
        %298 = sbr.rel (%p295) target = $region52
      $region51: #{transformer.16} parent=5 // pred_region
        %s299 = ssub.s32 %s16, 1
        // Predicated region
        $region53: #{transformer.16} parent=51 // pred_check
          %p300 = pneg %p131
        $region54: #{transformer.16} parent=51 // pred_check_branch
          %302 = sbr.rel (%p300) target = $region56
        $region55: #{transformer.16} parent=51 // pred_region
          %304 = dma.done [#allocation3], 512
        $region56: #{transformer.16} parent=51 // pred_fallthru
          _
        // Predicated region
        $region57: #{transformer.16} parent=51 // pred_check
          %p305 = pneg %p173
        $region58: #{transformer.16} parent=51 // pred_check_branch
          %307 = sbr.rel (%p305) target = $region60
        $region59: #{transformer.16} parent=51 // pred_region
          %309 = dma.done [#allocation5], 512
        $region60: #{transformer.16} parent=51 // pred_fallthru
          _
        %p310 = scmp.lt.s32.totalorder %s21, 1
        %s311 = scalar_select %p310, %s21, 1
        %s312 = smul.addr %s311, 8
        %s313 = scalar_lea.vmem %s0, %s312
        %p314 = pneg %p42
        %p315 = pneg %p39
        %p316 = scmp.lt.s32.totalorder %s21, 1
        %s317 = scalar_select %p316, %s21, 1
        %s318 = smul.addr %s317, 8
        %s319 = scalar_lea.vmem %s1, %s318
        %p320 = pneg %p68
        %p321 = pneg %p65
        %p322 = pneg %p89
        %p323 = pneg %p86
        %p324 = pneg %p110
        %p325 = pneg %p107
        %p326 = pneg %p131
        %p327 = pneg %p128
        %p328 = pneg %p152
        %p329 = pneg %p149
        %p330 = pneg %p173
        %p331 = pneg %p170
        %p332 = pneg %p194
        %p333 = pneg %p191
        %p334 = pneg %p220
        %p335 = pneg %p217
        %p336 = scmp.lt.s32.totalorder %s21, 1
        %s337 = scalar_select %p336, %s21, 1
        %s338 = smul.addr %s337, 8
        %s339 = scalar_lea.vmem %s8, %s338
        %p340 = scmp.lt.s32.totalorder %s21, 1
        %s341 = scalar_select %p340, %s21, 1
        %s342 = smul.addr %s341, 8
        %s343 = scalar_lea.vmem %s0, %s342
        %p344 = scmp.lt.s32.totalorder %s21, 1
        %s345 = scalar_select %p344, %s21, 1
        %s346 = smul.addr %s345, 8
        %s347 = scalar_lea.vmem %s1, %s346
        %p348 = scmp.lt.s32.totalorder %s21, 1
        %s349 = scalar_select %p348, %s21, 1
        %s350 = smul.addr %s349, 8
        %s351 = scalar_lea.vmem %s8, %s350
        %v352 = vld [vmem:[%s343] sm:$0xff]
        %vm353 = vcmask 261120
        %v354 = vsel %vm353, %v352, 0.0
        %355 = vadd.xlane.f32.xlu0 %v354
        %v356 = vpop.xlane.xlu0 %355
        %v357 = vrcp.pop 32.0
        %v358 = vmul.f32 32.0, %v357
        %v359 = vsub.f32 1.0, %v358
        %v360 = vmul.f32 %v357, %v359
        %v361 = vadd.f32 %v357, %v360
        %vm362 = vweird.f32 %v357
        %v363 = vsel %vm362, %v357, %v361
        %v364 = vmul.f32 %v356, %v363
        %v365 = vsub.f32 %v352, %v364
        %v366 = vmul.f32 %v365, %v365
        %v367 = vsel %vm353, %v366, 0.0
        %368 = vadd.xlane.f32.xlu0 %v367
        %v369 = vpop.xlane.xlu0 %368
        %v370 = vrcp.pop 31.0
        %v371 = vmul.f32 31.0, %v370
        %v372 = vsub.f32 1.0, %v371
        %v373 = vmul.f32 %v370, %v372
        %v374 = vadd.f32 %v370, %v373
        %vm375 = vweird.f32 %v370
        %v376 = vsel %vm375, %v370, %v374
        %v377 = vmul.f32 %v369, %v376
        %v378 = vrsqrt.pop %v377
        %v379 = vmul.f32 %v378, %v377
        %v380 = vmul.f32 %v379, %v378
        %v381 = vmul.f32 0.5, %v380
        %v382 = vsub.f32 1.5, %v381
        %v383 = vmul.f32 %v378, %v382
        %v384 = vmul.f32 %v377, %v383
        %vm385 = vcmp.eq.f32.partialorder %v377, inf
        %v386 = vsel %vm385, %v377, %v384
        %vm387 = vcmp.eq.f32.partialorder %v377, 0.0
        %v388 = vand.u32 %v377, 2147483648
        %v389 = vsel %vm387, %v388, %v386
        %v390 = vadd.f32 %v389, 1e-06
        %v391 = vrcp.pop %v390
        %v392 = vmul.f32 %v390, %v391
        %v393 = vsub.f32 1.0, %v392
        %v394 = vmul.f32 %v391, %v393
        %v395 = vadd.f32 %v391, %v394
        %vm396 = vweird.f32 %v390
        %vm397 = vweird.f32 %v391
        %vm398 = vmor %vm396, %vm397
        %v399 = vsel %vm398, %v391, %v395
        %v400 = vand.u32 2147483647, %v390
        %vm401 = vcmp.eq.f32.partialorder %v400, 8.507059e+37
        %v402 = vand.u32 %v390, 2147483648
        %v403 = vor.u32 1.1754944e-38, %v402
        %v404 = vsel %vm401, %v403, %v399
        %v405 = vmul.f32 1.0, %v404
        %v406 = vld [vmem:[%s2] sm:$0x1]
        %v408 = vperm.slane %v406, 0
        %v410 = vmul.f32 %v408, %v365
        %v411 = vmul.f32 %v410, %v405
        %v412 = vld [vmem:[%s3] sm:$0x1]
        %v414 = vperm.slane %v412, 0
        %v416 = vadd.f32 %v411, %v414
        %v417 = vld [vmem:[#allocation2] sm:$0xff]
        %v418 = vld [vmem:[#allocation2 + $0x8] sm:$0xff]
        %v419 = vld [vmem:[#allocation2 + $0x10] sm:$0xff]
        %v420 = vld [vmem:[#allocation2 + $0x18] sm:$0xff]
        %v421 = vld [vmem:[%s5] sm:$0x1]
        %v422 = vld [vmem:[%s347] sm:$0xff]
        %v424 = vperm.slane %v421, 0
        %v427 = vsel %vm353, %v416, 0
        %429 = vmatpush.msra.mxu0 0.0
        %430 = vmatpush.msra.mxu0 0.0
        %431 = vmatpush.msra.mxu0 0.0
        %432 = vmatpush.msra.mxu0 0.0
        %433 = vmatpush.msra.mxu0 0.0
        %434 = vmatpush.msra.mxu0 0.0
        %435 = vmatpush.msra.mxu0 0.0
        %436 = vmatpush.msra.mxu0 0.0
        %437 = vmatpush.msra.mxu0 0.0
        %438 = vmatpush.msra.mxu0 0.0
        %439 = vmatpush.msra.mxu0 0.0
        %440 = vmatpush.msra.mxu0 0.0
        %441 = vmatpush.msra.mxu0 %v420
        %442 = vmatpush.msra.mxu0 %v419
        %443 = vmatpush.msra.mxu0 %v418
        %444 = vmatpush.msra.mxu0 %v417
        %445 = vmatmul.f32.gmra.mxu0 %v427
        %v446 = vpop.f32.mrf.mxu0
        %v447 = vadd.f32 %v424, %v446
        %448 = vdwg.mxu0
        %453 = vrot.lane.b32.xlu0 %v417, 96
        %v454 = vpop.permute.xlu0 %453
        %455 = vrot.lane.b32.xlu0 %v418, 96
        %v456 = vpop.permute.xlu0 %455
        %457 = vrot.lane.b32.xlu0 %v419, 96
        %v458 = vpop.permute.xlu0 %457
        %459 = vrot.lane.b32.xlu0 %v420, 96
        %v460 = vpop.permute.xlu0 %459
        %465 = vrot.lane.b32.xlu0 %v424, 96
        %v466 = vpop.permute.xlu0 %465
        %v469 = vsel %vm353, %v422, 0
        %471 = vmatpush.msra.mxu0 0.0
        %472 = vmatpush.msra.mxu0 0.0
        %473 = vmatpush.msra.mxu0 0.0
        %474 = vmatpush.msra.mxu0 0.0
        %475 = vmatpush.msra.mxu0 0.0
        %476 = vmatpush.msra.mxu0 0.0
        %477 = vmatpush.msra.mxu0 0.0
        %478 = vmatpush.msra.mxu0 0.0
        %479 = vmatpush.msra.mxu0 0.0
        %480 = vmatpush.msra.mxu0 0.0
        %481 = vmatpush.msra.mxu0 0.0
        %482 = vmatpush.msra.mxu0 0.0
        %483 = vmatpush.msra.mxu0 %v460
        %484 = vmatpush.msra.mxu0 %v458
        %485 = vmatpush.msra.mxu0 %v456
        %486 = vmatpush.msra.mxu0 %v454
        %487 = vmatmul.f32.gmra.mxu0 %v469
        %v488 = vpop.f32.mrf.mxu0
        %v489 = vadd.f32 %v466, %v488
        %490 = vdwg.mxu0
        %v491 = vld [vmem:[#allocation4] sm:$0xff]
        %v492 = vld [vmem:[#allocation4 + $0x8] sm:$0xff]
        %v493 = vld [vmem:[#allocation4 + $0x10] sm:$0xff]
        %v494 = vld [vmem:[#allocation4 + $0x18] sm:$0xff]
        %vm495 = vcmask 64512
        %v497 = vsel %vm495, %v447, 0
        %v500 = vsel %vm495, %v489, 0
        %502 = vmatpush.xpose.msra.mxu0 0.0
        %503 = vmatpush.xpose.msra.mxu0 0.0
        %504 = vmatpush.xpose.msra.mxu0 0.0
        %505 = vmatpush.xpose.msra.mxu0 0.0
        %506 = vmatpush.xpose.msra.mxu0 0.0
        %507 = vmatpush.xpose.msra.mxu0 0.0
        %508 = vmatpush.xpose.msra.mxu0 0.0
        %509 = vmatpush.xpose.msra.mxu0 0.0
        %510 = vmatpush.xpose.msra.mxu0 0.0
        %511 = vmatpush.xpose.msra.mxu0 0.0
        %512 = vmatpush.xpose.msra.mxu0 0.0
        %513 = vmatpush.xpose.msra.mxu0 0.0
        %514 = vmatpush.xpose.msra.mxu0 0.0
        %515 = vmatpush.xpose.msra.mxu0 0.0
        %516 = vmatpush.xpose.msra.mxu0 0.0
        %517 = vmatpush.xpose.msra.mxu0 %v500
        %518 = vmatmul.f32.gmra.mxu0 %v497
        %v519 = vpop.f32.mrf.mxu0
        %v520 = vadd.f32 0.0, %v519
        %521 = vdwg.mxu0
        %v522 = vmul.f32 %v520, 0.35355338
        %v523 = vsel %vm495, %v522, -inf
        %524 = vmax.xlane.f32.xlu0 %v523
        %v525 = vpop.xlane.xlu0 %524
        %v526 = vsub.f32 %v522, %v525
        %v527 = vmul.f32 %v526, 1.442695
        %v528 = vpow.pop %v527
        %v529 = vsel %vm495, %v528, 0.0
        %530 = vadd.xlane.f32.xlu0 %v529
        %v531 = vpop.xlane.xlu0 %530
        %532 = vrot.lane.b32.xlu0 %v489, 96
        %v533 = vpop.permute.xlu0 %532
        %v536 = vsel %vm495, %v528, 0
        %538 = vmatpush.msra.mxu0 0.0
        %539 = vmatpush.msra.mxu0 0.0
        %540 = vmatpush.msra.mxu0 0.0
        %541 = vmatpush.msra.mxu0 0.0
        %542 = vmatpush.msra.mxu0 0.0
        %543 = vmatpush.msra.mxu0 0.0
        %544 = vmatpush.msra.mxu0 0.0
        %545 = vmatpush.msra.mxu0 0.0
        %546 = vmatpush.msra.mxu0 0.0
        %547 = vmatpush.msra.mxu0 0.0
        %548 = vmatpush.msra.mxu0 0.0
        %549 = vmatpush.msra.mxu0 0.0
        %550 = vmatpush.msra.mxu0 0.0
        %551 = vmatpush.msra.mxu0 0.0
        %552 = vmatpush.msra.mxu0 0.0
        %553 = vmatpush.msra.mxu0 %v533
        %554 = vmatmul.f32.gmra.mxu0 %v536
        %v555 = vpop.f32.mrf.mxu0
        %v556 = vadd.f32 0.0, %v555
        %557 = vdwg.mxu0
        %v558 = vrcp.pop %v531
        %v559 = vmul.f32 %v556, %v558
        %560 = vrot.lane.b32.xlu0 %v447, 120
        %v561 = vpop.permute.xlu0 %560
        %562 = vrot.lane.b32.xlu0 %v489, 120
        %v563 = vpop.permute.xlu0 %562
        %v564 = vsel %vm495, %v561, 0
        %v566 = vsel %vm495, %v563, 0
        %568 = vmatpush.xpose.msra.mxu0 0.0
        %569 = vmatpush.xpose.msra.mxu0 0.0
        %570 = vmatpush.xpose.msra.mxu0 0.0
        %571 = vmatpush.xpose.msra.mxu0 0.0
        %572 = vmatpush.xpose.msra.mxu0 0.0
        %573 = vmatpush.xpose.msra.mxu0 0.0
        %574 = vmatpush.xpose.msra.mxu0 0.0
        %575 = vmatpush.xpose.msra.mxu0 0.0
        %576 = vmatpush.xpose.msra.mxu0 0.0
        %577 = vmatpush.xpose.msra.mxu0 0.0
        %578 = vmatpush.xpose.msra.mxu0 0.0
        %579 = vmatpush.xpose.msra.mxu0 0.0
        %580 = vmatpush.xpose.msra.mxu0 0.0
        %581 = vmatpush.xpose.msra.mxu0 0.0
        %582 = vmatpush.xpose.msra.mxu0 0.0
        %583 = vmatpush.xpose.msra.mxu0 %v566
        %584 = vmatmul.f32.gmra.mxu0 %v564
        %v585 = vpop.f32.mrf.mxu0
        %v586 = vadd.f32 0.0, %v585
        %587 = vdwg.mxu0
        %v588 = vmul.f32 %v586, 0.35355338
        %v589 = vsel %vm495, %v588, -inf
        %590 = vmax.xlane.f32.xlu0 %v589
        %v591 = vpop.xlane.xlu0 %590
        %v592 = vsub.f32 %v588, %v591
        %v593 = vmul.f32 %v592, 1.442695
        %v594 = vpow.pop %v593
        %v595 = vsel %vm495, %v594, 0.0
        %596 = vadd.xlane.f32.xlu0 %v595
        %v597 = vpop.xlane.xlu0 %596
        %598 = vrot.lane.b32.xlu0 %v489, 88
        %v599 = vpop.permute.xlu0 %598
        %v602 = vsel %vm495, %v594, 0
        %604 = vmatpush.msra.mxu0 0.0
        %605 = vmatpush.msra.mxu0 0.0
        %606 = vmatpush.msra.mxu0 0.0
        %607 = vmatpush.msra.mxu0 0.0
        %608 = vmatpush.msra.mxu0 0.0
        %609 = vmatpush.msra.mxu0 0.0
        %610 = vmatpush.msra.mxu0 0.0
        %611 = vmatpush.msra.mxu0 0.0
        %612 = vmatpush.msra.mxu0 0.0
        %613 = vmatpush.msra.mxu0 0.0
        %614 = vmatpush.msra.mxu0 0.0
        %615 = vmatpush.msra.mxu0 0.0
        %616 = vmatpush.msra.mxu0 0.0
        %617 = vmatpush.msra.mxu0 0.0
        %618 = vmatpush.msra.mxu0 0.0
        %619 = vmatpush.msra.mxu0 %v599
        %620 = vmatmul.f32.gmra.mxu0 %v602
        %v621 = vpop.f32.mrf.mxu0
        %v622 = vadd.f32 0.0, %v621
        %623 = vdwg.mxu0
        %v624 = vrcp.pop %v597
        %v625 = vmul.f32 %v622, %v624
        %v627 = vsel %vm495, %v625, 0
        %629 = vmatpush.msra.mxu0 0.0
        %630 = vmatpush.msra.mxu0 0.0
        %631 = vmatpush.msra.mxu0 0.0
        %632 = vmatpush.msra.mxu0 0.0
        %633 = vmatpush.msra.mxu0 0.0
        %634 = vmatpush.msra.mxu0 0.0
        %635 = vmatpush.msra.mxu0 0.0
        %636 = vmatpush.msra.mxu0 0.0
        %637 = vmatpush.msra.mxu0 0.0
        %638 = vmatpush.msra.mxu0 0.0
        %639 = vmatpush.msra.mxu0 0.0
        %640 = vmatpush.msra.mxu0 0.0
        %641 = vmatpush.msra.mxu0 0.0
        %642 = vmatpush.msra.mxu0 0.0
        %643 = vmatpush.msra.mxu0 0.0
        %644 = vmatpush.msra.mxu0 %v492
        %645 = vmatmul.f32.gmra.mxu0 %v627
        %v646 = vpop.f32.mrf.mxu0
        %v647 = vadd.f32 0.0, %v646
        %648 = vdwg.mxu0
        %v650 = vsel %vm495, %v559, 0
        %652 = vmatpush.msra.mxu0 0.0
        %653 = vmatpush.msra.mxu0 0.0
        %654 = vmatpush.msra.mxu0 0.0
        %655 = vmatpush.msra.mxu0 0.0
        %656 = vmatpush.msra.mxu0 0.0
        %657 = vmatpush.msra.mxu0 0.0
        %658 = vmatpush.msra.mxu0 0.0
        %659 = vmatpush.msra.mxu0 0.0
        %660 = vmatpush.msra.mxu0 0.0
        %661 = vmatpush.msra.mxu0 0.0
        %662 = vmatpush.msra.mxu0 0.0
        %663 = vmatpush.msra.mxu0 0.0
        %664 = vmatpush.msra.mxu0 0.0
        %665 = vmatpush.msra.mxu0 0.0
        %666 = vmatpush.msra.mxu0 0.0
        %667 = vmatpush.msra.mxu0 %v491
        %668 = vmatmul.f32.gmra.mxu0 %v650
        %v669 = vpop.f32.mrf.mxu0
        %v670 = vadd.f32 %v647, %v669
        %671 = vdwg.mxu0
        %672 = vrot.lane.b32.xlu0 %v447, 112
        %v673 = vpop.permute.xlu0 %672
        %674 = vrot.lane.b32.xlu0 %v489, 112
        %v675 = vpop.permute.xlu0 %674
        %v676 = vsel %vm495, %v673, 0
        %v678 = vsel %vm495, %v675, 0
        %680 = vmatpush.xpose.msra.mxu0 0.0
        %681 = vmatpush.xpose.msra.mxu0 0.0
        %682 = vmatpush.xpose.msra.mxu0 0.0
        %683 = vmatpush.xpose.msra.mxu0 0.0
        %684 = vmatpush.xpose.msra.mxu0 0.0
        %685 = vmatpush.xpose.msra.mxu0 0.0
        %686 = vmatpush.xpose.msra.mxu0 0.0
        %687 = vmatpush.xpose.msra.mxu0 0.0
        %688 = vmatpush.xpose.msra.mxu0 0.0
        %689 = vmatpush.xpose.msra.mxu0 0.0
        %690 = vmatpush.xpose.msra.mxu0 0.0
        %691 = vmatpush.xpose.msra.mxu0 0.0
        %692 = vmatpush.xpose.msra.mxu0 0.0
        %693 = vmatpush.xpose.msra.mxu0 0.0
        %694 = vmatpush.xpose.msra.mxu0 0.0
        %695 = vmatpush.xpose.msra.mxu0 %v678
        %696 = vmatmul.f32.gmra.mxu0 %v676
        %v697 = vpop.f32.mrf.mxu0
        %v698 = vadd.f32 0.0, %v697
        %699 = vdwg.mxu0
        %v700 = vmul.f32 %v698, 0.35355338
        %v701 = vsel %vm495, %v700, -inf
        %702 = vmax.xlane.f32.xlu0 %v701
        %v703 = vpop.xlane.xlu0 %702
        %v704 = vsub.f32 %v700, %v703
        %v705 = vmul.f32 %v704, 1.442695
        %v706 = vpow.pop %v705
        %v707 = vsel %vm495, %v706, 0.0
        %708 = vadd.xlane.f32.xlu0 %v707
        %v709 = vpop.xlane.xlu0 %708
        %710 = vrot.lane.b32.xlu0 %v489, 80
        %v711 = vpop.permute.xlu0 %710
        %v714 = vsel %vm495, %v706, 0
        %716 = vmatpush.msra.mxu0 0.0
        %717 = vmatpush.msra.mxu0 0.0
        %718 = vmatpush.msra.mxu0 0.0
        %719 = vmatpush.msra.mxu0 0.0
        %720 = vmatpush.msra.mxu0 0.0
        %721 = vmatpush.msra.mxu0 0.0
        %722 = vmatpush.msra.mxu0 0.0
        %723 = vmatpush.msra.mxu0 0.0
        %724 = vmatpush.msra.mxu0 0.0
        %725 = vmatpush.msra.mxu0 0.0
        %726 = vmatpush.msra.mxu0 0.0
        %727 = vmatpush.msra.mxu0 0.0
        %728 = vmatpush.msra.mxu0 0.0
        %729 = vmatpush.msra.mxu0 0.0
        %730 = vmatpush.msra.mxu0 0.0
        %731 = vmatpush.msra.mxu0 %v711
        %732 = vmatmul.f32.gmra.mxu0 %v714
        %v733 = vpop.f32.mrf.mxu0
        %v734 = vadd.f32 0.0, %v733
        %735 = vdwg.mxu0
        %v736 = vrcp.pop %v709
        %v737 = vmul.f32 %v734, %v736
        %v739 = vsel %vm495, %v737, 0
        %741 = vmatpush.msra.mxu0 0.0
        %742 = vmatpush.msra.mxu0 0.0
        %743 = vmatpush.msra.mxu0 0.0
        %744 = vmatpush.msra.mxu0 0.0
        %745 = vmatpush.msra.mxu0 0.0
        %746 = vmatpush.msra.mxu0 0.0
        %747 = vmatpush.msra.mxu0 0.0
        %748 = vmatpush.msra.mxu0 0.0
        %749 = vmatpush.msra.mxu0 0.0
        %750 = vmatpush.msra.mxu0 0.0
        %751 = vmatpush.msra.mxu0 0.0
        %752 = vmatpush.msra.mxu0 0.0
        %753 = vmatpush.msra.mxu0 0.0
        %754 = vmatpush.msra.mxu0 0.0
        %755 = vmatpush.msra.mxu0 0.0
        %756 = vmatpush.msra.mxu0 %v493
        %757 = vmatmul.f32.gmra.mxu0 %v739
        %v758 = vpop.f32.mrf.mxu0
        %v759 = vadd.f32 0.0, %v758
        %760 = vdwg.mxu0
        %v761 = vadd.f32 %v670, %v759
        %762 = vrot.lane.b32.xlu0 %v447, 104
        %v763 = vpop.permute.xlu0 %762
        %764 = vrot.lane.b32.xlu0 %v489, 104
        %v765 = vpop.permute.xlu0 %764
        %v766 = vsel %vm495, %v763, 0
        %v768 = vsel %vm495, %v765, 0
        %770 = vmatpush.xpose.msra.mxu0 0.0
        %771 = vmatpush.xpose.msra.mxu0 0.0
        %772 = vmatpush.xpose.msra.mxu0 0.0
        %773 = vmatpush.xpose.msra.mxu0 0.0
        %774 = vmatpush.xpose.msra.mxu0 0.0
        %775 = vmatpush.xpose.msra.mxu0 0.0
        %776 = vmatpush.xpose.msra.mxu0 0.0
        %777 = vmatpush.xpose.msra.mxu0 0.0
        %778 = vmatpush.xpose.msra.mxu0 0.0
        %779 = vmatpush.xpose.msra.mxu0 0.0
        %780 = vmatpush.xpose.msra.mxu0 0.0
        %781 = vmatpush.xpose.msra.mxu0 0.0
        %782 = vmatpush.xpose.msra.mxu0 0.0
        %783 = vmatpush.xpose.msra.mxu0 0.0
        %784 = vmatpush.xpose.msra.mxu0 0.0
        %785 = vmatpush.xpose.msra.mxu0 %v768
        %786 = vmatmul.f32.gmra.mxu0 %v766
        %v787 = vpop.f32.mrf.mxu0
        %v788 = vadd.f32 0.0, %v787
        %789 = vdwg.mxu0
        %v790 = vmul.f32 %v788, 0.35355338
        %v791 = vsel %vm495, %v790, -inf
        %792 = vmax.xlane.f32.xlu0 %v791
        %v793 = vpop.xlane.xlu0 %792
        %v794 = vsub.f32 %v790, %v793
        %v795 = vmul.f32 %v794, 1.442695
        %v796 = vpow.pop %v795
        %v797 = vsel %vm495, %v796, 0.0
        %798 = vadd.xlane.f32.xlu0 %v797
        %v799 = vpop.xlane.xlu0 %798
        %800 = vrot.lane.b32.xlu0 %v489, 72
        %v801 = vpop.permute.xlu0 %800
        %v804 = vsel %vm495, %v796, 0
        %806 = vmatpush.msra.mxu0 0.0
        %807 = vmatpush.msra.mxu0 0.0
        %808 = vmatpush.msra.mxu0 0.0
        %809 = vmatpush.msra.mxu0 0.0
        %810 = vmatpush.msra.mxu0 0.0
        %811 = vmatpush.msra.mxu0 0.0
        %812 = vmatpush.msra.mxu0 0.0
        %813 = vmatpush.msra.mxu0 0.0
        %814 = vmatpush.msra.mxu0 0.0
        %815 = vmatpush.msra.mxu0 0.0
        %816 = vmatpush.msra.mxu0 0.0
        %817 = vmatpush.msra.mxu0 0.0
        %818 = vmatpush.msra.mxu0 0.0
        %819 = vmatpush.msra.mxu0 0.0
        %820 = vmatpush.msra.mxu0 0.0
        %821 = vmatpush.msra.mxu0 %v801
        %822 = vmatmul.f32.gmra.mxu0 %v804
        %v823 = vpop.f32.mrf.mxu0
        %v824 = vadd.f32 0.0, %v823
        %825 = vdwg.mxu0
        %v826 = vrcp.pop %v799
        %v827 = vmul.f32 %v824, %v826
        %v829 = vsel %vm495, %v827, 0
        %831 = vmatpush.msra.mxu0 0.0
        %832 = vmatpush.msra.mxu0 0.0
        %833 = vmatpush.msra.mxu0 0.0
        %834 = vmatpush.msra.mxu0 0.0
        %835 = vmatpush.msra.mxu0 0.0
        %836 = vmatpush.msra.mxu0 0.0
        %837 = vmatpush.msra.mxu0 0.0
        %838 = vmatpush.msra.mxu0 0.0
        %839 = vmatpush.msra.mxu0 0.0
        %840 = vmatpush.msra.mxu0 0.0
        %841 = vmatpush.msra.mxu0 0.0
        %842 = vmatpush.msra.mxu0 0.0
        %843 = vmatpush.msra.mxu0 0.0
        %844 = vmatpush.msra.mxu0 0.0
        %845 = vmatpush.msra.mxu0 0.0
        %846 = vmatpush.msra.mxu0 %v494
        %847 = vmatmul.f32.gmra.mxu0 %v829
        %v848 = vpop.f32.mrf.mxu0
        %v849 = vadd.f32 0.0, %v848
        %850 = vdwg.mxu0
        %v851 = vadd.f32 %v761, %v849
        %v852 = vld [vmem:[%s7] sm:$0x1]
        %v854 = vperm.slane %v852, 0
        %v856 = vadd.f32 %v851, %v854
        %v857 = vadd.f32 %v352, %v856
        %858 = vst.msk [vmem:[%s351] sm:$0xff] %vm353, %v857
        %p859 = scmp.lt.s32.totalorder %s21, 1
        %s860 = scalar_select %p859, %s21, 1
        %s861 = smul.addr %s860, 8
        %s862 = scalar_lea.vmem %s8, %s861
        // Predicated region
        $region61: #{transformer.16} parent=51 // pred_check
          %p863 = pneg %p217
        $region62: #{transformer.16} parent=51 // pred_check_branch
          %865 = sbr.rel (%p863) target = $region64
        $region63: #{transformer.16} parent=51 // pred_region
          _
        $region64: #{transformer.16} parent=51 // pred_fallthru
          _
      $region52: #{transformer.16} parent=5 // pred_fallthru
        _
      %p866 = scmp.le.s32.totalorder 2, %s16
      // Predicated region
      $region65: #{transformer.16} parent=5 // pred_check
        %p867 = pneg %p866
      $region66: #{transformer.16} parent=5 // pred_check_branch
        %869 = sbr.rel (%p867) target = $region68
      $region67: #{transformer.16} parent=5 // pred_region
        %s870 = ssub.s32 %s16, 2
        // Predicated region
        $region69: #{transformer.16} parent=67 // pred_check
          %p871 = pneg %p223
        $region70: #{transformer.16} parent=67 // pred_check_branch
          %873 = sbr.rel (%p871) target = $region72
        $region71: #{transformer.16} parent=67 // pred_region
          %p874 = scmp.lt.s32.totalorder %s22, 1
          %s875 = scalar_select %p874, %s22, 1
          %s876 = smul.addr %s875, 8
          %s877 = scalar_lea.vmem %s8, %s876
        $region72: #{transformer.16} parent=67 // pred_fallthru
          _
      $region68: #{transformer.16} parent=5 // pred_fallthru
        _
    $region6: #{transformer.16} parent=1 // loop_footer
      %s20 = sadd.s32 1, %s16
    $region7: #{transformer.16} parent=1 // loop_footer_branch
      %15 = sbr.rel target = $region3
    $region8: #{transformer.16} parent=1 // loop_exit
      _
    %878 = vsyncpa [#allocation3], 1
    %s879 = scalar_lea.sflag [#allocation3], 1
    %880 = vsyncpa %s879, 1
    %881 = vsyncpa [#allocation5], 1

// kernel: transformer.25
$region0: #{transformer.25}
  #allocation0 [shape = 'u32[]', space=smem, size = 0x4, offset = 0x4, fixed_abs, tag = 'smem constant byte address 0x4 - core index']
  #allocation1 [shape = 'u32[72,128]{1,0:T(1,128)}', space=vmem, size = 0x9000, scoped, tag = 'internal scratch']
  %s0 = inlined_call_operand.vmem [shape: f32[2,8,32], index: 0, kind: input, shape index: {}]
  %s1 = inlined_call_operand.vmem [shape: f32[1,32], index: 1, kind: input, shape index: {}]
  %s2 = inlined_call_operand.vmem [shape: f32[1,32], index: 2, kind: input, shape index: {}]
  %s3 = inlined_call_operand.hbm [shape: f32[2,8,32], index: 3, kind: output, shape index: {}]
  %s4 = sld [smem:[#allocation0]]
  $region45: #{transformer.25} parent=0
    _
  %s6 = ssub.s32 1, %s4
  %s7 = scalar_select 0, %s6, %s4
  $region1: #{transformer.25} parent=0
    #allocation2 [shape = 'u8[8192]{0}', space=vmem, size = 0x2000, scoped, tag = 'output window, operand 0']
    #allocation3 [shape = 's32[2]{0}', space=sflag, size = 0x8, scoped, tag = 'scoped memory for transformer.25']
    %8 = vsyncpa [#allocation3], 0
    %s9 = scalar_lea.sflag [#allocation3], 1
    %10 = vsyncpa %s9, 0
    loop: start=0, step=1, limit=4
    $region2: #{transformer.25} parent=1 // loop_pre_header
      _
    $region3: #{transformer.25} parent=1 // loop_header
      %s12 = sphi 0, %s16
      %p13 = scmp.ge.s32.totalorder %s12, 4
      %s22 = sphi 0, %s24
      %s25 = sphi 0, %s22
      %s26 = sphi 0, %s25
      %s42 = sphi 0, %s26
      %s46 = sphi 0, %s46
      %s48 = sphi 0, %s46
      %s49 = sphi 0, %s48
      %s63 = sphi 0, %s49
      %s67 = sphi 0, %s67
      %s69 = sphi 0, %s67
      %s70 = sphi 0, %s69
      %s84 = sphi 0, %s70
      %s90 = sphi 0, %s92
      %s93 = sphi 0, %s90
      %s94 = sphi 0, %s93
      %s110 = sphi 0, %s94
    $region4: #{transformer.25} parent=1 // loop_header_branch
      %15 = sbr.rel (%p13) target = $region8
    $region5: #{transformer.25} parent=1 // loop_body
      %s17 = ssub.s32 %s12, 1
      %s18 = ssub.s32 %s12, 2
      %s19 = sadd.s32 %s12, 1
      %s20 = ssub.s32 %s12, %s19
      %p21 = scmp.eq.s32.totalorder %s20, 0
      %s23 = sadd.s32 %s22, 1
      %s24 = scalar_select %p21, %s22, %s23
      %p27 = pneg %p21
      %p28 = scmp.eq.s32.totalorder %s12, 1
      %p29 = por %p27, %p28
      %p30 = scmp.ne.s32.totalorder %s22, %s25
      %p31 = scmp.eq.s32.totalorder %s12, 0
      %p32 = por %p30, %p31
      %p33 = scmp.ne.s32.totalorder %s22, %s25
      %p34 = scmp.eq.s32.totalorder %s17, 1
      %p35 = por %p33, %p34
      %p36 = scmp.ne.s32.totalorder %s25, %s26
      %p37 = scmp.eq.s32.totalorder %s17, 0
      %p38 = por %p36, %p37
      %p39 = scmp.ne.s32.totalorder %s25, %s26
      %p40 = scmp.eq.s32.totalorder %s18, 1
      %p41 = por %p39, %p40
      %p43 = scmp.ne.s32.totalorder %s26, %s42
      %p44 = scmp.eq.s32.totalorder %s18, 0
      %p45 = por %p43, %p44
      %s47 = sadd.s32 %s46, 1
      %p50 = scmp.eq.s32.totalorder %s12, 1
      %p51 = scmp.ne.s32.totalorder %s46, %s48
      %p52 = scmp.eq.s32.totalorder %s12, 0
      %p53 = por %p51, %p52
      %p54 = scmp.ne.s32.totalorder %s46, %s48
      %p55 = scmp.eq.s32.totalorder %s17, 1
      %p56 = por %p54, %p55
      %p57 = scmp.ne.s32.totalorder %s48, %s49
      %p58 = scmp.eq.s32.totalorder %s17, 0
      %p59 = por %p57, %p58
      %p60 = scmp.ne.s32.totalorder %s48, %s49
      %p61 = scmp.eq.s32.totalorder %s18, 1
      %p62 = por %p60, %p61
      %p64 = scmp.ne.s32.totalorder %s49, %s63
      %p65 = scmp.eq.s32.totalorder %s18, 0
      %p66 = por %p64, %p65
      %s68 = sadd.s32 %s67, 1
      %p71 = scmp.eq.s32.totalorder %s12, 1
      %p72 = scmp.ne.s32.totalorder %s67, %s69
      %p73 = scmp.eq.s32.totalorder %s12, 0
      %p74 = por %p72, %p73
      %p75 = scmp.ne.s32.totalorder %s67, %s69
      %p76 = scmp.eq.s32.totalorder %s17, 1
      %p77 = por %p75, %p76
      %p78 = scmp.ne.s32.totalorder %s69, %s70
      %p79 = scmp.eq.s32.totalorder %s17, 0
      %p80 = por %p78, %p79
      %p81 = scmp.ne.s32.totalorder %s69, %s70
      %p82 = scmp.eq.s32.totalorder %s18, 1
      %p83 = por %p81, %p82
      %p85 = scmp.ne.s32.totalorder %s70, %s84
      %p86 = scmp.eq.s32.totalorder %s18, 0
      %p87 = por %p85, %p86
      %s88 = ssub.s32 %s12, %s19
      %p89 = scmp.eq.s32.totalorder %s88, 0
      %s91 = sadd.s32 %s90, 1
      %s92 = scalar_select %p89, %s90, %s91
      %p95 = pneg %p89
      %p96 = scmp.eq.s32.totalorder %s12, 1
      %p97 = por %p95, %p96
      %p98 = scmp.ne.s32.totalorder %s90, %s93
      %p99 = scmp.eq.s32.totalorder %s12, 0
      %p100 = por %p98, %p99
      %p101 = scmp.ne.s32.totalorder %s90, %s93
      %p102 = scmp.eq.s32.totalorder %s17, 1
      %p103 = por %p101, %p102
      %p104 = scmp.ne.s32.totalorder %s93, %s94
      %p105 = scmp.eq.s32.totalorder %s17, 0
      %p106 = por %p104, %p105
      %p107 = scmp.ne.s32.totalorder %s93, %s94
      %p108 = scmp.eq.s32.totalorder %s18, 1
      %p109 = por %p107, %p108
      %p111 = scmp.ne.s32.totalorder %s94, %s110
      %p112 = scmp.eq.s32.totalorder %s18, 0
      %p113 = por %p111, %p112
      %p114 = scmp.le.s32.totalorder 1, %s12
      %p115 = scmp.lt.s32.totalorder %s12, 3
      %p116 = pnand %p114, %p115
      %p117 = pneg %p116
      // Predicated region
      $region9: #{transformer.25} parent=5 // pred_check
        _
      $region10: #{transformer.25} parent=5 // pred_check_branch
        %119 = sbr.rel (%p116) target = $region12
      $region11: #{transformer.25} parent=5 // pred_region
        %s120 = ssub.s32 %s12, 1
        // Predicated region
        $region13: #{transformer.25} parent=11 // pred_check
          %p121 = pneg %p59
        $region14: #{transformer.25} parent=11 // pred_check_branch
          %123 = sbr.rel (%p121) target = $region16
        $region15: #{transformer.25} parent=11 // pred_region
          _
        $region16: #{transformer.25} parent=11 // pred_fallthru
          _
        // Predicated region
        $region17: #{transformer.25} parent=11 // pred_check
          %p124 = pneg %p80
        $region18: #{transformer.25} parent=11 // pred_check_branch
          %126 = sbr.rel (%p124) target = $region20
        $region19: #{transformer.25} parent=11 // pred_region
          _
        $region20: #{transformer.25} parent=11 // pred_fallthru
          _
      $region12: #{transformer.25} parent=5 // pred_fallthru
        _
      %p127 = scmp.lt.s32.totalorder %s12, 2
      // Predicated region
      $region21: #{transformer.25} parent=5 // pred_check
        %p128 = pneg %p127
      $region22: #{transformer.25} parent=5 // pred_check_branch
        %130 = sbr.rel (%p128) target = $region24
      $region23: #{transformer.25} parent=5 // pred_region
        // Predicated region
        $region25: #{transformer.25} parent=23 // pred_check
          %p131 = pneg %p32
        $region26: #{transformer.25} parent=23 // pred_check_branch
          %133 = sbr.rel (%p131) target = $region28
        $region27: #{transformer.25} parent=23 // pred_region
          %p134 = scmp.lt.s32.totalorder %s12, 1
          %s135 = scalar_select %p134, %s12, 1
          %s136 = smul.addr %s135, 8
          %s137 = scalar_lea.vmem %s0, %s136
        $region28: #{transformer.25} parent=23 // pred_fallthru
          _
      $region24: #{transformer.25} parent=5 // pred_fallthru
        _
      %p138 = scmp.le.s32.totalorder 1, %s12
      %p139 = scmp.lt.s32.totalorder %s12, 3
      %p140 = pnand %p138, %p139
      %p141 = pneg %p140
      // Predicated region
      $region29: #{transformer.25} parent=5 // pred_check
        _
      $region30: #{transformer.25} parent=5 // pred_check_branch
        %143 = sbr.rel (%p140) target = $region32
      $region31: #{transformer.25} parent=5 // pred_region
        %s144 = ssub.s32 %s12, 1
        %p145 = scmp.lt.s32.totalorder %s17, 1
        %s146 = scalar_select %p145, %s17, 1
        %s147 = smul.addr %s146, 8
        %s148 = scalar_lea.vmem %s0, %s147
        %p149 = pneg %p38
        %p150 = pneg %p35
        %p151 = pneg %p59
        %p152 = pneg %p56
        %p153 = pneg %p80
        %p154 = pneg %p77
        %p155 = pneg %p106
        %p156 = pneg %p103
        %s157 = sand.u32 %s93, 1
        %s158 = scalar_lea.sflag [#allocation3], %s157
        %s159 = sand.u32 %s93, 1
        %s160 = smul.addr %s159, 8
        %s161 = scalar_lea.vmem [#allocation2], %s160
        %p162 = scmp.lt.s32.totalorder %s17, 1
        %s163 = scalar_select %p162, %s17, 1
        %s164 = smul.addr %s163, 8
        %s165 = scalar_lea.vmem %s0, %s164
        %v166 = vld [vmem:[%s165] sm:$0xff]
        %vm167 = vcmask 261120
        %v168 = vsel %vm167, %v166, 0.0
        %169 = vadd.xlane.f32.xlu0 %v168
        %v170 = vpop.xlane.xlu0 %169
        %v171 = vrcp.pop 32.0
        %v172 = vmul.f32 32.0, %v171
        %v173 = vsub.f32 1.0, %v172
        %v174 = vmul.f32 %v171, %v173
        %v175 = vadd.f32 %v171, %v174
        %vm176 = vweird.f32 %v171
        %v177 = vsel %vm176, %v171, %v175
        %v178 = vmul.f32 %v170, %v177
        %v179 = vsub.f32 %v166, %v178
        %v180 = vmul.f32 %v179, %v179
        %v181 = vsel %vm167, %v180, 0.0
        %182 = vadd.xlane.f32.xlu0 %v181
        %v183 = vpop.xlane.xlu0 %182
        %v184 = vrcp.pop 31.0
        %v185 = vmul.f32 31.0, %v184
        %v186 = vsub.f32 1.0, %v185
        %v187 = vmul.f32 %v184, %v186
        %v188 = vadd.f32 %v184, %v187
        %vm189 = vweird.f32 %v184
        %v190 = vsel %vm189, %v184, %v188
        %v191 = vmul.f32 %v183, %v190
        %v192 = vrsqrt.pop %v191
        %v193 = vmul.f32 %v192, %v191
        %v194 = vmul.f32 %v193, %v192
        %v195 = vmul.f32 0.5, %v194
        %v196 = vsub.f32 1.5, %v195
        %v197 = vmul.f32 %v192, %v196
        %v198 = vmul.f32 %v191, %v197
        %vm199 = vcmp.eq.f32.partialorder %v191, inf
        %v200 = vsel %vm199, %v191, %v198
        %vm201 = vcmp.eq.f32.partialorder %v191, 0.0
        %v202 = vand.u32 %v191, 2147483648
        %v203 = vsel %vm201, %v202, %v200
        %v204 = vadd.f32 %v203, 1e-06
        %v205 = vrcp.pop %v204
        %v206 = vmul.f32 %v204, %v205
        %v207 = vsub.f32 1.0, %v206
        %v208 = vmul.f32 %v205, %v207
        %v209 = vadd.f32 %v205, %v208
        %vm210 = vweird.f32 %v204
        %vm211 = vweird.f32 %v205
        %vm212 = vmor %vm210, %vm211
        %v213 = vsel %vm212, %v205, %v209
        %v214 = vand.u32 2147483647, %v204
        %vm215 = vcmp.eq.f32.partialorder %v214, 8.507059e+37
        %v216 = vand.u32 %v204, 2147483648
        %v217 = vor.u32 1.1754944e-38, %v216
        %v218 = vsel %vm215, %v217, %v213
        %v219 = vmul.f32 1.0, %v218
        %v220 = vld [vmem:[%s1] sm:$0x1]
        %v222 = vperm.slane %v220, 0
        %v224 = vmul.f32 %v222, %v179
        %v225 = vmul.f32 %v224, %v219
        %v226 = vld [vmem:[%s2] sm:$0x1]
        %v228 = vperm.slane %v226, 0
        %v230 = vadd.f32 %v225, %v228
        %231 = vst.msk [vmem:[%s161] sm:$0xff] %vm167, %v230
        %s232 = sand.u32 %s93, 1
        %s233 = scalar_lea.sflag [#allocation3], %s232
        %s234 = sand.u32 %s93, 1
        %s235 = smul.addr %s234, 8
        %s236 = scalar_lea.vmem [#allocation2], %s235
        // Predicated region
        $region33: #{transformer.25} parent=31 // pred_check
          %p237 = pneg %p103
        $region34: #{transformer.25} parent=31 // pred_check_branch
          %239 = sbr.rel (%p237) target = $region36
        $region35: #{transformer.25} parent=31 // pred_region
          %241 = vsyncadd %s233, 0
          %s242 = smul.addr %s17, 8
          %s243 = scalar_lea.hbm %s3, %s242
          %s245 = sshll.u32 %s236, 4
          %s246 = int_to_ptr.vmem [resolvable:$true] %s245
          %s247 = sshll.u32 %s243, 4
          %s248 = int_to_ptr.hbm [resolvable:$true] %s247
          %250 = dma.vmem_to_hbm [thread:$0]  %s246, 128, %s248, %s233
        $region36: #{transformer.25} parent=31 // pred_fallthru
          _
      $region32: #{transformer.25} parent=5 // pred_fallthru
        _
      %p251 = scmp.le.s32.totalorder 2, %s12
      // Predicated region
      $region37: #{transformer.25} parent=5 // pred_check
        %p252 = pneg %p251
      $region38: #{transformer.25} parent=5 // pred_check_branch
        %254 = sbr.rel (%p252) target = $region40
      $region39: #{transformer.25} parent=5 // pred_region
        %s255 = ssub.s32 %s12, 2
        // Predicated region
        $region41: #{transformer.25} parent=39 // pred_check
          %p256 = pneg %p109
        $region42: #{transformer.25} parent=39 // pred_check_branch
          %258 = sbr.rel (%p256) target = $region44
        $region43: #{transformer.25} parent=39 // pred_region
          %s259 = sand.u32 %s94, 1
          %s260 = scalar_lea.sflag [#allocation3], %s259
          %s261 = sand.u32 %s94, 1
          %s262 = smul.addr %s261, 8
          %s263 = scalar_lea.vmem [#allocation2], %s262
          %265 = dma.done %s260, 128
        $region44: #{transformer.25} parent=39 // pred_fallthru
          _
      $region40: #{transformer.25} parent=5 // pred_fallthru
        _
    $region6: #{transformer.25} parent=1 // loop_footer
      %s16 = sadd.s32 1, %s12
    $region7: #{transformer.25} parent=1 // loop_footer_branch
      %11 = sbr.rel target = $region3
    $region8: #{transformer.25} parent=1 // loop_exit
      _
    %266 = vsyncpa [#allocation3], 1
    %s267 = scalar_lea.sflag [#allocation3], 1
    %268 = vsyncpa %s267, 1

</llo_original>
